<compile_context>
chip_gen: v5e
topology: v5e:2x2
jax: 0.10.0
libtpu: 0.0.40
codegen_flags: <defaults>
</compile_context>

<pallas_src>
import functools

import jax
import jax.numpy as jnp
from jax.experimental import pallas as pl
from jax.experimental.pallas import tpu as pltpu


def _prior_prompt_attn_kernel(q_ref, prior_ref, wkv_ref, bkv_ref, wo_ref, bo_ref,
                              out_ref, *, head_num, inner_dim, b_blk, n_k, n_q,
                              compute_dtype):
    d = inner_dim // head_num
    prior_dim = prior_ref.shape[-1]
    g = head_num * b_blk
    is_f32 = jnp.dtype(compute_dtype) == jnp.dtype(jnp.float32)

    # ---- fused K|V projection: one lane-dense MXU matmul over the folded batch
    prior2d = prior_ref[...].reshape(b_blk * n_k, prior_dim).astype(compute_dtype)
    kv = jnp.dot(prior2d, wkv_ref[...], preferred_element_type=jnp.float32)
    kv = kv + bkv_ref[...]                       # f32 bias add
    kv_c = kv.astype(compute_dtype)              # operands for attention matmuls

    # ---- fold heads into the batch axis of 3-D batched matmuls: (G, n_k, d)
    # with G ordered (h, b).  Leading-axis concat is cheap; the d-wide lane
    # slices are the unavoidable head split.
    k_g = jnp.concatenate(
        [kv_c[:, h * d:(h + 1) * d] for h in range(head_num)], axis=0
    ).reshape(g, n_k, d)
    v_g = jnp.concatenate(
        [kv_c[:, inner_dim + h * d:inner_dim + (h + 1) * d]
         for h in range(head_num)], axis=0
    ).reshape(g, n_k, d)

    # ---- scores + stable softmax (f32); q is pre-scaled / pre-tiled in wrapper
    s = jnp.einsum('gqd,gkd->gqk', q_ref[...], k_g,
                   preferred_element_type=jnp.float32)
    s = s - jnp.max(s, axis=-1, keepdims=True)
    p = jnp.exp(s)
    l = jnp.sum(p, axis=-1, keepdims=True)

    o = jnp.einsum('gqk,gkd->gqd', p.astype(v_g.dtype), v_g,
                   preferred_element_type=jnp.float32)
    # Normalize AFTER the PV matmul (d-wide instead of n_k-wide); reciprocal on EUP.
    o = o * pl.reciprocal(l, approx=not is_f32)

    # ---- output projection, accumulated per head -> no head-concat relayout
    wo = wo_ref[...]
    acc = None
    for h in range(head_num):
        oh = o[h * b_blk:(h + 1) * b_blk].reshape(b_blk * n_q, d).astype(wo.dtype)
        part = jnp.dot(oh, wo[h * d:(h + 1) * d, :],
                       preferred_element_type=jnp.float32)
        acc = part if acc is None else acc + part
    out_ref[...] = (acc + bo_ref[...]).astype(out_ref.dtype)   # lane-dense 2-D store


def _tensorcores_per_chip():
    """v7x has 2 TensorCores per chip; v5e / v6e have 1."""
    try:
        kind = jax.devices()[0].device_kind.lower()
    except Exception:
        return 1
    return 2 if "v7" in kind else 1


def prior_prompt_attn(prompt, prior, params, *, head_num,
                      compute_dtype=jnp.bfloat16, num_batch_blocks=None):
    n_q, prompt_dim = prompt.shape
    B, n_k, prior_dim = prior.shape
    inner_dim = params["wq"].shape[1]
    assert inner_dim % head_num == 0
    d = inner_dim // head_num

    # ---- hoisted, batch-invariant q projection (done once, not B times) ----
    scale = inner_dim ** (-0.5)     # NOTE: module scales by inner_dim, not head_dim
    q = (prompt.astype(jnp.float32) @ params["wq"].astype(jnp.float32)
         + params["bq"].astype(jnp.float32)) * scale               # (n_q, inner)
    q_heads = q.reshape(n_q, head_num, d).transpose(1, 0, 2)       # (H, n_q, d)

    # ---- fused K|V weights / biases ----
    wkv = jnp.concatenate([params["wk"], params["wv"]], axis=1).astype(compute_dtype)
    bkv = jnp.concatenate([params["bk"], params["bv"]], axis=1).astype(jnp.float32)
    wo = params["wo"].astype(compute_dtype)
    bo = params["bo"].astype(jnp.float32)

    # ---- generation-aware grid: 1 step on v5e/v6e (single TC), 2 on v7x ----
    if num_batch_blocks is None:
        num_batch_blocks = _tensorcores_per_chip()
    nb = max(1, min(num_batch_blocks, B))
    b_blk = pl.cdiv(B, nb)

    # Cap b_blk so per-step f32 intermediates stay inside the default scoped
    # VMEM limit (conservative 24 MiB; matters on v7x's 64 MiB VMEM).
    def _step_bytes(bb):
        m = bb * n_k
        gg = bb * head_num
        return (2 * m * prior_dim * 4             # double-buffered prior block
                + 3 * m * 2 * inner_dim * 4       # kv (f32) + kv_c + k_g/v_g
                + 2 * gg * n_q * n_k * 4          # scores + probabilities
                + gg * n_q * d * 4                # PV output
                + 2 * bb * n_q * prompt_dim * 4)  # double-buffered output block
    budget = 24 * 1024 * 1024
    while b_blk > 1 and _step_bytes(b_blk) > budget:
        b_blk -= 1
    nb = pl.cdiv(B, b_blk)
    # (8,128) rule for the tiled 2-D output block: fall back to one step if the
    # block rows are not sublane-aligned.
    if nb > 1 and (b_blk * n_q) % 8 != 0:
        nb, b_blk = 1, B
    b_pad = nb * b_blk
    if b_pad != B:
        prior = jnp.pad(prior, ((0, b_pad - B), (0, 0), (0, 0)))

    # q pre-tiled over the batch block, heads folded into G = (h, b); tiny and
    # DMA'd once (constant index_map).
    gsz = head_num * b_blk
    q_g = jnp.broadcast_to(q_heads[:, None], (head_num, b_blk, n_q, d))
    q_g = q_g.reshape(gsz, n_q, d).astype(compute_dtype)

    kernel = functools.partial(
        _prior_prompt_attn_kernel, head_num=head_num, inner_dim=inner_dim,
        b_blk=b_blk, n_k=n_k, n_q=n_q, compute_dtype=compute_dtype)

    def const2d(shape):
        # Constant index_map -> DMA'd once after step 0.  For much larger
        # weights consider pipeline_mode=pl.Buffered(1) to reclaim VMEM.
        return pl.BlockSpec(shape, lambda i: (0, 0))

    grid_spec = pltpu.PrefetchScalarGridSpec(
        num_scalar_prefetch=0,
        grid=(nb,),
        in_specs=[
            pl.BlockSpec((gsz, n_q, d), lambda i: (0, 0, 0)),            # q (shared)
            pl.BlockSpec((b_blk, n_k, prior_dim), lambda i: (i, 0, 0)),  # prior block
            const2d((prior_dim, 2 * inner_dim)),                         # Wk|Wv fused
            const2d((1, 2 * inner_dim)),                                 # bk|bv fused
            const2d((inner_dim, prompt_dim)),                            # Wo
            const2d((1, prompt_dim)),                                    # bo
        ],
        out_specs=pl.BlockSpec((b_blk * n_q, prompt_dim), lambda i: (i, 0)),
    )

    out2d = pl.pallas_call(
        kernel,
        out_shape=jax.ShapeDtypeStruct((b_pad * n_q, prompt_dim), jnp.float32),
        grid_spec=grid_spec,
        compiler_params=pltpu.CompilerParams(dimension_semantics=("parallel",)),
    )(q_g, prior, wkv, bkv, wo, bo)

    return out2d.reshape(b_pad, n_q, prompt_dim)[:B]


def ref_forward(prompt, prior, params, head_num):
    """Pure-JAX f32 reference matching the PyTorch module semantics."""
    B, n_k, _ = prior.shape
    n_q, _ = prompt.shape
    inner_dim = params["wq"].shape[1]
    d = inner_dim // head_num
    q = prompt @ params["wq"] + params["bq"]                              # (n_q, inner)
    k = jnp.einsum("bkp,pi->bki", prior, params["wk"]) + params["bk"]     # (B, n_k, inner)
    v = jnp.einsum("bkp,pi->bki", prior, params["wv"]) + params["bv"]
    q = jnp.broadcast_to(q[None], (B, n_q, inner_dim))
    qh = q.reshape(B, n_q, head_num, d).transpose(0, 2, 1, 3)
    kh = k.reshape(B, n_k, head_num, d).transpose(0, 2, 1, 3)
    vh = v.reshape(B, n_k, head_num, d).transpose(0, 2, 1, 3)
    scale = inner_dim ** (-0.5)
    attn = jnp.einsum("bhqd,bhkd->bhqk", qh * scale, kh)
    attn = jax.nn.softmax(attn, axis=-1)
    x = jnp.einsum("bhqk,bhkd->bhqd", attn, vh)
    x = x.transpose(0, 2, 1, 3).reshape(B, n_q, inner_dim)
    return x @ params["wo"] + params["bo"]


def make_params(key, prompt_dim, prior_dim, inner_dim):
    ks = jax.random.split(key, 8)
    scale = 0.02
    return {
        # weights stored as (in_features, out_features)
        "wq": scale * jax.random.normal(ks[0], (prompt_dim, inner_dim), jnp.float32),
        "bq": scale * jax.random.normal(ks[1], (1, inner_dim), jnp.float32),
        "wk": scale * jax.random.normal(ks[2], (prior_dim, inner_dim), jnp.float32),
        "bk": scale * jax.random.normal(ks[3], (1, inner_dim), jnp.float32),
        "wv": scale * jax.random.normal(ks[4], (prior_dim, inner_dim), jnp.float32),
        "bv": scale * jax.random.normal(ks[5], (1, inner_dim), jnp.float32),
        "wo": scale * jax.random.normal(ks[6], (inner_dim, prompt_dim), jnp.float32),
        "bo": scale * jax.random.normal(ks[7], (1, prompt_dim), jnp.float32),
    }


if __name__ == "__main__":
    # Small shapes consistent with the module (prompt tokens attend to a prior).
    B, n_q, n_k = 8, 8, 64
    prompt_dim, prior_dim, inner_dim, head_num = 128, 64, 64, 4

    key = jax.random.PRNGKey(0)
    k_prompt, k_prior, k_params = jax.random.split(key, 3)
    prompt = jax.random.normal(k_prompt, (n_q, prompt_dim), jnp.float32)
    prior = jax.random.normal(k_prior, (B, n_k, prior_dim), jnp.float32)
    params = make_params(k_params, prompt_dim, prior_dim, inner_dim)

    ref = ref_forward(prompt, prior, params, head_num)

    # f32 compute path: tight check against the PyTorch-semantics reference.
    out_f32 = prior_prompt_attn(prompt, prior, params, head_num=head_num,
                                compute_dtype=jnp.float32)
    out_f32 = jax.block_until_ready(out_f32)
    assert out_f32.shape == (B, n_q, prompt_dim)
    assert jnp.allclose(out_f32, ref, rtol=5e-4, atol=5e-5), (
        "f32 max abs diff = %e" % float(jnp.max(jnp.abs(out_f32 - ref))))

    # bf16 operand path (v6e/v7x MXU-optimized; f32 accumulation + f32 softmax).
    out_bf16 = prior_prompt_attn(prompt, prior, params, head_num=head_num,
                                 compute_dtype=jnp.bfloat16)
    out_bf16 = jax.block_until_ready(out_bf16)
    assert out_bf16.shape == (B, n_q, prompt_dim)
    assert jnp.allclose(out_bf16, ref, rtol=5e-2, atol=5e-3), (
        "bf16 max abs diff = %e" % float(jnp.max(jnp.abs(out_bf16 - ref))))

    print("KERNEL_OK")
</pallas_src>

<mosaic_0001>
module attributes {stable_mosaic.version = 11 : i64} {
  func.func @_prior_prompt_attn_kernel(%arg0: i32, %arg1: memref<32x8x16xf32, #tpu.memory_space<vmem>>, %arg2: memref<8x64x64xf32, #tpu.memory_space<vmem>>, %arg3: memref<64x128xf32, #tpu.memory_space<vmem>>, %arg4: memref<1x128xf32, #tpu.memory_space<vmem>>, %arg5: memref<64x128xf32, #tpu.memory_space<vmem>>, %arg6: memref<1x128xf32, #tpu.memory_space<vmem>>, %arg7: memref<64x128xf32, #tpu.memory_space<vmem>>) attributes {dimension_semantics = [#tpu.dimension_semantics<parallel>], iteration_bounds = array<i64: 1>, scalar_prefetch = 0 : i64, scratch_operands = 0 : i64, tpu.core_type = #tpu.core_type<tc>, window_params = [{pipeline_mode = #tpu.pipeline_mode<synchronous>, transform_indices = @transform_0, window_bounds = array<i64: 32, 8, 16>}, {transform_indices = @transform_1, window_bounds = array<i64: 8, 64, 64>}, {pipeline_mode = #tpu.pipeline_mode<synchronous>, transform_indices = @transform_2, window_bounds = array<i64: 64, 128>}, {pipeline_mode = #tpu.pipeline_mode<synchronous>, transform_indices = @transform_3, window_bounds = array<i64: 1, 128>}, {pipeline_mode = #tpu.pipeline_mode<synchronous>, transform_indices = @transform_4, window_bounds = array<i64: 64, 128>}, {pipeline_mode = #tpu.pipeline_mode<synchronous>, transform_indices = @transform_5, window_bounds = array<i64: 1, 128>}, {transform_indices = @transform_6, window_bounds = array<i64: 64, 128>}]} {
    %c0 = arith.constant 0 : index
    %c0_0 = arith.constant 0 : index
    %c0_1 = arith.constant 0 : index
    %0 = vector.load %arg2[%c0, %c0_0, %c0_1] : memref<8x64x64xf32, #tpu.memory_space<vmem>>, vector<8x64x64xf32>
    %1 = vector.shape_cast %0 : vector<8x64x64xf32> to vector<512x64xf32>
    %c0_2 = arith.constant 0 : index
    %c0_3 = arith.constant 0 : index
    %2 = vector.load %arg3[%c0_2, %c0_3] : memref<64x128xf32, #tpu.memory_space<vmem>>, vector<64x128xf32>
    %cst = arith.constant dense<0.000000e+00> : vector<512x128xf32>
    %3 = tpu.matmul %1, %2, %cst {dimension_numbers = #tpu.dot_dimension_numbers<[1], [0], [0], [1], [0, 0, 1, 1], [], []>} : vector<512x64xf32>, vector<64x128xf32>, vector<512x128xf32> -> vector<512x128xf32>
    %c0_4 = arith.constant 0 : index
    %c0_5 = arith.constant 0 : index
    %4 = vector.load %arg4[%c0_4, %c0_5] : memref<1x128xf32, #tpu.memory_space<vmem>>, vector<1x128xf32>
    %5 = vector.broadcast %4 : vector<1x128xf32> to vector<512x128xf32>
    %6 = arith.addf %3, %5 : vector<512x128xf32>
    %7 = vector.extract_strided_slice %6 {offsets = [0, 0], sizes = [512, 16], strides = [1, 1]} : vector<512x128xf32> to vector<512x16xf32>
    %8 = vector.extract_strided_slice %6 {offsets = [0, 16], sizes = [512, 16], strides = [1, 1]} : vector<512x128xf32> to vector<512x16xf32>
    %9 = vector.extract_strided_slice %6 {offsets = [0, 32], sizes = [512, 16], strides = [1, 1]} : vector<512x128xf32> to vector<512x16xf32>
    %10 = vector.extract_strided_slice %6 {offsets = [0, 48], sizes = [512, 16], strides = [1, 1]} : vector<512x128xf32> to vector<512x16xf32>
    %11 = tpu.concatenate %7, %8, %9, %10 in 0 : vector<512x16xf32>, vector<512x16xf32>, vector<512x16xf32>, vector<512x16xf32> -> vector<2048x16xf32>
    %12 = vector.shape_cast %11 : vector<2048x16xf32> to vector<32x64x16xf32>
    %13 = vector.extract_strided_slice %6 {offsets = [0, 64], sizes = [512, 16], strides = [1, 1]} : vector<512x128xf32> to vector<512x16xf32>
    %14 = vector.extract_strided_slice %6 {offsets = [0, 80], sizes = [512, 16], strides = [1, 1]} : vector<512x128xf32> to vector<512x16xf32>
    %15 = vector.extract_strided_slice %6 {offsets = [0, 96], sizes = [512, 16], strides = [1, 1]} : vector<512x128xf32> to vector<512x16xf32>
    %16 = vector.extract_strided_slice %6 {offsets = [0, 112], sizes = [512, 16], strides = [1, 1]} : vector<512x128xf32> to vector<512x16xf32>
    %17 = tpu.concatenate %13, %14, %15, %16 in 0 : vector<512x16xf32>, vector<512x16xf32>, vector<512x16xf32>, vector<512x16xf32> -> vector<2048x16xf32>
    %18 = vector.shape_cast %17 : vector<2048x16xf32> to vector<32x64x16xf32>
    %c0_6 = arith.constant 0 : index
    %c0_7 = arith.constant 0 : index
    %c0_8 = arith.constant 0 : index
    %19 = vector.load %arg1[%c0_6, %c0_7, %c0_8] : memref<32x8x16xf32, #tpu.memory_space<vmem>>, vector<32x8x16xf32>
    "tpu.trace_start"() <{level = 10 : i32, message = "gqd,gkd->gqk"}> : () -> ()
    %cst_9 = arith.constant dense<0.000000e+00> : vector<32x8x64xf32>
    %20 = tpu.matmul %19, %12, %cst_9 {dimension_numbers = #tpu.dot_dimension_numbers<[2], [2], [1], [1], [0, 0, 0, 1, 1, 1], [0], [0]>} : vector<32x8x16xf32>, vector<32x64x16xf32>, vector<32x8x64xf32> -> vector<32x8x64xf32>
    "tpu.trace_stop"() : () -> ()
    %cst_10 = arith.constant dense<0xFF800000> : vector<32x8xf32>
    %21 = vector.multi_reduction <maximumf>, %20, %cst_10 [2] : vector<32x8x64xf32> to vector<32x8xf32>
    %22 = vector.shape_cast %21 : vector<32x8xf32> to vector<32x8x1xf32>
    %23 = vector.broadcast %22 : vector<32x8x1xf32> to vector<32x8x64xf32>
    %24 = arith.subf %20, %23 : vector<32x8x64xf32>
    %25 = math.exp %24 : vector<32x8x64xf32>
    %cst_11 = arith.constant dense<0.000000e+00> : vector<32x8xf32>
    %26 = vector.multi_reduction <add>, %25, %cst_11 [2] : vector<32x8x64xf32> to vector<32x8xf32>
    %27 = vector.shape_cast %26 : vector<32x8xf32> to vector<32x8x1xf32>
    "tpu.trace_start"() <{level = 10 : i32, message = "gqk,gkd->gqd"}> : () -> ()
    %cst_12 = arith.constant dense<0.000000e+00> : vector<32x8x16xf32>
    %28 = tpu.matmul %25, %18, %cst_12 {dimension_numbers = #tpu.dot_dimension_numbers<[2], [1], [1], [2], [0, 0, 0, 1, 1, 2], [0], [0]>} : vector<32x8x64xf32>, vector<32x64x16xf32>, vector<32x8x16xf32> -> vector<32x8x16xf32>
    "tpu.trace_stop"() : () -> ()
    %29 = tpu.reciprocal %27 : vector<32x8x1xf32> -> vector<32x8x1xf32>
    %30 = vector.broadcast %29 : vector<32x8x1xf32> to vector<32x8x16xf32>
    %31 = arith.mulf %28, %30 : vector<32x8x16xf32>
    %c0_13 = arith.constant 0 : index
    %c0_14 = arith.constant 0 : index
    %32 = vector.load %arg5[%c0_13, %c0_14] : memref<64x128xf32, #tpu.memory_space<vmem>>, vector<64x128xf32>
    %33 = vector.extract_strided_slice %31 {offsets = [0, 0, 0], sizes = [8, 8, 16], strides = [1, 1, 1]} : vector<32x8x16xf32> to vector<8x8x16xf32>
    %34 = vector.shape_cast %33 : vector<8x8x16xf32> to vector<64x16xf32>
    %35 = vector.extract_strided_slice %32 {offsets = [0, 0], sizes = [16, 128], strides = [1, 1]} : vector<64x128xf32> to vector<16x128xf32>
    %cst_15 = arith.constant dense<0.000000e+00> : vector<64x128xf32>
    %36 = tpu.matmul %34, %35, %cst_15 {dimension_numbers = #tpu.dot_dimension_numbers<[1], [0], [0], [1], [0, 0, 1, 1], [], []>} : vector<64x16xf32>, vector<16x128xf32>, vector<64x128xf32> -> vector<64x128xf32>
    %37 = vector.extract_strided_slice %31 {offsets = [8, 0, 0], sizes = [8, 8, 16], strides = [1, 1, 1]} : vector<32x8x16xf32> to vector<8x8x16xf32>
    %38 = vector.shape_cast %37 : vector<8x8x16xf32> to vector<64x16xf32>
    %39 = vector.extract_strided_slice %32 {offsets = [16, 0], sizes = [16, 128], strides = [1, 1]} : vector<64x128xf32> to vector<16x128xf32>
    %cst_16 = arith.constant dense<0.000000e+00> : vector<64x128xf32>
    %40 = tpu.matmul %38, %39, %cst_16 {dimension_numbers = #tpu.dot_dimension_numbers<[1], [0], [0], [1], [0, 0, 1, 1], [], []>} : vector<64x16xf32>, vector<16x128xf32>, vector<64x128xf32> -> vector<64x128xf32>
    %41 = arith.addf %36, %40 : vector<64x128xf32>
    %42 = vector.extract_strided_slice %31 {offsets = [16, 0, 0], sizes = [8, 8, 16], strides = [1, 1, 1]} : vector<32x8x16xf32> to vector<8x8x16xf32>
    %43 = vector.shape_cast %42 : vector<8x8x16xf32> to vector<64x16xf32>
    %44 = vector.extract_strided_slice %32 {offsets = [32, 0], sizes = [16, 128], strides = [1, 1]} : vector<64x128xf32> to vector<16x128xf32>
    %cst_17 = arith.constant dense<0.000000e+00> : vector<64x128xf32>
    %45 = tpu.matmul %43, %44, %cst_17 {dimension_numbers = #tpu.dot_dimension_numbers<[1], [0], [0], [1], [0, 0, 1, 1], [], []>} : vector<64x16xf32>, vector<16x128xf32>, vector<64x128xf32> -> vector<64x128xf32>
    %46 = arith.addf %41, %45 : vector<64x128xf32>
    %47 = vector.extract_strided_slice %31 {offsets = [24, 0, 0], sizes = [8, 8, 16], strides = [1, 1, 1]} : vector<32x8x16xf32> to vector<8x8x16xf32>
    %48 = vector.shape_cast %47 : vector<8x8x16xf32> to vector<64x16xf32>
    %49 = vector.extract_strided_slice %32 {offsets = [48, 0], sizes = [16, 128], strides = [1, 1]} : vector<64x128xf32> to vector<16x128xf32>
    %cst_18 = arith.constant dense<0.000000e+00> : vector<64x128xf32>
    %50 = tpu.matmul %48, %49, %cst_18 {dimension_numbers = #tpu.dot_dimension_numbers<[1], [0], [0], [1], [0, 0, 1, 1], [], []>} : vector<64x16xf32>, vector<16x128xf32>, vector<64x128xf32> -> vector<64x128xf32>
    %51 = arith.addf %46, %50 : vector<64x128xf32>
    %c0_19 = arith.constant 0 : index
    %c0_20 = arith.constant 0 : index
    %52 = vector.load %arg6[%c0_19, %c0_20] : memref<1x128xf32, #tpu.memory_space<vmem>>, vector<1x128xf32>
    %53 = vector.broadcast %52 : vector<1x128xf32> to vector<64x128xf32>
    %54 = arith.addf %51, %53 : vector<64x128xf32>
    %c0_21 = arith.constant 0 : index
    %c0_22 = arith.constant 0 : index
    %55 = vector.load %arg7[%c0_21, %c0_22] : memref<64x128xf32, #tpu.memory_space<vmem>>, vector<64x128xf32>
    tpu.vector_store %arg7[%c0_21, %c0_22], %54 {strides = array<i32>} : memref<64x128xf32, #tpu.memory_space<vmem>>, vector<64x128xf32>,
    return
  }
  func.func @transform_0(%arg0: i32) -> (i32, i32, i32) {
    %c0_i32 = arith.constant 0 : i32
    %c0_i32_0 = arith.constant 0 : i32
    %c0_i32_1 = arith.constant 0 : i32
    %c0_i32_2 = arith.constant 0 : i32
    return %c0_i32, %c0_i32_0, %c0_i32_1 : i32, i32, i32
  }
  func.func @transform_1(%arg0: i32) -> (i32, i32, i32) {
    %c0_i32 = arith.constant 0 : i32
    %c0_i32_0 = arith.constant 0 : i32
    %c0_i32_1 = arith.constant 0 : i32
    return %arg0, %c0_i32, %c0_i32_0 : i32, i32, i32
  }
  func.func @transform_2(%arg0: i32) -> (i32, i32) {
    %c0_i32 = arith.constant 0 : i32
    %c0_i32_0 = arith.constant 0 : i32
    %c0_i32_1 = arith.constant 0 : i32
    return %c0_i32, %c0_i32_0 : i32, i32
  }
  func.func @transform_3(%arg0: i32) -> (i32, i32) {
    %c0_i32 = arith.constant 0 : i32
    %c0_i32_0 = arith.constant 0 : i32
    %c0_i32_1 = arith.constant 0 : i32
    return %c0_i32, %c0_i32_0 : i32, i32
  }
  func.func @transform_4(%arg0: i32) -> (i32, i32) {
    %c0_i32 = arith.constant 0 : i32
    %c0_i32_0 = arith.constant 0 : i32
    %c0_i32_1 = arith.constant 0 : i32
    return %c0_i32, %c0_i32_0 : i32, i32
  }
  func.func @transform_5(%arg0: i32) -> (i32, i32) {
    %c0_i32 = arith.constant 0 : i32
    %c0_i32_0 = arith.constant 0 : i32
    %c0_i32_1 = arith.constant 0 : i32
    return %c0_i32, %c0_i32_0 : i32, i32
  }
  func.func @transform_6(%arg0: i32) -> (i32, i32) {
    %c0_i32 = arith.constant 0 : i32
    %c0_i32_0 = arith.constant 0 : i32
    return %arg0, %c0_i32 : i32, i32
  }
}

</mosaic_0001>

<llo_original>
// kernel: tpu_custom_call.1
$region0: #{tpu_custom_call.1}
  #allocation0 [shape = 'u32[]', space=smem, size = 0x4, offset = 0x4, fixed_abs, tag = 'smem constant byte address 0x4 - core index']
  #allocation1 [shape = 'u32[72,128]{1,0:T(1,128)}', space=vmem, size = 0x9000, scoped, tag = 'internal scratch']
  %s0 = inlined_call_operand.vmem [shape: f32[32,8,16], index: 0, kind: input, shape index: {}]
  %s1 = inlined_call_operand.hbm [shape: f32[8,64,64], index: 1, kind: input, shape index: {}]
  %s2 = inlined_call_operand.vmem [shape: f32[64,128], index: 2, kind: input, shape index: {}]
  %s3 = inlined_call_operand.vmem [shape: f32[1,128], index: 3, kind: input, shape index: {}]
  %s4 = inlined_call_operand.vmem [shape: f32[64,128], index: 4, kind: input, shape index: {}]
  %s5 = inlined_call_operand.vmem [shape: f32[1,128], index: 5, kind: input, shape index: {}]
  %s6 = inlined_call_operand.hbm [shape: f32[64,128], index: 6, kind: output, shape index: {}]
  %s7 = sld [smem:[#allocation0]]
  $region38: #{tpu_custom_call.1} parent=0
    _
  %s9 = ssub.s32 1, %s7
  %s10 = scalar_select 0, %s9, %s7
  $region1: #{tpu_custom_call.1} parent=0
    #allocation2 [shape = 'u8[262144]{0}', space=vmem, size = 0x40000, scoped, tag = 'input window, operand 1, single buffered']
    #allocation3 [shape = 's32[1]{0}', space=sflag, size = 0x4, scoped, tag = 'scoped memory for tpu_custom_call.1']
    #allocation4 [shape = 's32[1]{0}', space=sflag, size = 0x4, scoped, tag = 'scoped memory for tpu_custom_call.1']
    #allocation5 [shape = 'u8[32768]{0}', space=vmem, size = 0x8000, scoped, tag = 'output window, operand 0, single buffered']
    %11 = vsyncpa [#allocation3], 0
    %12 = vsyncpa [#allocation4], 0
    // Predicated region
    $region2: #{tpu_custom_call.1} parent=1 // pred_check
      _
    $region3: #{tpu_custom_call.1} parent=1 // pred_check_branch
      %14 = sbr.rel (0) target = $region5
    $region4: #{tpu_custom_call.1} parent=1 // pred_region
      _
    $region5: #{tpu_custom_call.1} parent=1 // pred_fallthru
      _
    // Predicated region
    $region6: #{tpu_custom_call.1} parent=1 // pred_check
      _
    $region7: #{tpu_custom_call.1} parent=1 // pred_check_branch
      %16 = sbr.rel (0) target = $region9
    $region8: #{tpu_custom_call.1} parent=1 // pred_region
      %18 = vsyncadd [#allocation3], 0
      %s19 = sshll.u32 %s1, 4
      %s20 = int_to_ptr.hbm [resolvable:$true] %s19
      %s21 = sshll.u32 [#allocation2], 4
      %s22 = int_to_ptr.vmem [resolvable:$true] %s21
      %27 = dma.hbm_to_vmem [thread:$0]  %s20, 8192, %s22, [#allocation3], 128, 128, 8
    $region9: #{tpu_custom_call.1} parent=1 // pred_fallthru
      _
    // Predicated region
    $region10: #{tpu_custom_call.1} parent=1 // pred_check
      _
    $region11: #{tpu_custom_call.1} parent=1 // pred_check_branch
      %29 = sbr.rel (0) target = $region13
    $region12: #{tpu_custom_call.1} parent=1 // pred_region
      _
    $region13: #{tpu_custom_call.1} parent=1 // pred_fallthru
      _
    // Predicated region
    $region14: #{tpu_custom_call.1} parent=1 // pred_check
      _
    $region15: #{tpu_custom_call.1} parent=1 // pred_check_branch
      %31 = sbr.rel (0) target = $region17
    $region16: #{tpu_custom_call.1} parent=1 // pred_region
      _
    $region17: #{tpu_custom_call.1} parent=1 // pred_fallthru
      _
    // Predicated region
    $region18: #{tpu_custom_call.1} parent=1 // pred_check
      _
    $region19: #{tpu_custom_call.1} parent=1 // pred_check_branch
      %33 = sbr.rel (0) target = $region21
    $region20: #{tpu_custom_call.1} parent=1 // pred_region
      _
    $region21: #{tpu_custom_call.1} parent=1 // pred_fallthru
      _
    // Predicated region
    $region22: #{tpu_custom_call.1} parent=1 // pred_check
      _
    $region23: #{tpu_custom_call.1} parent=1 // pred_check_branch
      %35 = sbr.rel (0) target = $region25
    $region24: #{tpu_custom_call.1} parent=1 // pred_region
      _
    $region25: #{tpu_custom_call.1} parent=1 // pred_fallthru
      _
    // Predicated region
    $region26: #{tpu_custom_call.1} parent=1 // pred_check
      _
    $region27: #{tpu_custom_call.1} parent=1 // pred_check_branch
      %37 = sbr.rel (0) target = $region29
    $region28: #{tpu_custom_call.1} parent=1 // pred_region
      %39 = dma.done [#allocation3], 8192
    $region29: #{tpu_custom_call.1} parent=1 // pred_fallthru
      _
    %v40 = vld [vmem:[#allocation2] sm:$0xff]
    %v41 = vld [vmem:[#allocation2 + $0x8] sm:$0xff]
    %v42 = vld [vmem:[#allocation2 + $0x10] sm:$0xff]
    %v43 = vld [vmem:[#allocation2 + $0x18] sm:$0xff]
    %v44 = vld [vmem:[#allocation2 + $0x20] sm:$0xff]
    %v45 = vld [vmem:[#allocation2 + $0x28] sm:$0xff]
    %v46 = vld [vmem:[#allocation2 + $0x30] sm:$0xff]
    %v47 = vld [vmem:[#allocation2 + $0x38] sm:$0xff]
    %v48 = vld [vmem:[#allocation2 + $0x40] sm:$0xff]
    %v49 = vld [vmem:[#allocation2 + $0x48] sm:$0xff]
    %v50 = vld [vmem:[#allocation2 + $0x50] sm:$0xff]
    %v51 = vld [vmem:[#allocation2 + $0x58] sm:$0xff]
    %v52 = vld [vmem:[#allocation2 + $0x60] sm:$0xff]
    %v53 = vld [vmem:[#allocation2 + $0x68] sm:$0xff]
    %v54 = vld [vmem:[#allocation2 + $0x70] sm:$0xff]
    %v55 = vld [vmem:[#allocation2 + $0x78] sm:$0xff]
    %v56 = vld [vmem:[#allocation2 + $0x80] sm:$0xff]
    %v57 = vld [vmem:[#allocation2 + $0x88] sm:$0xff]
    %v58 = vld [vmem:[#allocation2 + $0x90] sm:$0xff]
    %v59 = vld [vmem:[#allocation2 + $0x98] sm:$0xff]
    %v60 = vld [vmem:[#allocation2 + $0xa0] sm:$0xff]
    %v61 = vld [vmem:[#allocation2 + $0xa8] sm:$0xff]
    %v62 = vld [vmem:[#allocation2 + $0xb0] sm:$0xff]
    %v63 = vld [vmem:[#allocation2 + $0xb8] sm:$0xff]
    %v64 = vld [vmem:[#allocation2 + $0xc0] sm:$0xff]
    %v65 = vld [vmem:[#allocation2 + $0xc8] sm:$0xff]
    %v66 = vld [vmem:[#allocation2 + $0xd0] sm:$0xff]
    %v67 = vld [vmem:[#allocation2 + $0xd8] sm:$0xff]
    %v68 = vld [vmem:[#allocation2 + $0xe0] sm:$0xff]
    %v69 = vld [vmem:[#allocation2 + $0xe8] sm:$0xff]
    %v70 = vld [vmem:[#allocation2 + $0xf0] sm:$0xff]
    %v71 = vld [vmem:[#allocation2 + $0xf8] sm:$0xff]
    %v72 = vld [vmem:[#allocation2 + $0x100] sm:$0xff]
    %v73 = vld [vmem:[#allocation2 + $0x108] sm:$0xff]
    %v74 = vld [vmem:[#allocation2 + $0x110] sm:$0xff]
    %v75 = vld [vmem:[#allocation2 + $0x118] sm:$0xff]
    %v76 = vld [vmem:[#allocation2 + $0x120] sm:$0xff]
    %v77 = vld [vmem:[#allocation2 + $0x128] sm:$0xff]
    %v78 = vld [vmem:[#allocation2 + $0x130] sm:$0xff]
    %v79 = vld [vmem:[#allocation2 + $0x138] sm:$0xff]
    %v80 = vld [vmem:[#allocation2 + $0x140] sm:$0xff]
    %v81 = vld [vmem:[#allocation2 + $0x148] sm:$0xff]
    %v82 = vld [vmem:[#allocation2 + $0x150] sm:$0xff]
    %v83 = vld [vmem:[#allocation2 + $0x158] sm:$0xff]
    %v84 = vld [vmem:[#allocation2 + $0x160] sm:$0xff]
    %v85 = vld [vmem:[#allocation2 + $0x168] sm:$0xff]
    %v86 = vld [vmem:[#allocation2 + $0x170] sm:$0xff]
    %v87 = vld [vmem:[#allocation2 + $0x178] sm:$0xff]
    %v88 = vld [vmem:[#allocation2 + $0x180] sm:$0xff]
    %v89 = vld [vmem:[#allocation2 + $0x188] sm:$0xff]
    %v90 = vld [vmem:[#allocation2 + $0x190] sm:$0xff]
    %v91 = vld [vmem:[#allocation2 + $0x198] sm:$0xff]
    %v92 = vld [vmem:[#allocation2 + $0x1a0] sm:$0xff]
    %v93 = vld [vmem:[#allocation2 + $0x1a8] sm:$0xff]
    %v94 = vld [vmem:[#allocation2 + $0x1b0] sm:$0xff]
    %v95 = vld [vmem:[#allocation2 + $0x1b8] sm:$0xff]
    %v96 = vld [vmem:[#allocation2 + $0x1c0] sm:$0xff]
    %v97 = vld [vmem:[#allocation2 + $0x1c8] sm:$0xff]
    %v98 = vld [vmem:[#allocation2 + $0x1d0] sm:$0xff]
    %v99 = vld [vmem:[#allocation2 + $0x1d8] sm:$0xff]
    %v100 = vld [vmem:[#allocation2 + $0x1e0] sm:$0xff]
    %v101 = vld [vmem:[#allocation2 + $0x1e8] sm:$0xff]
    %v102 = vld [vmem:[#allocation2 + $0x1f0] sm:$0xff]
    %v103 = vld [vmem:[#allocation2 + $0x1f8] sm:$0xff]
    %v104 = vld [vmem:[%s2] sm:$0xff]
    %v105 = vld [vmem:[%s2 + $0x8] sm:$0xff]
    %v106 = vld [vmem:[%s2 + $0x10] sm:$0xff]
    %v107 = vld [vmem:[%s2 + $0x18] sm:$0xff]
    %v108 = vld [vmem:[%s2 + $0x20] sm:$0xff]
    %v109 = vld [vmem:[%s2 + $0x28] sm:$0xff]
    %v110 = vld [vmem:[%s2 + $0x30] sm:$0xff]
    %v111 = vld [vmem:[%s2 + $0x38] sm:$0xff]
    %v112 = vld [vmem:[%s3] sm:$0x1]
    %v114 = vperm.slane %v112, 0
    %vm116 = vcmask 523264
    %v118 = vsel %vm116, %v40, 0
    %v121 = vsel %vm116, %v41, 0
    %v124 = vsel %vm116, %v42, 0
    %v127 = vsel %vm116, %v43, 0
    %v130 = vsel %vm116, %v44, 0
    %v133 = vsel %vm116, %v45, 0
    %v136 = vsel %vm116, %v46, 0
    %v139 = vsel %vm116, %v47, 0
    %v142 = vsel %vm116, %v48, 0
    %v145 = vsel %vm116, %v49, 0
    %v148 = vsel %vm116, %v50, 0
    %v151 = vsel %vm116, %v51, 0
    %v154 = vsel %vm116, %v52, 0
    %v157 = vsel %vm116, %v53, 0
    %v160 = vsel %vm116, %v54, 0
    %v163 = vsel %vm116, %v55, 0
    %v166 = vsel %vm116, %v56, 0
    %v169 = vsel %vm116, %v57, 0
    %v172 = vsel %vm116, %v58, 0
    %v175 = vsel %vm116, %v59, 0
    %v178 = vsel %vm116, %v60, 0
    %v181 = vsel %vm116, %v61, 0
    %v184 = vsel %vm116, %v62, 0
    %v187 = vsel %vm116, %v63, 0
    %v190 = vsel %vm116, %v64, 0
    %v193 = vsel %vm116, %v65, 0
    %v196 = vsel %vm116, %v66, 0
    %v199 = vsel %vm116, %v67, 0
    %v202 = vsel %vm116, %v68, 0
    %v205 = vsel %vm116, %v69, 0
    %v208 = vsel %vm116, %v70, 0
    %v211 = vsel %vm116, %v71, 0
    %v214 = vsel %vm116, %v72, 0
    %v217 = vsel %vm116, %v73, 0
    %v220 = vsel %vm116, %v74, 0
    %v223 = vsel %vm116, %v75, 0
    %v226 = vsel %vm116, %v76, 0
    %v229 = vsel %vm116, %v77, 0
    %v232 = vsel %vm116, %v78, 0
    %v235 = vsel %vm116, %v79, 0
    %v238 = vsel %vm116, %v80, 0
    %v241 = vsel %vm116, %v81, 0
    %v244 = vsel %vm116, %v82, 0
    %v247 = vsel %vm116, %v83, 0
    %v250 = vsel %vm116, %v84, 0
    %v253 = vsel %vm116, %v85, 0
    %v256 = vsel %vm116, %v86, 0
    %v259 = vsel %vm116, %v87, 0
    %v262 = vsel %vm116, %v88, 0
    %v265 = vsel %vm116, %v89, 0
    %v268 = vsel %vm116, %v90, 0
    %v271 = vsel %vm116, %v91, 0
    %v274 = vsel %vm116, %v92, 0
    %v277 = vsel %vm116, %v93, 0
    %v280 = vsel %vm116, %v94, 0
    %v283 = vsel %vm116, %v95, 0
    %v286 = vsel %vm116, %v96, 0
    %v289 = vsel %vm116, %v97, 0
    %v292 = vsel %vm116, %v98, 0
    %v295 = vsel %vm116, %v99, 0
    %v298 = vsel %vm116, %v100, 0
    %v301 = vsel %vm116, %v101, 0
    %v304 = vsel %vm116, %v102, 0
    %v307 = vsel %vm116, %v103, 0
    %309 = vmatpush.msra.mxu0 0.0
    %310 = vmatpush.msra.mxu0 0.0
    %311 = vmatpush.msra.mxu0 0.0
    %312 = vmatpush.msra.mxu0 0.0
    %313 = vmatpush.msra.mxu0 0.0
    %314 = vmatpush.msra.mxu0 0.0
    %315 = vmatpush.msra.mxu0 0.0
    %316 = vmatpush.msra.mxu0 0.0
    %317 = vmatpush.msra.mxu0 %v111
    %318 = vmatpush.msra.mxu0 %v110
    %319 = vmatpush.msra.mxu0 %v109
    %320 = vmatpush.msra.mxu0 %v108
    %321 = vmatpush.msra.mxu0 %v107
    %322 = vmatpush.msra.mxu0 %v106
    %323 = vmatpush.msra.mxu0 %v105
    %324 = vmatpush.msra.mxu0 %v104
    %325 = vmatmul.f32.gmra.mxu0 %v118
    %v326 = vpop.f32.mrf.mxu0
    %v327 = vadd.f32 %v114, %v326
    %328 = vmatmul.f32.gmra.mxu0 %v121
    %v329 = vpop.f32.mrf.mxu0
    %v330 = vadd.f32 %v114, %v329
    %331 = vmatmul.f32.gmra.mxu0 %v124
    %v332 = vpop.f32.mrf.mxu0
    %v333 = vadd.f32 %v114, %v332
    %334 = vmatmul.f32.gmra.mxu0 %v127
    %v335 = vpop.f32.mrf.mxu0
    %v336 = vadd.f32 %v114, %v335
    %337 = vmatmul.f32.gmra.mxu0 %v130
    %v338 = vpop.f32.mrf.mxu0
    %v339 = vadd.f32 %v114, %v338
    %340 = vmatmul.f32.gmra.mxu0 %v133
    %v341 = vpop.f32.mrf.mxu0
    %v342 = vadd.f32 %v114, %v341
    %343 = vmatmul.f32.gmra.mxu0 %v136
    %v344 = vpop.f32.mrf.mxu0
    %v345 = vadd.f32 %v114, %v344
    %346 = vmatmul.f32.gmra.mxu0 %v139
    %v347 = vpop.f32.mrf.mxu0
    %v348 = vadd.f32 %v114, %v347
    %349 = vmatmul.f32.gmra.mxu0 %v142
    %v350 = vpop.f32.mrf.mxu0
    %v351 = vadd.f32 %v114, %v350
    %352 = vmatmul.f32.gmra.mxu0 %v145
    %v353 = vpop.f32.mrf.mxu0
    %v354 = vadd.f32 %v114, %v353
    %355 = vmatmul.f32.gmra.mxu0 %v148
    %v356 = vpop.f32.mrf.mxu0
    %v357 = vadd.f32 %v114, %v356
    %358 = vmatmul.f32.gmra.mxu0 %v151
    %v359 = vpop.f32.mrf.mxu0
    %v360 = vadd.f32 %v114, %v359
    %361 = vmatmul.f32.gmra.mxu0 %v154
    %v362 = vpop.f32.mrf.mxu0
    %v363 = vadd.f32 %v114, %v362
    %364 = vmatmul.f32.gmra.mxu0 %v157
    %v365 = vpop.f32.mrf.mxu0
    %v366 = vadd.f32 %v114, %v365
    %367 = vmatmul.f32.gmra.mxu0 %v160
    %v368 = vpop.f32.mrf.mxu0
    %v369 = vadd.f32 %v114, %v368
    %370 = vmatmul.f32.gmra.mxu0 %v163
    %v371 = vpop.f32.mrf.mxu0
    %v372 = vadd.f32 %v114, %v371
    %373 = vmatmul.f32.gmra.mxu0 %v166
    %v374 = vpop.f32.mrf.mxu0
    %v375 = vadd.f32 %v114, %v374
    %376 = vmatmul.f32.gmra.mxu0 %v169
    %v377 = vpop.f32.mrf.mxu0
    %v378 = vadd.f32 %v114, %v377
    %379 = vmatmul.f32.gmra.mxu0 %v172
    %v380 = vpop.f32.mrf.mxu0
    %v381 = vadd.f32 %v114, %v380
    %382 = vmatmul.f32.gmra.mxu0 %v175
    %v383 = vpop.f32.mrf.mxu0
    %v384 = vadd.f32 %v114, %v383
    %385 = vmatmul.f32.gmra.mxu0 %v178
    %v386 = vpop.f32.mrf.mxu0
    %v387 = vadd.f32 %v114, %v386
    %388 = vmatmul.f32.gmra.mxu0 %v181
    %v389 = vpop.f32.mrf.mxu0
    %v390 = vadd.f32 %v114, %v389
    %391 = vmatmul.f32.gmra.mxu0 %v184
    %v392 = vpop.f32.mrf.mxu0
    %v393 = vadd.f32 %v114, %v392
    %394 = vmatmul.f32.gmra.mxu0 %v187
    %v395 = vpop.f32.mrf.mxu0
    %v396 = vadd.f32 %v114, %v395
    %397 = vmatmul.f32.gmra.mxu0 %v190
    %v398 = vpop.f32.mrf.mxu0
    %v399 = vadd.f32 %v114, %v398
    %400 = vmatmul.f32.gmra.mxu0 %v193
    %v401 = vpop.f32.mrf.mxu0
    %v402 = vadd.f32 %v114, %v401
    %403 = vmatmul.f32.gmra.mxu0 %v196
    %v404 = vpop.f32.mrf.mxu0
    %v405 = vadd.f32 %v114, %v404
    %406 = vmatmul.f32.gmra.mxu0 %v199
    %v407 = vpop.f32.mrf.mxu0
    %v408 = vadd.f32 %v114, %v407
    %409 = vmatmul.f32.gmra.mxu0 %v202
    %v410 = vpop.f32.mrf.mxu0
    %v411 = vadd.f32 %v114, %v410
    %412 = vmatmul.f32.gmra.mxu0 %v205
    %v413 = vpop.f32.mrf.mxu0
    %v414 = vadd.f32 %v114, %v413
    %415 = vmatmul.f32.gmra.mxu0 %v208
    %v416 = vpop.f32.mrf.mxu0
    %v417 = vadd.f32 %v114, %v416
    %418 = vmatmul.f32.gmra.mxu0 %v211
    %v419 = vpop.f32.mrf.mxu0
    %v420 = vadd.f32 %v114, %v419
    %421 = vmatmul.f32.gmra.mxu0 %v214
    %v422 = vpop.f32.mrf.mxu0
    %v423 = vadd.f32 %v114, %v422
    %424 = vmatmul.f32.gmra.mxu0 %v217
    %v425 = vpop.f32.mrf.mxu0
    %v426 = vadd.f32 %v114, %v425
    %427 = vmatmul.f32.gmra.mxu0 %v220
    %v428 = vpop.f32.mrf.mxu0
    %v429 = vadd.f32 %v114, %v428
    %430 = vmatmul.f32.gmra.mxu0 %v223
    %v431 = vpop.f32.mrf.mxu0
    %v432 = vadd.f32 %v114, %v431
    %433 = vmatmul.f32.gmra.mxu0 %v226
    %v434 = vpop.f32.mrf.mxu0
    %v435 = vadd.f32 %v114, %v434
    %436 = vmatmul.f32.gmra.mxu0 %v229
    %v437 = vpop.f32.mrf.mxu0
    %v438 = vadd.f32 %v114, %v437
    %439 = vmatmul.f32.gmra.mxu0 %v232
    %v440 = vpop.f32.mrf.mxu0
    %v441 = vadd.f32 %v114, %v440
    %442 = vmatmul.f32.gmra.mxu0 %v235
    %v443 = vpop.f32.mrf.mxu0
    %v444 = vadd.f32 %v114, %v443
    %445 = vmatmul.f32.gmra.mxu0 %v238
    %v446 = vpop.f32.mrf.mxu0
    %v447 = vadd.f32 %v114, %v446
    %448 = vmatmul.f32.gmra.mxu0 %v241
    %v449 = vpop.f32.mrf.mxu0
    %v450 = vadd.f32 %v114, %v449
    %451 = vmatmul.f32.gmra.mxu0 %v244
    %v452 = vpop.f32.mrf.mxu0
    %v453 = vadd.f32 %v114, %v452
    %454 = vmatmul.f32.gmra.mxu0 %v247
    %v455 = vpop.f32.mrf.mxu0
    %v456 = vadd.f32 %v114, %v455
    %457 = vmatmul.f32.gmra.mxu0 %v250
    %v458 = vpop.f32.mrf.mxu0
    %v459 = vadd.f32 %v114, %v458
    %460 = vmatmul.f32.gmra.mxu0 %v253
    %v461 = vpop.f32.mrf.mxu0
    %v462 = vadd.f32 %v114, %v461
    %463 = vmatmul.f32.gmra.mxu0 %v256
    %v464 = vpop.f32.mrf.mxu0
    %v465 = vadd.f32 %v114, %v464
    %466 = vmatmul.f32.gmra.mxu0 %v259
    %v467 = vpop.f32.mrf.mxu0
    %v468 = vadd.f32 %v114, %v467
    %469 = vmatmul.f32.gmra.mxu0 %v262
    %v470 = vpop.f32.mrf.mxu0
    %v471 = vadd.f32 %v114, %v470
    %472 = vmatmul.f32.gmra.mxu0 %v265
    %v473 = vpop.f32.mrf.mxu0
    %v474 = vadd.f32 %v114, %v473
    %475 = vmatmul.f32.gmra.mxu0 %v268
    %v476 = vpop.f32.mrf.mxu0
    %v477 = vadd.f32 %v114, %v476
    %478 = vmatmul.f32.gmra.mxu0 %v271
    %v479 = vpop.f32.mrf.mxu0
    %v480 = vadd.f32 %v114, %v479
    %481 = vmatmul.f32.gmra.mxu0 %v274
    %v482 = vpop.f32.mrf.mxu0
    %v483 = vadd.f32 %v114, %v482
    %484 = vmatmul.f32.gmra.mxu0 %v277
    %v485 = vpop.f32.mrf.mxu0
    %v486 = vadd.f32 %v114, %v485
    %487 = vmatmul.f32.gmra.mxu0 %v280
    %v488 = vpop.f32.mrf.mxu0
    %v489 = vadd.f32 %v114, %v488
    %490 = vmatmul.f32.gmra.mxu0 %v283
    %v491 = vpop.f32.mrf.mxu0
    %v492 = vadd.f32 %v114, %v491
    %493 = vmatmul.f32.gmra.mxu0 %v286
    %v494 = vpop.f32.mrf.mxu0
    %v495 = vadd.f32 %v114, %v494
    %496 = vmatmul.f32.gmra.mxu0 %v289
    %v497 = vpop.f32.mrf.mxu0
    %v498 = vadd.f32 %v114, %v497
    %499 = vmatmul.f32.gmra.mxu0 %v292
    %v500 = vpop.f32.mrf.mxu0
    %v501 = vadd.f32 %v114, %v500
    %502 = vmatmul.f32.gmra.mxu0 %v295
    %v503 = vpop.f32.mrf.mxu0
    %v504 = vadd.f32 %v114, %v503
    %505 = vmatmul.f32.gmra.mxu0 %v298
    %v506 = vpop.f32.mrf.mxu0
    %v507 = vadd.f32 %v114, %v506
    %508 = vmatmul.f32.gmra.mxu0 %v301
    %v509 = vpop.f32.mrf.mxu0
    %v510 = vadd.f32 %v114, %v509
    %511 = vmatmul.f32.gmra.mxu0 %v304
    %v512 = vpop.f32.mrf.mxu0
    %v513 = vadd.f32 %v114, %v512
    %514 = vmatmul.f32.gmra.mxu0 %v307
    %v515 = vpop.f32.mrf.mxu0
    %v516 = vadd.f32 %v114, %v515
    %517 = vdwg.mxu0
    %582 = vrot.lane.b32.xlu0 %v327, 112
    %v583 = vpop.permute.xlu0 %582
    %584 = vrot.lane.b32.xlu0 %v330, 112
    %v585 = vpop.permute.xlu0 %584
    %586 = vrot.lane.b32.xlu0 %v333, 112
    %v587 = vpop.permute.xlu0 %586
    %588 = vrot.lane.b32.xlu0 %v336, 112
    %v589 = vpop.permute.xlu0 %588
    %590 = vrot.lane.b32.xlu0 %v339, 112
    %v591 = vpop.permute.xlu0 %590
    %592 = vrot.lane.b32.xlu0 %v342, 112
    %v593 = vpop.permute.xlu0 %592
    %594 = vrot.lane.b32.xlu0 %v345, 112
    %v595 = vpop.permute.xlu0 %594
    %596 = vrot.lane.b32.xlu0 %v348, 112
    %v597 = vpop.permute.xlu0 %596
    %598 = vrot.lane.b32.xlu0 %v351, 112
    %v599 = vpop.permute.xlu0 %598
    %600 = vrot.lane.b32.xlu0 %v354, 112
    %v601 = vpop.permute.xlu0 %600
    %602 = vrot.lane.b32.xlu0 %v357, 112
    %v603 = vpop.permute.xlu0 %602
    %604 = vrot.lane.b32.xlu0 %v360, 112
    %v605 = vpop.permute.xlu0 %604
    %606 = vrot.lane.b32.xlu0 %v363, 112
    %v607 = vpop.permute.xlu0 %606
    %608 = vrot.lane.b32.xlu0 %v366, 112
    %v609 = vpop.permute.xlu0 %608
    %610 = vrot.lane.b32.xlu0 %v369, 112
    %v611 = vpop.permute.xlu0 %610
    %612 = vrot.lane.b32.xlu0 %v372, 112
    %v613 = vpop.permute.xlu0 %612
    %614 = vrot.lane.b32.xlu0 %v375, 112
    %v615 = vpop.permute.xlu0 %614
    %616 = vrot.lane.b32.xlu0 %v378, 112
    %v617 = vpop.permute.xlu0 %616
    %618 = vrot.lane.b32.xlu0 %v381, 112
    %v619 = vpop.permute.xlu0 %618
    %620 = vrot.lane.b32.xlu0 %v384, 112
    %v621 = vpop.permute.xlu0 %620
    %622 = vrot.lane.b32.xlu0 %v387, 112
    %v623 = vpop.permute.xlu0 %622
    %624 = vrot.lane.b32.xlu0 %v390, 112
    %v625 = vpop.permute.xlu0 %624
    %626 = vrot.lane.b32.xlu0 %v393, 112
    %v627 = vpop.permute.xlu0 %626
    %628 = vrot.lane.b32.xlu0 %v396, 112
    %v629 = vpop.permute.xlu0 %628
    %630 = vrot.lane.b32.xlu0 %v399, 112
    %v631 = vpop.permute.xlu0 %630
    %632 = vrot.lane.b32.xlu0 %v402, 112
    %v633 = vpop.permute.xlu0 %632
    %634 = vrot.lane.b32.xlu0 %v405, 112
    %v635 = vpop.permute.xlu0 %634
    %636 = vrot.lane.b32.xlu0 %v408, 112
    %v637 = vpop.permute.xlu0 %636
    %638 = vrot.lane.b32.xlu0 %v411, 112
    %v639 = vpop.permute.xlu0 %638
    %640 = vrot.lane.b32.xlu0 %v414, 112
    %v641 = vpop.permute.xlu0 %640
    %642 = vrot.lane.b32.xlu0 %v417, 112
    %v643 = vpop.permute.xlu0 %642
    %644 = vrot.lane.b32.xlu0 %v420, 112
    %v645 = vpop.permute.xlu0 %644
    %646 = vrot.lane.b32.xlu0 %v423, 112
    %v647 = vpop.permute.xlu0 %646
    %648 = vrot.lane.b32.xlu0 %v426, 112
    %v649 = vpop.permute.xlu0 %648
    %650 = vrot.lane.b32.xlu0 %v429, 112
    %v651 = vpop.permute.xlu0 %650
    %652 = vrot.lane.b32.xlu0 %v432, 112
    %v653 = vpop.permute.xlu0 %652
    %654 = vrot.lane.b32.xlu0 %v435, 112
    %v655 = vpop.permute.xlu0 %654
    %656 = vrot.lane.b32.xlu0 %v438, 112
    %v657 = vpop.permute.xlu0 %656
    %658 = vrot.lane.b32.xlu0 %v441, 112
    %v659 = vpop.permute.xlu0 %658
    %660 = vrot.lane.b32.xlu0 %v444, 112
    %v661 = vpop.permute.xlu0 %660
    %662 = vrot.lane.b32.xlu0 %v447, 112
    %v663 = vpop.permute.xlu0 %662
    %664 = vrot.lane.b32.xlu0 %v450, 112
    %v665 = vpop.permute.xlu0 %664
    %666 = vrot.lane.b32.xlu0 %v453, 112
    %v667 = vpop.permute.xlu0 %666
    %668 = vrot.lane.b32.xlu0 %v456, 112
    %v669 = vpop.permute.xlu0 %668
    %670 = vrot.lane.b32.xlu0 %v459, 112
    %v671 = vpop.permute.xlu0 %670
    %672 = vrot.lane.b32.xlu0 %v462, 112
    %v673 = vpop.permute.xlu0 %672
    %674 = vrot.lane.b32.xlu0 %v465, 112
    %v675 = vpop.permute.xlu0 %674
    %676 = vrot.lane.b32.xlu0 %v468, 112
    %v677 = vpop.permute.xlu0 %676
    %678 = vrot.lane.b32.xlu0 %v471, 112
    %v679 = vpop.permute.xlu0 %678
    %680 = vrot.lane.b32.xlu0 %v474, 112
    %v681 = vpop.permute.xlu0 %680
    %682 = vrot.lane.b32.xlu0 %v477, 112
    %v683 = vpop.permute.xlu0 %682
    %684 = vrot.lane.b32.xlu0 %v480, 112
    %v685 = vpop.permute.xlu0 %684
    %686 = vrot.lane.b32.xlu0 %v483, 112
    %v687 = vpop.permute.xlu0 %686
    %688 = vrot.lane.b32.xlu0 %v486, 112
    %v689 = vpop.permute.xlu0 %688
    %690 = vrot.lane.b32.xlu0 %v489, 112
    %v691 = vpop.permute.xlu0 %690
    %692 = vrot.lane.b32.xlu0 %v492, 112
    %v693 = vpop.permute.xlu0 %692
    %694 = vrot.lane.b32.xlu0 %v495, 112
    %v695 = vpop.permute.xlu0 %694
    %696 = vrot.lane.b32.xlu0 %v498, 112
    %v697 = vpop.permute.xlu0 %696
    %698 = vrot.lane.b32.xlu0 %v501, 112
    %v699 = vpop.permute.xlu0 %698
    %700 = vrot.lane.b32.xlu0 %v504, 112
    %v701 = vpop.permute.xlu0 %700
    %702 = vrot.lane.b32.xlu0 %v507, 112
    %v703 = vpop.permute.xlu0 %702
    %704 = vrot.lane.b32.xlu0 %v510, 112
    %v705 = vpop.permute.xlu0 %704
    %706 = vrot.lane.b32.xlu0 %v513, 112
    %v707 = vpop.permute.xlu0 %706
    %708 = vrot.lane.b32.xlu0 %v516, 112
    %v709 = vpop.permute.xlu0 %708
    %710 = vrot.lane.b32.xlu0 %v327, 96
    %v711 = vpop.permute.xlu0 %710
    %712 = vrot.lane.b32.xlu0 %v330, 96
    %v713 = vpop.permute.xlu0 %712
    %714 = vrot.lane.b32.xlu0 %v333, 96
    %v715 = vpop.permute.xlu0 %714
    %716 = vrot.lane.b32.xlu0 %v336, 96
    %v717 = vpop.permute.xlu0 %716
    %718 = vrot.lane.b32.xlu0 %v339, 96
    %v719 = vpop.permute.xlu0 %718
    %720 = vrot.lane.b32.xlu0 %v342, 96
    %v721 = vpop.permute.xlu0 %720
    %722 = vrot.lane.b32.xlu0 %v345, 96
    %v723 = vpop.permute.xlu0 %722
    %724 = vrot.lane.b32.xlu0 %v348, 96
    %v725 = vpop.permute.xlu0 %724
    %726 = vrot.lane.b32.xlu0 %v351, 96
    %v727 = vpop.permute.xlu0 %726
    %728 = vrot.lane.b32.xlu0 %v354, 96
    %v729 = vpop.permute.xlu0 %728
    %730 = vrot.lane.b32.xlu0 %v357, 96
    %v731 = vpop.permute.xlu0 %730
    %732 = vrot.lane.b32.xlu0 %v360, 96
    %v733 = vpop.permute.xlu0 %732
    %734 = vrot.lane.b32.xlu0 %v363, 96
    %v735 = vpop.permute.xlu0 %734
    %736 = vrot.lane.b32.xlu0 %v366, 96
    %v737 = vpop.permute.xlu0 %736
    %738 = vrot.lane.b32.xlu0 %v369, 96
    %v739 = vpop.permute.xlu0 %738
    %740 = vrot.lane.b32.xlu0 %v372, 96
    %v741 = vpop.permute.xlu0 %740
    %742 = vrot.lane.b32.xlu0 %v375, 96
    %v743 = vpop.permute.xlu0 %742
    %744 = vrot.lane.b32.xlu0 %v378, 96
    %v745 = vpop.permute.xlu0 %744
    %746 = vrot.lane.b32.xlu0 %v381, 96
    %v747 = vpop.permute.xlu0 %746
    %748 = vrot.lane.b32.xlu0 %v384, 96
    %v749 = vpop.permute.xlu0 %748
    %750 = vrot.lane.b32.xlu0 %v387, 96
    %v751 = vpop.permute.xlu0 %750
    %752 = vrot.lane.b32.xlu0 %v390, 96
    %v753 = vpop.permute.xlu0 %752
    %754 = vrot.lane.b32.xlu0 %v393, 96
    %v755 = vpop.permute.xlu0 %754
    %756 = vrot.lane.b32.xlu0 %v396, 96
    %v757 = vpop.permute.xlu0 %756
    %758 = vrot.lane.b32.xlu0 %v399, 96
    %v759 = vpop.permute.xlu0 %758
    %760 = vrot.lane.b32.xlu0 %v402, 96
    %v761 = vpop.permute.xlu0 %760
    %762 = vrot.lane.b32.xlu0 %v405, 96
    %v763 = vpop.permute.xlu0 %762
    %764 = vrot.lane.b32.xlu0 %v408, 96
    %v765 = vpop.permute.xlu0 %764
    %766 = vrot.lane.b32.xlu0 %v411, 96
    %v767 = vpop.permute.xlu0 %766
    %768 = vrot.lane.b32.xlu0 %v414, 96
    %v769 = vpop.permute.xlu0 %768
    %770 = vrot.lane.b32.xlu0 %v417, 96
    %v771 = vpop.permute.xlu0 %770
    %772 = vrot.lane.b32.xlu0 %v420, 96
    %v773 = vpop.permute.xlu0 %772
    %774 = vrot.lane.b32.xlu0 %v423, 96
    %v775 = vpop.permute.xlu0 %774
    %776 = vrot.lane.b32.xlu0 %v426, 96
    %v777 = vpop.permute.xlu0 %776
    %778 = vrot.lane.b32.xlu0 %v429, 96
    %v779 = vpop.permute.xlu0 %778
    %780 = vrot.lane.b32.xlu0 %v432, 96
    %v781 = vpop.permute.xlu0 %780
    %782 = vrot.lane.b32.xlu0 %v435, 96
    %v783 = vpop.permute.xlu0 %782
    %784 = vrot.lane.b32.xlu0 %v438, 96
    %v785 = vpop.permute.xlu0 %784
    %786 = vrot.lane.b32.xlu0 %v441, 96
    %v787 = vpop.permute.xlu0 %786
    %788 = vrot.lane.b32.xlu0 %v444, 96
    %v789 = vpop.permute.xlu0 %788
    %790 = vrot.lane.b32.xlu0 %v447, 96
    %v791 = vpop.permute.xlu0 %790
    %792 = vrot.lane.b32.xlu0 %v450, 96
    %v793 = vpop.permute.xlu0 %792
    %794 = vrot.lane.b32.xlu0 %v453, 96
    %v795 = vpop.permute.xlu0 %794
    %796 = vrot.lane.b32.xlu0 %v456, 96
    %v797 = vpop.permute.xlu0 %796
    %798 = vrot.lane.b32.xlu0 %v459, 96
    %v799 = vpop.permute.xlu0 %798
    %800 = vrot.lane.b32.xlu0 %v462, 96
    %v801 = vpop.permute.xlu0 %800
    %802 = vrot.lane.b32.xlu0 %v465, 96
    %v803 = vpop.permute.xlu0 %802
    %804 = vrot.lane.b32.xlu0 %v468, 96
    %v805 = vpop.permute.xlu0 %804
    %806 = vrot.lane.b32.xlu0 %v471, 96
    %v807 = vpop.permute.xlu0 %806
    %808 = vrot.lane.b32.xlu0 %v474, 96
    %v809 = vpop.permute.xlu0 %808
    %810 = vrot.lane.b32.xlu0 %v477, 96
    %v811 = vpop.permute.xlu0 %810
    %812 = vrot.lane.b32.xlu0 %v480, 96
    %v813 = vpop.permute.xlu0 %812
    %814 = vrot.lane.b32.xlu0 %v483, 96
    %v815 = vpop.permute.xlu0 %814
    %816 = vrot.lane.b32.xlu0 %v486, 96
    %v817 = vpop.permute.xlu0 %816
    %818 = vrot.lane.b32.xlu0 %v489, 96
    %v819 = vpop.permute.xlu0 %818
    %820 = vrot.lane.b32.xlu0 %v492, 96
    %v821 = vpop.permute.xlu0 %820
    %822 = vrot.lane.b32.xlu0 %v495, 96
    %v823 = vpop.permute.xlu0 %822
    %824 = vrot.lane.b32.xlu0 %v498, 96
    %v825 = vpop.permute.xlu0 %824
    %826 = vrot.lane.b32.xlu0 %v501, 96
    %v827 = vpop.permute.xlu0 %826
    %828 = vrot.lane.b32.xlu0 %v504, 96
    %v829 = vpop.permute.xlu0 %828
    %830 = vrot.lane.b32.xlu0 %v507, 96
    %v831 = vpop.permute.xlu0 %830
    %832 = vrot.lane.b32.xlu0 %v510, 96
    %v833 = vpop.permute.xlu0 %832
    %834 = vrot.lane.b32.xlu0 %v513, 96
    %v835 = vpop.permute.xlu0 %834
    %836 = vrot.lane.b32.xlu0 %v516, 96
    %v837 = vpop.permute.xlu0 %836
    %838 = vrot.lane.b32.xlu0 %v327, 80
    %v839 = vpop.permute.xlu0 %838
    %840 = vrot.lane.b32.xlu0 %v330, 80
    %v841 = vpop.permute.xlu0 %840
    %842 = vrot.lane.b32.xlu0 %v333, 80
    %v843 = vpop.permute.xlu0 %842
    %844 = vrot.lane.b32.xlu0 %v336, 80
    %v845 = vpop.permute.xlu0 %844
    %846 = vrot.lane.b32.xlu0 %v339, 80
    %v847 = vpop.permute.xlu0 %846
    %848 = vrot.lane.b32.xlu0 %v342, 80
    %v849 = vpop.permute.xlu0 %848
    %850 = vrot.lane.b32.xlu0 %v345, 80
    %v851 = vpop.permute.xlu0 %850
    %852 = vrot.lane.b32.xlu0 %v348, 80
    %v853 = vpop.permute.xlu0 %852
    %854 = vrot.lane.b32.xlu0 %v351, 80
    %v855 = vpop.permute.xlu0 %854
    %856 = vrot.lane.b32.xlu0 %v354, 80
    %v857 = vpop.permute.xlu0 %856
    %858 = vrot.lane.b32.xlu0 %v357, 80
    %v859 = vpop.permute.xlu0 %858
    %860 = vrot.lane.b32.xlu0 %v360, 80
    %v861 = vpop.permute.xlu0 %860
    %862 = vrot.lane.b32.xlu0 %v363, 80
    %v863 = vpop.permute.xlu0 %862
    %864 = vrot.lane.b32.xlu0 %v366, 80
    %v865 = vpop.permute.xlu0 %864
    %866 = vrot.lane.b32.xlu0 %v369, 80
    %v867 = vpop.permute.xlu0 %866
    %868 = vrot.lane.b32.xlu0 %v372, 80
    %v869 = vpop.permute.xlu0 %868
    %870 = vrot.lane.b32.xlu0 %v375, 80
    %v871 = vpop.permute.xlu0 %870
    %872 = vrot.lane.b32.xlu0 %v378, 80
    %v873 = vpop.permute.xlu0 %872
    %874 = vrot.lane.b32.xlu0 %v381, 80
    %v875 = vpop.permute.xlu0 %874
    %876 = vrot.lane.b32.xlu0 %v384, 80
    %v877 = vpop.permute.xlu0 %876
    %878 = vrot.lane.b32.xlu0 %v387, 80
    %v879 = vpop.permute.xlu0 %878
    %880 = vrot.lane.b32.xlu0 %v390, 80
    %v881 = vpop.permute.xlu0 %880
    %882 = vrot.lane.b32.xlu0 %v393, 80
    %v883 = vpop.permute.xlu0 %882
    %884 = vrot.lane.b32.xlu0 %v396, 80
    %v885 = vpop.permute.xlu0 %884
    %886 = vrot.lane.b32.xlu0 %v399, 80
    %v887 = vpop.permute.xlu0 %886
    %888 = vrot.lane.b32.xlu0 %v402, 80
    %v889 = vpop.permute.xlu0 %888
    %890 = vrot.lane.b32.xlu0 %v405, 80
    %v891 = vpop.permute.xlu0 %890
    %892 = vrot.lane.b32.xlu0 %v408, 80
    %v893 = vpop.permute.xlu0 %892
    %894 = vrot.lane.b32.xlu0 %v411, 80
    %v895 = vpop.permute.xlu0 %894
    %896 = vrot.lane.b32.xlu0 %v414, 80
    %v897 = vpop.permute.xlu0 %896
    %898 = vrot.lane.b32.xlu0 %v417, 80
    %v899 = vpop.permute.xlu0 %898
    %900 = vrot.lane.b32.xlu0 %v420, 80
    %v901 = vpop.permute.xlu0 %900
    %902 = vrot.lane.b32.xlu0 %v423, 80
    %v903 = vpop.permute.xlu0 %902
    %904 = vrot.lane.b32.xlu0 %v426, 80
    %v905 = vpop.permute.xlu0 %904
    %906 = vrot.lane.b32.xlu0 %v429, 80
    %v907 = vpop.permute.xlu0 %906
    %908 = vrot.lane.b32.xlu0 %v432, 80
    %v909 = vpop.permute.xlu0 %908
    %910 = vrot.lane.b32.xlu0 %v435, 80
    %v911 = vpop.permute.xlu0 %910
    %912 = vrot.lane.b32.xlu0 %v438, 80
    %v913 = vpop.permute.xlu0 %912
    %914 = vrot.lane.b32.xlu0 %v441, 80
    %v915 = vpop.permute.xlu0 %914
    %916 = vrot.lane.b32.xlu0 %v444, 80
    %v917 = vpop.permute.xlu0 %916
    %918 = vrot.lane.b32.xlu0 %v447, 80
    %v919 = vpop.permute.xlu0 %918
    %920 = vrot.lane.b32.xlu0 %v450, 80
    %v921 = vpop.permute.xlu0 %920
    %922 = vrot.lane.b32.xlu0 %v453, 80
    %v923 = vpop.permute.xlu0 %922
    %924 = vrot.lane.b32.xlu0 %v456, 80
    %v925 = vpop.permute.xlu0 %924
    %926 = vrot.lane.b32.xlu0 %v459, 80
    %v927 = vpop.permute.xlu0 %926
    %928 = vrot.lane.b32.xlu0 %v462, 80
    %v929 = vpop.permute.xlu0 %928
    %930 = vrot.lane.b32.xlu0 %v465, 80
    %v931 = vpop.permute.xlu0 %930
    %932 = vrot.lane.b32.xlu0 %v468, 80
    %v933 = vpop.permute.xlu0 %932
    %934 = vrot.lane.b32.xlu0 %v471, 80
    %v935 = vpop.permute.xlu0 %934
    %936 = vrot.lane.b32.xlu0 %v474, 80
    %v937 = vpop.permute.xlu0 %936
    %938 = vrot.lane.b32.xlu0 %v477, 80
    %v939 = vpop.permute.xlu0 %938
    %940 = vrot.lane.b32.xlu0 %v480, 80
    %v941 = vpop.permute.xlu0 %940
    %942 = vrot.lane.b32.xlu0 %v483, 80
    %v943 = vpop.permute.xlu0 %942
    %944 = vrot.lane.b32.xlu0 %v486, 80
    %v945 = vpop.permute.xlu0 %944
    %946 = vrot.lane.b32.xlu0 %v489, 80
    %v947 = vpop.permute.xlu0 %946
    %948 = vrot.lane.b32.xlu0 %v492, 80
    %v949 = vpop.permute.xlu0 %948
    %950 = vrot.lane.b32.xlu0 %v495, 80
    %v951 = vpop.permute.xlu0 %950
    %952 = vrot.lane.b32.xlu0 %v498, 80
    %v953 = vpop.permute.xlu0 %952
    %954 = vrot.lane.b32.xlu0 %v501, 80
    %v955 = vpop.permute.xlu0 %954
    %956 = vrot.lane.b32.xlu0 %v504, 80
    %v957 = vpop.permute.xlu0 %956
    %958 = vrot.lane.b32.xlu0 %v507, 80
    %v959 = vpop.permute.xlu0 %958
    %960 = vrot.lane.b32.xlu0 %v510, 80
    %v961 = vpop.permute.xlu0 %960
    %962 = vrot.lane.b32.xlu0 %v513, 80
    %v963 = vpop.permute.xlu0 %962
    %964 = vrot.lane.b32.xlu0 %v516, 80
    %v965 = vpop.permute.xlu0 %964
    %v966 = vld [vmem:[%s0] sm:$0xff]
    %v967 = vld [vmem:[%s0 + $0x8] sm:$0xff]
    %v968 = vld [vmem:[%s0 + $0x10] sm:$0xff]
    %v969 = vld [vmem:[%s0 + $0x18] sm:$0xff]
    %v970 = vld [vmem:[%s0 + $0x20] sm:$0xff]
    %v971 = vld [vmem:[%s0 + $0x28] sm:$0xff]
    %v972 = vld [vmem:[%s0 + $0x30] sm:$0xff]
    %v973 = vld [vmem:[%s0 + $0x38] sm:$0xff]
    %v974 = vld [vmem:[%s0 + $0x40] sm:$0xff]
    %v975 = vld [vmem:[%s0 + $0x48] sm:$0xff]
    %v976 = vld [vmem:[%s0 + $0x50] sm:$0xff]
    %v977 = vld [vmem:[%s0 + $0x58] sm:$0xff]
    %v978 = vld [vmem:[%s0 + $0x60] sm:$0xff]
    %v979 = vld [vmem:[%s0 + $0x68] sm:$0xff]
    %v980 = vld [vmem:[%s0 + $0x70] sm:$0xff]
    %v981 = vld [vmem:[%s0 + $0x78] sm:$0xff]
    %v982 = vld [vmem:[%s0 + $0x80] sm:$0xff]
    %v983 = vld [vmem:[%s0 + $0x88] sm:$0xff]
    %v984 = vld [vmem:[%s0 + $0x90] sm:$0xff]
    %v985 = vld [vmem:[%s0 + $0x98] sm:$0xff]
    %v986 = vld [vmem:[%s0 + $0xa0] sm:$0xff]
    %v987 = vld [vmem:[%s0 + $0xa8] sm:$0xff]
    %v988 = vld [vmem:[%s0 + $0xb0] sm:$0xff]
    %v989 = vld [vmem:[%s0 + $0xb8] sm:$0xff]
    %v990 = vld [vmem:[%s0 + $0xc0] sm:$0xff]
    %v991 = vld [vmem:[%s0 + $0xc8] sm:$0xff]
    %v992 = vld [vmem:[%s0 + $0xd0] sm:$0xff]
    %v993 = vld [vmem:[%s0 + $0xd8] sm:$0xff]
    %v994 = vld [vmem:[%s0 + $0xe0] sm:$0xff]
    %v995 = vld [vmem:[%s0 + $0xe8] sm:$0xff]
    %v996 = vld [vmem:[%s0 + $0xf0] sm:$0xff]
    %v997 = vld [vmem:[%s0 + $0xf8] sm:$0xff]
    %vm998 = vcmask 130048
    %v1000 = vsel %vm998, %v966, 0
    %v1002 = vsel %vm998, %v327, 0
    %v1004 = vsel %vm998, %v330, 0
    %v1006 = vsel %vm998, %v333, 0
    %v1008 = vsel %vm998, %v336, 0
    %v1010 = vsel %vm998, %v339, 0
    %v1012 = vsel %vm998, %v342, 0
    %v1014 = vsel %vm998, %v345, 0
    %v1016 = vsel %vm998, %v348, 0
    %1018 = vmatpush.xpose.msra.mxu0 0.0
    %1019 = vmatpush.xpose.msra.mxu0 0.0
    %1020 = vmatpush.xpose.msra.mxu0 0.0
    %1021 = vmatpush.xpose.msra.mxu0 0.0
    %1022 = vmatpush.xpose.msra.mxu0 0.0
    %1023 = vmatpush.xpose.msra.mxu0 0.0
    %1024 = vmatpush.xpose.msra.mxu0 0.0
    %1025 = vmatpush.xpose.msra.mxu0 0.0
    %1026 = vmatpush.xpose.msra.mxu0 %v1016
    %1027 = vmatpush.xpose.msra.mxu0 %v1014
    %1028 = vmatpush.xpose.msra.mxu0 %v1012
    %1029 = vmatpush.xpose.msra.mxu0 %v1010
    %1030 = vmatpush.xpose.msra.mxu0 %v1008
    %1031 = vmatpush.xpose.msra.mxu0 %v1006
    %1032 = vmatpush.xpose.msra.mxu0 %v1004
    %1033 = vmatpush.xpose.msra.mxu0 %v1002
    %1034 = vmatmul.f32.gmra.mxu0 %v1000
    %v1035 = vpop.f32.mrf.mxu0
    %v1036 = vadd.f32 0.0, %v1035
    %1037 = vdwg.mxu0
    %v1039 = vsel %vm998, %v967, 0
    %v1041 = vsel %vm998, %v351, 0
    %v1043 = vsel %vm998, %v354, 0
    %v1045 = vsel %vm998, %v357, 0
    %v1047 = vsel %vm998, %v360, 0
    %v1049 = vsel %vm998, %v363, 0
    %v1051 = vsel %vm998, %v366, 0
    %v1053 = vsel %vm998, %v369, 0
    %v1055 = vsel %vm998, %v372, 0
    %1057 = vmatpush.xpose.msra.mxu0 0.0
    %1058 = vmatpush.xpose.msra.mxu0 0.0
    %1059 = vmatpush.xpose.msra.mxu0 0.0
    %1060 = vmatpush.xpose.msra.mxu0 0.0
    %1061 = vmatpush.xpose.msra.mxu0 0.0
    %1062 = vmatpush.xpose.msra.mxu0 0.0
    %1063 = vmatpush.xpose.msra.mxu0 0.0
    %1064 = vmatpush.xpose.msra.mxu0 0.0
    %1065 = vmatpush.xpose.msra.mxu0 %v1055
    %1066 = vmatpush.xpose.msra.mxu0 %v1053
    %1067 = vmatpush.xpose.msra.mxu0 %v1051
    %1068 = vmatpush.xpose.msra.mxu0 %v1049
    %1069 = vmatpush.xpose.msra.mxu0 %v1047
    %1070 = vmatpush.xpose.msra.mxu0 %v1045
    %1071 = vmatpush.xpose.msra.mxu0 %v1043
    %1072 = vmatpush.xpose.msra.mxu0 %v1041
    %1073 = vmatmul.f32.gmra.mxu0 %v1039
    %v1074 = vpop.f32.mrf.mxu0
    %v1075 = vadd.f32 0.0, %v1074
    %1076 = vdwg.mxu0
    %v1078 = vsel %vm998, %v968, 0
    %v1080 = vsel %vm998, %v375, 0
    %v1082 = vsel %vm998, %v378, 0
    %v1084 = vsel %vm998, %v381, 0
    %v1086 = vsel %vm998, %v384, 0
    %v1088 = vsel %vm998, %v387, 0
    %v1090 = vsel %vm998, %v390, 0
    %v1092 = vsel %vm998, %v393, 0
    %v1094 = vsel %vm998, %v396, 0
    %1096 = vmatpush.xpose.msra.mxu0 0.0
    %1097 = vmatpush.xpose.msra.mxu0 0.0
    %1098 = vmatpush.xpose.msra.mxu0 0.0
    %1099 = vmatpush.xpose.msra.mxu0 0.0
    %1100 = vmatpush.xpose.msra.mxu0 0.0
    %1101 = vmatpush.xpose.msra.mxu0 0.0
    %1102 = vmatpush.xpose.msra.mxu0 0.0
    %1103 = vmatpush.xpose.msra.mxu0 0.0
    %1104 = vmatpush.xpose.msra.mxu0 %v1094
    %1105 = vmatpush.xpose.msra.mxu0 %v1092
    %1106 = vmatpush.xpose.msra.mxu0 %v1090
    %1107 = vmatpush.xpose.msra.mxu0 %v1088
    %1108 = vmatpush.xpose.msra.mxu0 %v1086
    %1109 = vmatpush.xpose.msra.mxu0 %v1084
    %1110 = vmatpush.xpose.msra.mxu0 %v1082
    %1111 = vmatpush.xpose.msra.mxu0 %v1080
    %1112 = vmatmul.f32.gmra.mxu0 %v1078
    %v1113 = vpop.f32.mrf.mxu0
    %v1114 = vadd.f32 0.0, %v1113
    %1115 = vdwg.mxu0
    %v1117 = vsel %vm998, %v969, 0
    %v1119 = vsel %vm998, %v399, 0
    %v1121 = vsel %vm998, %v402, 0
    %v1123 = vsel %vm998, %v405, 0
    %v1125 = vsel %vm998, %v408, 0
    %v1127 = vsel %vm998, %v411, 0
    %v1129 = vsel %vm998, %v414, 0
    %v1131 = vsel %vm998, %v417, 0
    %v1133 = vsel %vm998, %v420, 0
    %1135 = vmatpush.xpose.msra.mxu0 0.0
    %1136 = vmatpush.xpose.msra.mxu0 0.0
    %1137 = vmatpush.xpose.msra.mxu0 0.0
    %1138 = vmatpush.xpose.msra.mxu0 0.0
    %1139 = vmatpush.xpose.msra.mxu0 0.0
    %1140 = vmatpush.xpose.msra.mxu0 0.0
    %1141 = vmatpush.xpose.msra.mxu0 0.0
    %1142 = vmatpush.xpose.msra.mxu0 0.0
    %1143 = vmatpush.xpose.msra.mxu0 %v1133
    %1144 = vmatpush.xpose.msra.mxu0 %v1131
    %1145 = vmatpush.xpose.msra.mxu0 %v1129
    %1146 = vmatpush.xpose.msra.mxu0 %v1127
    %1147 = vmatpush.xpose.msra.mxu0 %v1125
    %1148 = vmatpush.xpose.msra.mxu0 %v1123
    %1149 = vmatpush.xpose.msra.mxu0 %v1121
    %1150 = vmatpush.xpose.msra.mxu0 %v1119
    %1151 = vmatmul.f32.gmra.mxu0 %v1117
    %v1152 = vpop.f32.mrf.mxu0
    %v1153 = vadd.f32 0.0, %v1152
    %1154 = vdwg.mxu0
    %v1156 = vsel %vm998, %v970, 0
    %v1158 = vsel %vm998, %v423, 0
    %v1160 = vsel %vm998, %v426, 0
    %v1162 = vsel %vm998, %v429, 0
    %v1164 = vsel %vm998, %v432, 0
    %v1166 = vsel %vm998, %v435, 0
    %v1168 = vsel %vm998, %v438, 0
    %v1170 = vsel %vm998, %v441, 0
    %v1172 = vsel %vm998, %v444, 0
    %1174 = vmatpush.xpose.msra.mxu0 0.0
    %1175 = vmatpush.xpose.msra.mxu0 0.0
    %1176 = vmatpush.xpose.msra.mxu0 0.0
    %1177 = vmatpush.xpose.msra.mxu0 0.0
    %1178 = vmatpush.xpose.msra.mxu0 0.0
    %1179 = vmatpush.xpose.msra.mxu0 0.0
    %1180 = vmatpush.xpose.msra.mxu0 0.0
    %1181 = vmatpush.xpose.msra.mxu0 0.0
    %1182 = vmatpush.xpose.msra.mxu0 %v1172
    %1183 = vmatpush.xpose.msra.mxu0 %v1170
    %1184 = vmatpush.xpose.msra.mxu0 %v1168
    %1185 = vmatpush.xpose.msra.mxu0 %v1166
    %1186 = vmatpush.xpose.msra.mxu0 %v1164
    %1187 = vmatpush.xpose.msra.mxu0 %v1162
    %1188 = vmatpush.xpose.msra.mxu0 %v1160
    %1189 = vmatpush.xpose.msra.mxu0 %v1158
    %1190 = vmatmul.f32.gmra.mxu0 %v1156
    %v1191 = vpop.f32.mrf.mxu0
    %v1192 = vadd.f32 0.0, %v1191
    %1193 = vdwg.mxu0
    %v1195 = vsel %vm998, %v971, 0
    %v1197 = vsel %vm998, %v447, 0
    %v1199 = vsel %vm998, %v450, 0
    %v1201 = vsel %vm998, %v453, 0
    %v1203 = vsel %vm998, %v456, 0
    %v1205 = vsel %vm998, %v459, 0
    %v1207 = vsel %vm998, %v462, 0
    %v1209 = vsel %vm998, %v465, 0
    %v1211 = vsel %vm998, %v468, 0
    %1213 = vmatpush.xpose.msra.mxu0 0.0
    %1214 = vmatpush.xpose.msra.mxu0 0.0
    %1215 = vmatpush.xpose.msra.mxu0 0.0
    %1216 = vmatpush.xpose.msra.mxu0 0.0
    %1217 = vmatpush.xpose.msra.mxu0 0.0
    %1218 = vmatpush.xpose.msra.mxu0 0.0
    %1219 = vmatpush.xpose.msra.mxu0 0.0
    %1220 = vmatpush.xpose.msra.mxu0 0.0
    %1221 = vmatpush.xpose.msra.mxu0 %v1211
    %1222 = vmatpush.xpose.msra.mxu0 %v1209
    %1223 = vmatpush.xpose.msra.mxu0 %v1207
    %1224 = vmatpush.xpose.msra.mxu0 %v1205
    %1225 = vmatpush.xpose.msra.mxu0 %v1203
    %1226 = vmatpush.xpose.msra.mxu0 %v1201
    %1227 = vmatpush.xpose.msra.mxu0 %v1199
    %1228 = vmatpush.xpose.msra.mxu0 %v1197
    %1229 = vmatmul.f32.gmra.mxu0 %v1195
    %v1230 = vpop.f32.mrf.mxu0
    %v1231 = vadd.f32 0.0, %v1230
    %1232 = vdwg.mxu0
    %v1234 = vsel %vm998, %v972, 0
    %v1236 = vsel %vm998, %v471, 0
    %v1238 = vsel %vm998, %v474, 0
    %v1240 = vsel %vm998, %v477, 0
    %v1242 = vsel %vm998, %v480, 0
    %v1244 = vsel %vm998, %v483, 0
    %v1246 = vsel %vm998, %v486, 0
    %v1248 = vsel %vm998, %v489, 0
    %v1250 = vsel %vm998, %v492, 0
    %1252 = vmatpush.xpose.msra.mxu0 0.0
    %1253 = vmatpush.xpose.msra.mxu0 0.0
    %1254 = vmatpush.xpose.msra.mxu0 0.0
    %1255 = vmatpush.xpose.msra.mxu0 0.0
    %1256 = vmatpush.xpose.msra.mxu0 0.0
    %1257 = vmatpush.xpose.msra.mxu0 0.0
    %1258 = vmatpush.xpose.msra.mxu0 0.0
    %1259 = vmatpush.xpose.msra.mxu0 0.0
    %1260 = vmatpush.xpose.msra.mxu0 %v1250
    %1261 = vmatpush.xpose.msra.mxu0 %v1248
    %1262 = vmatpush.xpose.msra.mxu0 %v1246
    %1263 = vmatpush.xpose.msra.mxu0 %v1244
    %1264 = vmatpush.xpose.msra.mxu0 %v1242
    %1265 = vmatpush.xpose.msra.mxu0 %v1240
    %1266 = vmatpush.xpose.msra.mxu0 %v1238
    %1267 = vmatpush.xpose.msra.mxu0 %v1236
    %1268 = vmatmul.f32.gmra.mxu0 %v1234
    %v1269 = vpop.f32.mrf.mxu0
    %v1270 = vadd.f32 0.0, %v1269
    %1271 = vdwg.mxu0
    %v1273 = vsel %vm998, %v973, 0
    %v1275 = vsel %vm998, %v495, 0
    %v1277 = vsel %vm998, %v498, 0
    %v1279 = vsel %vm998, %v501, 0
    %v1281 = vsel %vm998, %v504, 0
    %v1283 = vsel %vm998, %v507, 0
    %v1285 = vsel %vm998, %v510, 0
    %v1287 = vsel %vm998, %v513, 0
    %v1289 = vsel %vm998, %v516, 0
    %1291 = vmatpush.xpose.msra.mxu0 0.0
    %1292 = vmatpush.xpose.msra.mxu0 0.0
    %1293 = vmatpush.xpose.msra.mxu0 0.0
    %1294 = vmatpush.xpose.msra.mxu0 0.0
    %1295 = vmatpush.xpose.msra.mxu0 0.0
    %1296 = vmatpush.xpose.msra.mxu0 0.0
    %1297 = vmatpush.xpose.msra.mxu0 0.0
    %1298 = vmatpush.xpose.msra.mxu0 0.0
    %1299 = vmatpush.xpose.msra.mxu0 %v1289
    %1300 = vmatpush.xpose.msra.mxu0 %v1287
    %1301 = vmatpush.xpose.msra.mxu0 %v1285
    %1302 = vmatpush.xpose.msra.mxu0 %v1283
    %1303 = vmatpush.xpose.msra.mxu0 %v1281
    %1304 = vmatpush.xpose.msra.mxu0 %v1279
    %1305 = vmatpush.xpose.msra.mxu0 %v1277
    %1306 = vmatpush.xpose.msra.mxu0 %v1275
    %1307 = vmatmul.f32.gmra.mxu0 %v1273
    %v1308 = vpop.f32.mrf.mxu0
    %v1309 = vadd.f32 0.0, %v1308
    %1310 = vdwg.mxu0
    %v1312 = vsel %vm998, %v974, 0
    %v1314 = vsel %vm998, %v583, 0
    %v1316 = vsel %vm998, %v585, 0
    %v1318 = vsel %vm998, %v587, 0
    %v1320 = vsel %vm998, %v589, 0
    %v1322 = vsel %vm998, %v591, 0
    %v1324 = vsel %vm998, %v593, 0
    %v1326 = vsel %vm998, %v595, 0
    %v1328 = vsel %vm998, %v597, 0
    %1330 = vmatpush.xpose.msra.mxu0 0.0
    %1331 = vmatpush.xpose.msra.mxu0 0.0
    %1332 = vmatpush.xpose.msra.mxu0 0.0
    %1333 = vmatpush.xpose.msra.mxu0 0.0
    %1334 = vmatpush.xpose.msra.mxu0 0.0
    %1335 = vmatpush.xpose.msra.mxu0 0.0
    %1336 = vmatpush.xpose.msra.mxu0 0.0
    %1337 = vmatpush.xpose.msra.mxu0 0.0
    %1338 = vmatpush.xpose.msra.mxu0 %v1328
    %1339 = vmatpush.xpose.msra.mxu0 %v1326
    %1340 = vmatpush.xpose.msra.mxu0 %v1324
    %1341 = vmatpush.xpose.msra.mxu0 %v1322
    %1342 = vmatpush.xpose.msra.mxu0 %v1320
    %1343 = vmatpush.xpose.msra.mxu0 %v1318
    %1344 = vmatpush.xpose.msra.mxu0 %v1316
    %1345 = vmatpush.xpose.msra.mxu0 %v1314
    %1346 = vmatmul.f32.gmra.mxu0 %v1312
    %v1347 = vpop.f32.mrf.mxu0
    %v1348 = vadd.f32 0.0, %v1347
    %1349 = vdwg.mxu0
    %v1351 = vsel %vm998, %v975, 0
    %v1353 = vsel %vm998, %v599, 0
    %v1355 = vsel %vm998, %v601, 0
    %v1357 = vsel %vm998, %v603, 0
    %v1359 = vsel %vm998, %v605, 0
    %v1361 = vsel %vm998, %v607, 0
    %v1363 = vsel %vm998, %v609, 0
    %v1365 = vsel %vm998, %v611, 0
    %v1367 = vsel %vm998, %v613, 0
    %1369 = vmatpush.xpose.msra.mxu0 0.0
    %1370 = vmatpush.xpose.msra.mxu0 0.0
    %1371 = vmatpush.xpose.msra.mxu0 0.0
    %1372 = vmatpush.xpose.msra.mxu0 0.0
    %1373 = vmatpush.xpose.msra.mxu0 0.0
    %1374 = vmatpush.xpose.msra.mxu0 0.0
    %1375 = vmatpush.xpose.msra.mxu0 0.0
    %1376 = vmatpush.xpose.msra.mxu0 0.0
    %1377 = vmatpush.xpose.msra.mxu0 %v1367
    %1378 = vmatpush.xpose.msra.mxu0 %v1365
    %1379 = vmatpush.xpose.msra.mxu0 %v1363
    %1380 = vmatpush.xpose.msra.mxu0 %v1361
    %1381 = vmatpush.xpose.msra.mxu0 %v1359
    %1382 = vmatpush.xpose.msra.mxu0 %v1357
    %1383 = vmatpush.xpose.msra.mxu0 %v1355
    %1384 = vmatpush.xpose.msra.mxu0 %v1353
    %1385 = vmatmul.f32.gmra.mxu0 %v1351
    %v1386 = vpop.f32.mrf.mxu0
    %v1387 = vadd.f32 0.0, %v1386
    %1388 = vdwg.mxu0
    %v1390 = vsel %vm998, %v976, 0
    %v1392 = vsel %vm998, %v615, 0
    %v1394 = vsel %vm998, %v617, 0
    %v1396 = vsel %vm998, %v619, 0
    %v1398 = vsel %vm998, %v621, 0
    %v1400 = vsel %vm998, %v623, 0
    %v1402 = vsel %vm998, %v625, 0
    %v1404 = vsel %vm998, %v627, 0
    %v1406 = vsel %vm998, %v629, 0
    %1408 = vmatpush.xpose.msra.mxu0 0.0
    %1409 = vmatpush.xpose.msra.mxu0 0.0
    %1410 = vmatpush.xpose.msra.mxu0 0.0
    %1411 = vmatpush.xpose.msra.mxu0 0.0
    %1412 = vmatpush.xpose.msra.mxu0 0.0
    %1413 = vmatpush.xpose.msra.mxu0 0.0
    %1414 = vmatpush.xpose.msra.mxu0 0.0
    %1415 = vmatpush.xpose.msra.mxu0 0.0
    %1416 = vmatpush.xpose.msra.mxu0 %v1406
    %1417 = vmatpush.xpose.msra.mxu0 %v1404
    %1418 = vmatpush.xpose.msra.mxu0 %v1402
    %1419 = vmatpush.xpose.msra.mxu0 %v1400
    %1420 = vmatpush.xpose.msra.mxu0 %v1398
    %1421 = vmatpush.xpose.msra.mxu0 %v1396
    %1422 = vmatpush.xpose.msra.mxu0 %v1394
    %1423 = vmatpush.xpose.msra.mxu0 %v1392
    %1424 = vmatmul.f32.gmra.mxu0 %v1390
    %v1425 = vpop.f32.mrf.mxu0
    %v1426 = vadd.f32 0.0, %v1425
    %1427 = vdwg.mxu0
    %v1429 = vsel %vm998, %v977, 0
    %v1431 = vsel %vm998, %v631, 0
    %v1433 = vsel %vm998, %v633, 0
    %v1435 = vsel %vm998, %v635, 0
    %v1437 = vsel %vm998, %v637, 0
    %v1439 = vsel %vm998, %v639, 0
    %v1441 = vsel %vm998, %v641, 0
    %v1443 = vsel %vm998, %v643, 0
    %v1445 = vsel %vm998, %v645, 0
    %1447 = vmatpush.xpose.msra.mxu0 0.0
    %1448 = vmatpush.xpose.msra.mxu0 0.0
    %1449 = vmatpush.xpose.msra.mxu0 0.0
    %1450 = vmatpush.xpose.msra.mxu0 0.0
    %1451 = vmatpush.xpose.msra.mxu0 0.0
    %1452 = vmatpush.xpose.msra.mxu0 0.0
    %1453 = vmatpush.xpose.msra.mxu0 0.0
    %1454 = vmatpush.xpose.msra.mxu0 0.0
    %1455 = vmatpush.xpose.msra.mxu0 %v1445
    %1456 = vmatpush.xpose.msra.mxu0 %v1443
    %1457 = vmatpush.xpose.msra.mxu0 %v1441
    %1458 = vmatpush.xpose.msra.mxu0 %v1439
    %1459 = vmatpush.xpose.msra.mxu0 %v1437
    %1460 = vmatpush.xpose.msra.mxu0 %v1435
    %1461 = vmatpush.xpose.msra.mxu0 %v1433
    %1462 = vmatpush.xpose.msra.mxu0 %v1431
    %1463 = vmatmul.f32.gmra.mxu0 %v1429
    %v1464 = vpop.f32.mrf.mxu0
    %v1465 = vadd.f32 0.0, %v1464
    %1466 = vdwg.mxu0
    %v1468 = vsel %vm998, %v978, 0
    %v1470 = vsel %vm998, %v647, 0
    %v1472 = vsel %vm998, %v649, 0
    %v1474 = vsel %vm998, %v651, 0
    %v1476 = vsel %vm998, %v653, 0
    %v1478 = vsel %vm998, %v655, 0
    %v1480 = vsel %vm998, %v657, 0
    %v1482 = vsel %vm998, %v659, 0
    %v1484 = vsel %vm998, %v661, 0
    %1486 = vmatpush.xpose.msra.mxu0 0.0
    %1487 = vmatpush.xpose.msra.mxu0 0.0
    %1488 = vmatpush.xpose.msra.mxu0 0.0
    %1489 = vmatpush.xpose.msra.mxu0 0.0
    %1490 = vmatpush.xpose.msra.mxu0 0.0
    %1491 = vmatpush.xpose.msra.mxu0 0.0
    %1492 = vmatpush.xpose.msra.mxu0 0.0
    %1493 = vmatpush.xpose.msra.mxu0 0.0
    %1494 = vmatpush.xpose.msra.mxu0 %v1484
    %1495 = vmatpush.xpose.msra.mxu0 %v1482
    %1496 = vmatpush.xpose.msra.mxu0 %v1480
    %1497 = vmatpush.xpose.msra.mxu0 %v1478
    %1498 = vmatpush.xpose.msra.mxu0 %v1476
    %1499 = vmatpush.xpose.msra.mxu0 %v1474
    %1500 = vmatpush.xpose.msra.mxu0 %v1472
    %1501 = vmatpush.xpose.msra.mxu0 %v1470
    %1502 = vmatmul.f32.gmra.mxu0 %v1468
    %v1503 = vpop.f32.mrf.mxu0
    %v1504 = vadd.f32 0.0, %v1503
    %1505 = vdwg.mxu0
    %v1507 = vsel %vm998, %v979, 0
    %v1509 = vsel %vm998, %v663, 0
    %v1511 = vsel %vm998, %v665, 0
    %v1513 = vsel %vm998, %v667, 0
    %v1515 = vsel %vm998, %v669, 0
    %v1517 = vsel %vm998, %v671, 0
    %v1519 = vsel %vm998, %v673, 0
    %v1521 = vsel %vm998, %v675, 0
    %v1523 = vsel %vm998, %v677, 0
    %1525 = vmatpush.xpose.msra.mxu0 0.0
    %1526 = vmatpush.xpose.msra.mxu0 0.0
    %1527 = vmatpush.xpose.msra.mxu0 0.0
    %1528 = vmatpush.xpose.msra.mxu0 0.0
    %1529 = vmatpush.xpose.msra.mxu0 0.0
    %1530 = vmatpush.xpose.msra.mxu0 0.0
    %1531 = vmatpush.xpose.msra.mxu0 0.0
    %1532 = vmatpush.xpose.msra.mxu0 0.0
    %1533 = vmatpush.xpose.msra.mxu0 %v1523
    %1534 = vmatpush.xpose.msra.mxu0 %v1521
    %1535 = vmatpush.xpose.msra.mxu0 %v1519
    %1536 = vmatpush.xpose.msra.mxu0 %v1517
    %1537 = vmatpush.xpose.msra.mxu0 %v1515
    %1538 = vmatpush.xpose.msra.mxu0 %v1513
    %1539 = vmatpush.xpose.msra.mxu0 %v1511
    %1540 = vmatpush.xpose.msra.mxu0 %v1509
    %1541 = vmatmul.f32.gmra.mxu0 %v1507
    %v1542 = vpop.f32.mrf.mxu0
    %v1543 = vadd.f32 0.0, %v1542
    %1544 = vdwg.mxu0
    %v1546 = vsel %vm998, %v980, 0
    %v1548 = vsel %vm998, %v679, 0
    %v1550 = vsel %vm998, %v681, 0
    %v1552 = vsel %vm998, %v683, 0
    %v1554 = vsel %vm998, %v685, 0
    %v1556 = vsel %vm998, %v687, 0
    %v1558 = vsel %vm998, %v689, 0
    %v1560 = vsel %vm998, %v691, 0
    %v1562 = vsel %vm998, %v693, 0
    %1564 = vmatpush.xpose.msra.mxu0 0.0
    %1565 = vmatpush.xpose.msra.mxu0 0.0
    %1566 = vmatpush.xpose.msra.mxu0 0.0
    %1567 = vmatpush.xpose.msra.mxu0 0.0
    %1568 = vmatpush.xpose.msra.mxu0 0.0
    %1569 = vmatpush.xpose.msra.mxu0 0.0
    %1570 = vmatpush.xpose.msra.mxu0 0.0
    %1571 = vmatpush.xpose.msra.mxu0 0.0
    %1572 = vmatpush.xpose.msra.mxu0 %v1562
    %1573 = vmatpush.xpose.msra.mxu0 %v1560
    %1574 = vmatpush.xpose.msra.mxu0 %v1558
    %1575 = vmatpush.xpose.msra.mxu0 %v1556
    %1576 = vmatpush.xpose.msra.mxu0 %v1554
    %1577 = vmatpush.xpose.msra.mxu0 %v1552
    %1578 = vmatpush.xpose.msra.mxu0 %v1550
    %1579 = vmatpush.xpose.msra.mxu0 %v1548
    %1580 = vmatmul.f32.gmra.mxu0 %v1546
    %v1581 = vpop.f32.mrf.mxu0
    %v1582 = vadd.f32 0.0, %v1581
    %1583 = vdwg.mxu0
    %v1585 = vsel %vm998, %v981, 0
    %v1587 = vsel %vm998, %v695, 0
    %v1589 = vsel %vm998, %v697, 0
    %v1591 = vsel %vm998, %v699, 0
    %v1593 = vsel %vm998, %v701, 0
    %v1595 = vsel %vm998, %v703, 0
    %v1597 = vsel %vm998, %v705, 0
    %v1599 = vsel %vm998, %v707, 0
    %v1601 = vsel %vm998, %v709, 0
    %1603 = vmatpush.xpose.msra.mxu0 0.0
    %1604 = vmatpush.xpose.msra.mxu0 0.0
    %1605 = vmatpush.xpose.msra.mxu0 0.0
    %1606 = vmatpush.xpose.msra.mxu0 0.0
    %1607 = vmatpush.xpose.msra.mxu0 0.0
    %1608 = vmatpush.xpose.msra.mxu0 0.0
    %1609 = vmatpush.xpose.msra.mxu0 0.0
    %1610 = vmatpush.xpose.msra.mxu0 0.0
    %1611 = vmatpush.xpose.msra.mxu0 %v1601
    %1612 = vmatpush.xpose.msra.mxu0 %v1599
    %1613 = vmatpush.xpose.msra.mxu0 %v1597
    %1614 = vmatpush.xpose.msra.mxu0 %v1595
    %1615 = vmatpush.xpose.msra.mxu0 %v1593
    %1616 = vmatpush.xpose.msra.mxu0 %v1591
    %1617 = vmatpush.xpose.msra.mxu0 %v1589
    %1618 = vmatpush.xpose.msra.mxu0 %v1587
    %1619 = vmatmul.f32.gmra.mxu0 %v1585
    %v1620 = vpop.f32.mrf.mxu0
    %v1621 = vadd.f32 0.0, %v1620
    %1622 = vdwg.mxu0
    %v1624 = vsel %vm998, %v982, 0
    %v1626 = vsel %vm998, %v711, 0
    %v1628 = vsel %vm998, %v713, 0
    %v1630 = vsel %vm998, %v715, 0
    %v1632 = vsel %vm998, %v717, 0
    %v1634 = vsel %vm998, %v719, 0
    %v1636 = vsel %vm998, %v721, 0
    %v1638 = vsel %vm998, %v723, 0
    %v1640 = vsel %vm998, %v725, 0
    %1642 = vmatpush.xpose.msra.mxu0 0.0
    %1643 = vmatpush.xpose.msra.mxu0 0.0
    %1644 = vmatpush.xpose.msra.mxu0 0.0
    %1645 = vmatpush.xpose.msra.mxu0 0.0
    %1646 = vmatpush.xpose.msra.mxu0 0.0
    %1647 = vmatpush.xpose.msra.mxu0 0.0
    %1648 = vmatpush.xpose.msra.mxu0 0.0
    %1649 = vmatpush.xpose.msra.mxu0 0.0
    %1650 = vmatpush.xpose.msra.mxu0 %v1640
    %1651 = vmatpush.xpose.msra.mxu0 %v1638
    %1652 = vmatpush.xpose.msra.mxu0 %v1636
    %1653 = vmatpush.xpose.msra.mxu0 %v1634
    %1654 = vmatpush.xpose.msra.mxu0 %v1632
    %1655 = vmatpush.xpose.msra.mxu0 %v1630
    %1656 = vmatpush.xpose.msra.mxu0 %v1628
    %1657 = vmatpush.xpose.msra.mxu0 %v1626
    %1658 = vmatmul.f32.gmra.mxu0 %v1624
    %v1659 = vpop.f32.mrf.mxu0
    %v1660 = vadd.f32 0.0, %v1659
    %1661 = vdwg.mxu0
    %v1663 = vsel %vm998, %v983, 0
    %v1665 = vsel %vm998, %v727, 0
    %v1667 = vsel %vm998, %v729, 0
    %v1669 = vsel %vm998, %v731, 0
    %v1671 = vsel %vm998, %v733, 0
    %v1673 = vsel %vm998, %v735, 0
    %v1675 = vsel %vm998, %v737, 0
    %v1677 = vsel %vm998, %v739, 0
    %v1679 = vsel %vm998, %v741, 0
    %1681 = vmatpush.xpose.msra.mxu0 0.0
    %1682 = vmatpush.xpose.msra.mxu0 0.0
    %1683 = vmatpush.xpose.msra.mxu0 0.0
    %1684 = vmatpush.xpose.msra.mxu0 0.0
    %1685 = vmatpush.xpose.msra.mxu0 0.0
    %1686 = vmatpush.xpose.msra.mxu0 0.0
    %1687 = vmatpush.xpose.msra.mxu0 0.0
    %1688 = vmatpush.xpose.msra.mxu0 0.0
    %1689 = vmatpush.xpose.msra.mxu0 %v1679
    %1690 = vmatpush.xpose.msra.mxu0 %v1677
    %1691 = vmatpush.xpose.msra.mxu0 %v1675
    %1692 = vmatpush.xpose.msra.mxu0 %v1673
    %1693 = vmatpush.xpose.msra.mxu0 %v1671
    %1694 = vmatpush.xpose.msra.mxu0 %v1669
    %1695 = vmatpush.xpose.msra.mxu0 %v1667
    %1696 = vmatpush.xpose.msra.mxu0 %v1665
    %1697 = vmatmul.f32.gmra.mxu0 %v1663
    %v1698 = vpop.f32.mrf.mxu0
    %v1699 = vadd.f32 0.0, %v1698
    %1700 = vdwg.mxu0
    %v1702 = vsel %vm998, %v984, 0
    %v1704 = vsel %vm998, %v743, 0
    %v1706 = vsel %vm998, %v745, 0
    %v1708 = vsel %vm998, %v747, 0
    %v1710 = vsel %vm998, %v749, 0
    %v1712 = vsel %vm998, %v751, 0
    %v1714 = vsel %vm998, %v753, 0
    %v1716 = vsel %vm998, %v755, 0
    %v1718 = vsel %vm998, %v757, 0
    %1720 = vmatpush.xpose.msra.mxu0 0.0
    %1721 = vmatpush.xpose.msra.mxu0 0.0
    %1722 = vmatpush.xpose.msra.mxu0 0.0
    %1723 = vmatpush.xpose.msra.mxu0 0.0
    %1724 = vmatpush.xpose.msra.mxu0 0.0
    %1725 = vmatpush.xpose.msra.mxu0 0.0
    %1726 = vmatpush.xpose.msra.mxu0 0.0
    %1727 = vmatpush.xpose.msra.mxu0 0.0
    %1728 = vmatpush.xpose.msra.mxu0 %v1718
    %1729 = vmatpush.xpose.msra.mxu0 %v1716
    %1730 = vmatpush.xpose.msra.mxu0 %v1714
    %1731 = vmatpush.xpose.msra.mxu0 %v1712
    %1732 = vmatpush.xpose.msra.mxu0 %v1710
    %1733 = vmatpush.xpose.msra.mxu0 %v1708
    %1734 = vmatpush.xpose.msra.mxu0 %v1706
    %1735 = vmatpush.xpose.msra.mxu0 %v1704
    %1736 = vmatmul.f32.gmra.mxu0 %v1702
    %v1737 = vpop.f32.mrf.mxu0
    %v1738 = vadd.f32 0.0, %v1737
    %1739 = vdwg.mxu0
    %v1741 = vsel %vm998, %v985, 0
    %v1743 = vsel %vm998, %v759, 0
    %v1745 = vsel %vm998, %v761, 0
    %v1747 = vsel %vm998, %v763, 0
    %v1749 = vsel %vm998, %v765, 0
    %v1751 = vsel %vm998, %v767, 0
    %v1753 = vsel %vm998, %v769, 0
    %v1755 = vsel %vm998, %v771, 0
    %v1757 = vsel %vm998, %v773, 0
    %1759 = vmatpush.xpose.msra.mxu0 0.0
    %1760 = vmatpush.xpose.msra.mxu0 0.0
    %1761 = vmatpush.xpose.msra.mxu0 0.0
    %1762 = vmatpush.xpose.msra.mxu0 0.0
    %1763 = vmatpush.xpose.msra.mxu0 0.0
    %1764 = vmatpush.xpose.msra.mxu0 0.0
    %1765 = vmatpush.xpose.msra.mxu0 0.0
    %1766 = vmatpush.xpose.msra.mxu0 0.0
    %1767 = vmatpush.xpose.msra.mxu0 %v1757
    %1768 = vmatpush.xpose.msra.mxu0 %v1755
    %1769 = vmatpush.xpose.msra.mxu0 %v1753
    %1770 = vmatpush.xpose.msra.mxu0 %v1751
    %1771 = vmatpush.xpose.msra.mxu0 %v1749
    %1772 = vmatpush.xpose.msra.mxu0 %v1747
    %1773 = vmatpush.xpose.msra.mxu0 %v1745
    %1774 = vmatpush.xpose.msra.mxu0 %v1743
    %1775 = vmatmul.f32.gmra.mxu0 %v1741
    %v1776 = vpop.f32.mrf.mxu0
    %v1777 = vadd.f32 0.0, %v1776
    %1778 = vdwg.mxu0
    %v1780 = vsel %vm998, %v986, 0
    %v1782 = vsel %vm998, %v775, 0
    %v1784 = vsel %vm998, %v777, 0
    %v1786 = vsel %vm998, %v779, 0
    %v1788 = vsel %vm998, %v781, 0
    %v1790 = vsel %vm998, %v783, 0
    %v1792 = vsel %vm998, %v785, 0
    %v1794 = vsel %vm998, %v787, 0
    %v1796 = vsel %vm998, %v789, 0
    %1798 = vmatpush.xpose.msra.mxu0 0.0
    %1799 = vmatpush.xpose.msra.mxu0 0.0
    %1800 = vmatpush.xpose.msra.mxu0 0.0
    %1801 = vmatpush.xpose.msra.mxu0 0.0
    %1802 = vmatpush.xpose.msra.mxu0 0.0
    %1803 = vmatpush.xpose.msra.mxu0 0.0
    %1804 = vmatpush.xpose.msra.mxu0 0.0
    %1805 = vmatpush.xpose.msra.mxu0 0.0
    %1806 = vmatpush.xpose.msra.mxu0 %v1796
    %1807 = vmatpush.xpose.msra.mxu0 %v1794
    %1808 = vmatpush.xpose.msra.mxu0 %v1792
    %1809 = vmatpush.xpose.msra.mxu0 %v1790
    %1810 = vmatpush.xpose.msra.mxu0 %v1788
    %1811 = vmatpush.xpose.msra.mxu0 %v1786
    %1812 = vmatpush.xpose.msra.mxu0 %v1784
    %1813 = vmatpush.xpose.msra.mxu0 %v1782
    %1814 = vmatmul.f32.gmra.mxu0 %v1780
    %v1815 = vpop.f32.mrf.mxu0
    %v1816 = vadd.f32 0.0, %v1815
    %1817 = vdwg.mxu0
    %v1819 = vsel %vm998, %v987, 0
    %v1821 = vsel %vm998, %v791, 0
    %v1823 = vsel %vm998, %v793, 0
    %v1825 = vsel %vm998, %v795, 0
    %v1827 = vsel %vm998, %v797, 0
    %v1829 = vsel %vm998, %v799, 0
    %v1831 = vsel %vm998, %v801, 0
    %v1833 = vsel %vm998, %v803, 0
    %v1835 = vsel %vm998, %v805, 0
    %1837 = vmatpush.xpose.msra.mxu0 0.0
    %1838 = vmatpush.xpose.msra.mxu0 0.0
    %1839 = vmatpush.xpose.msra.mxu0 0.0
    %1840 = vmatpush.xpose.msra.mxu0 0.0
    %1841 = vmatpush.xpose.msra.mxu0 0.0
    %1842 = vmatpush.xpose.msra.mxu0 0.0
    %1843 = vmatpush.xpose.msra.mxu0 0.0
    %1844 = vmatpush.xpose.msra.mxu0 0.0
    %1845 = vmatpush.xpose.msra.mxu0 %v1835
    %1846 = vmatpush.xpose.msra.mxu0 %v1833
    %1847 = vmatpush.xpose.msra.mxu0 %v1831
    %1848 = vmatpush.xpose.msra.mxu0 %v1829
    %1849 = vmatpush.xpose.msra.mxu0 %v1827
    %1850 = vmatpush.xpose.msra.mxu0 %v1825
    %1851 = vmatpush.xpose.msra.mxu0 %v1823
    %1852 = vmatpush.xpose.msra.mxu0 %v1821
    %1853 = vmatmul.f32.gmra.mxu0 %v1819
    %v1854 = vpop.f32.mrf.mxu0
    %v1855 = vadd.f32 0.0, %v1854
    %1856 = vdwg.mxu0
    %v1858 = vsel %vm998, %v988, 0
    %v1860 = vsel %vm998, %v807, 0
    %v1862 = vsel %vm998, %v809, 0
    %v1864 = vsel %vm998, %v811, 0
    %v1866 = vsel %vm998, %v813, 0
    %v1868 = vsel %vm998, %v815, 0
    %v1870 = vsel %vm998, %v817, 0
    %v1872 = vsel %vm998, %v819, 0
    %v1874 = vsel %vm998, %v821, 0
    %1876 = vmatpush.xpose.msra.mxu0 0.0
    %1877 = vmatpush.xpose.msra.mxu0 0.0
    %1878 = vmatpush.xpose.msra.mxu0 0.0
    %1879 = vmatpush.xpose.msra.mxu0 0.0
    %1880 = vmatpush.xpose.msra.mxu0 0.0
    %1881 = vmatpush.xpose.msra.mxu0 0.0
    %1882 = vmatpush.xpose.msra.mxu0 0.0
    %1883 = vmatpush.xpose.msra.mxu0 0.0
    %1884 = vmatpush.xpose.msra.mxu0 %v1874
    %1885 = vmatpush.xpose.msra.mxu0 %v1872
    %1886 = vmatpush.xpose.msra.mxu0 %v1870
    %1887 = vmatpush.xpose.msra.mxu0 %v1868
    %1888 = vmatpush.xpose.msra.mxu0 %v1866
    %1889 = vmatpush.xpose.msra.mxu0 %v1864
    %1890 = vmatpush.xpose.msra.mxu0 %v1862
    %1891 = vmatpush.xpose.msra.mxu0 %v1860
    %1892 = vmatmul.f32.gmra.mxu0 %v1858
    %v1893 = vpop.f32.mrf.mxu0
    %v1894 = vadd.f32 0.0, %v1893
    %1895 = vdwg.mxu0
    %v1897 = vsel %vm998, %v989, 0
    %v1899 = vsel %vm998, %v823, 0
    %v1901 = vsel %vm998, %v825, 0
    %v1903 = vsel %vm998, %v827, 0
    %v1905 = vsel %vm998, %v829, 0
    %v1907 = vsel %vm998, %v831, 0
    %v1909 = vsel %vm998, %v833, 0
    %v1911 = vsel %vm998, %v835, 0
    %v1913 = vsel %vm998, %v837, 0
    %1915 = vmatpush.xpose.msra.mxu0 0.0
    %1916 = vmatpush.xpose.msra.mxu0 0.0
    %1917 = vmatpush.xpose.msra.mxu0 0.0
    %1918 = vmatpush.xpose.msra.mxu0 0.0
    %1919 = vmatpush.xpose.msra.mxu0 0.0
    %1920 = vmatpush.xpose.msra.mxu0 0.0
    %1921 = vmatpush.xpose.msra.mxu0 0.0
    %1922 = vmatpush.xpose.msra.mxu0 0.0
    %1923 = vmatpush.xpose.msra.mxu0 %v1913
    %1924 = vmatpush.xpose.msra.mxu0 %v1911
    %1925 = vmatpush.xpose.msra.mxu0 %v1909
    %1926 = vmatpush.xpose.msra.mxu0 %v1907
    %1927 = vmatpush.xpose.msra.mxu0 %v1905
    %1928 = vmatpush.xpose.msra.mxu0 %v1903
    %1929 = vmatpush.xpose.msra.mxu0 %v1901
    %1930 = vmatpush.xpose.msra.mxu0 %v1899
    %1931 = vmatmul.f32.gmra.mxu0 %v1897
    %v1932 = vpop.f32.mrf.mxu0
    %v1933 = vadd.f32 0.0, %v1932
    %1934 = vdwg.mxu0
    %v1936 = vsel %vm998, %v990, 0
    %v1938 = vsel %vm998, %v839, 0
    %v1940 = vsel %vm998, %v841, 0
    %v1942 = vsel %vm998, %v843, 0
    %v1944 = vsel %vm998, %v845, 0
    %v1946 = vsel %vm998, %v847, 0
    %v1948 = vsel %vm998, %v849, 0
    %v1950 = vsel %vm998, %v851, 0
    %v1952 = vsel %vm998, %v853, 0
    %1954 = vmatpush.xpose.msra.mxu0 0.0
    %1955 = vmatpush.xpose.msra.mxu0 0.0
    %1956 = vmatpush.xpose.msra.mxu0 0.0
    %1957 = vmatpush.xpose.msra.mxu0 0.0
    %1958 = vmatpush.xpose.msra.mxu0 0.0
    %1959 = vmatpush.xpose.msra.mxu0 0.0
    %1960 = vmatpush.xpose.msra.mxu0 0.0
    %1961 = vmatpush.xpose.msra.mxu0 0.0
    %1962 = vmatpush.xpose.msra.mxu0 %v1952
    %1963 = vmatpush.xpose.msra.mxu0 %v1950
    %1964 = vmatpush.xpose.msra.mxu0 %v1948
    %1965 = vmatpush.xpose.msra.mxu0 %v1946
    %1966 = vmatpush.xpose.msra.mxu0 %v1944
    %1967 = vmatpush.xpose.msra.mxu0 %v1942
    %1968 = vmatpush.xpose.msra.mxu0 %v1940
    %1969 = vmatpush.xpose.msra.mxu0 %v1938
    %1970 = vmatmul.f32.gmra.mxu0 %v1936
    %v1971 = vpop.f32.mrf.mxu0
    %v1972 = vadd.f32 0.0, %v1971
    %1973 = vdwg.mxu0
    %v1975 = vsel %vm998, %v991, 0
    %v1977 = vsel %vm998, %v855, 0
    %v1979 = vsel %vm998, %v857, 0
    %v1981 = vsel %vm998, %v859, 0
    %v1983 = vsel %vm998, %v861, 0
    %v1985 = vsel %vm998, %v863, 0
    %v1987 = vsel %vm998, %v865, 0
    %v1989 = vsel %vm998, %v867, 0
    %v1991 = vsel %vm998, %v869, 0
    %1993 = vmatpush.xpose.msra.mxu0 0.0
    %1994 = vmatpush.xpose.msra.mxu0 0.0
    %1995 = vmatpush.xpose.msra.mxu0 0.0
    %1996 = vmatpush.xpose.msra.mxu0 0.0
    %1997 = vmatpush.xpose.msra.mxu0 0.0
    %1998 = vmatpush.xpose.msra.mxu0 0.0
    %1999 = vmatpush.xpose.msra.mxu0 0.0
    %2000 = vmatpush.xpose.msra.mxu0 0.0
    %2001 = vmatpush.xpose.msra.mxu0 %v1991
    %2002 = vmatpush.xpose.msra.mxu0 %v1989
    %2003 = vmatpush.xpose.msra.mxu0 %v1987
    %2004 = vmatpush.xpose.msra.mxu0 %v1985
    %2005 = vmatpush.xpose.msra.mxu0 %v1983
    %2006 = vmatpush.xpose.msra.mxu0 %v1981
    %2007 = vmatpush.xpose.msra.mxu0 %v1979
    %2008 = vmatpush.xpose.msra.mxu0 %v1977
    %2009 = vmatmul.f32.gmra.mxu0 %v1975
    %v2010 = vpop.f32.mrf.mxu0
    %v2011 = vadd.f32 0.0, %v2010
    %2012 = vdwg.mxu0
    %v2014 = vsel %vm998, %v992, 0
    %v2016 = vsel %vm998, %v871, 0
    %v2018 = vsel %vm998, %v873, 0
    %v2020 = vsel %vm998, %v875, 0
    %v2022 = vsel %vm998, %v877, 0
    %v2024 = vsel %vm998, %v879, 0
    %v2026 = vsel %vm998, %v881, 0
    %v2028 = vsel %vm998, %v883, 0
    %v2030 = vsel %vm998, %v885, 0
    %2032 = vmatpush.xpose.msra.mxu0 0.0
    %2033 = vmatpush.xpose.msra.mxu0 0.0
    %2034 = vmatpush.xpose.msra.mxu0 0.0
    %2035 = vmatpush.xpose.msra.mxu0 0.0
    %2036 = vmatpush.xpose.msra.mxu0 0.0
    %2037 = vmatpush.xpose.msra.mxu0 0.0
    %2038 = vmatpush.xpose.msra.mxu0 0.0
    %2039 = vmatpush.xpose.msra.mxu0 0.0
    %2040 = vmatpush.xpose.msra.mxu0 %v2030
    %2041 = vmatpush.xpose.msra.mxu0 %v2028
    %2042 = vmatpush.xpose.msra.mxu0 %v2026
    %2043 = vmatpush.xpose.msra.mxu0 %v2024
    %2044 = vmatpush.xpose.msra.mxu0 %v2022
    %2045 = vmatpush.xpose.msra.mxu0 %v2020
    %2046 = vmatpush.xpose.msra.mxu0 %v2018
    %2047 = vmatpush.xpose.msra.mxu0 %v2016
    %2048 = vmatmul.f32.gmra.mxu0 %v2014
    %v2049 = vpop.f32.mrf.mxu0
    %v2050 = vadd.f32 0.0, %v2049
    %2051 = vdwg.mxu0
    %v2053 = vsel %vm998, %v993, 0
    %v2055 = vsel %vm998, %v887, 0
    %v2057 = vsel %vm998, %v889, 0
    %v2059 = vsel %vm998, %v891, 0
    %v2061 = vsel %vm998, %v893, 0
    %v2063 = vsel %vm998, %v895, 0
    %v2065 = vsel %vm998, %v897, 0
    %v2067 = vsel %vm998, %v899, 0
    %v2069 = vsel %vm998, %v901, 0
    %2071 = vmatpush.xpose.msra.mxu0 0.0
    %2072 = vmatpush.xpose.msra.mxu0 0.0
    %2073 = vmatpush.xpose.msra.mxu0 0.0
    %2074 = vmatpush.xpose.msra.mxu0 0.0
    %2075 = vmatpush.xpose.msra.mxu0 0.0
    %2076 = vmatpush.xpose.msra.mxu0 0.0
    %2077 = vmatpush.xpose.msra.mxu0 0.0
    %2078 = vmatpush.xpose.msra.mxu0 0.0
    %2079 = vmatpush.xpose.msra.mxu0 %v2069
    %2080 = vmatpush.xpose.msra.mxu0 %v2067
    %2081 = vmatpush.xpose.msra.mxu0 %v2065
    %2082 = vmatpush.xpose.msra.mxu0 %v2063
    %2083 = vmatpush.xpose.msra.mxu0 %v2061
    %2084 = vmatpush.xpose.msra.mxu0 %v2059
    %2085 = vmatpush.xpose.msra.mxu0 %v2057
    %2086 = vmatpush.xpose.msra.mxu0 %v2055
    %2087 = vmatmul.f32.gmra.mxu0 %v2053
    %v2088 = vpop.f32.mrf.mxu0
    %v2089 = vadd.f32 0.0, %v2088
    %2090 = vdwg.mxu0
    %v2092 = vsel %vm998, %v994, 0
    %v2094 = vsel %vm998, %v903, 0
    %v2096 = vsel %vm998, %v905, 0
    %v2098 = vsel %vm998, %v907, 0
    %v2100 = vsel %vm998, %v909, 0
    %v2102 = vsel %vm998, %v911, 0
    %v2104 = vsel %vm998, %v913, 0
    %v2106 = vsel %vm998, %v915, 0
    %v2108 = vsel %vm998, %v917, 0
    %2110 = vmatpush.xpose.msra.mxu0 0.0
    %2111 = vmatpush.xpose.msra.mxu0 0.0
    %2112 = vmatpush.xpose.msra.mxu0 0.0
    %2113 = vmatpush.xpose.msra.mxu0 0.0
    %2114 = vmatpush.xpose.msra.mxu0 0.0
    %2115 = vmatpush.xpose.msra.mxu0 0.0
    %2116 = vmatpush.xpose.msra.mxu0 0.0
    %2117 = vmatpush.xpose.msra.mxu0 0.0
    %2118 = vmatpush.xpose.msra.mxu0 %v2108
    %2119 = vmatpush.xpose.msra.mxu0 %v2106
    %2120 = vmatpush.xpose.msra.mxu0 %v2104
    %2121 = vmatpush.xpose.msra.mxu0 %v2102
    %2122 = vmatpush.xpose.msra.mxu0 %v2100
    %2123 = vmatpush.xpose.msra.mxu0 %v2098
    %2124 = vmatpush.xpose.msra.mxu0 %v2096
    %2125 = vmatpush.xpose.msra.mxu0 %v2094
    %2126 = vmatmul.f32.gmra.mxu0 %v2092
    %v2127 = vpop.f32.mrf.mxu0
    %v2128 = vadd.f32 0.0, %v2127
    %2129 = vdwg.mxu0
    %v2131 = vsel %vm998, %v995, 0
    %v2133 = vsel %vm998, %v919, 0
    %v2135 = vsel %vm998, %v921, 0
    %v2137 = vsel %vm998, %v923, 0
    %v2139 = vsel %vm998, %v925, 0
    %v2141 = vsel %vm998, %v927, 0
    %v2143 = vsel %vm998, %v929, 0
    %v2145 = vsel %vm998, %v931, 0
    %v2147 = vsel %vm998, %v933, 0
    %2149 = vmatpush.xpose.msra.mxu0 0.0
    %2150 = vmatpush.xpose.msra.mxu0 0.0
    %2151 = vmatpush.xpose.msra.mxu0 0.0
    %2152 = vmatpush.xpose.msra.mxu0 0.0
    %2153 = vmatpush.xpose.msra.mxu0 0.0
    %2154 = vmatpush.xpose.msra.mxu0 0.0
    %2155 = vmatpush.xpose.msra.mxu0 0.0
    %2156 = vmatpush.xpose.msra.mxu0 0.0
    %2157 = vmatpush.xpose.msra.mxu0 %v2147
    %2158 = vmatpush.xpose.msra.mxu0 %v2145
    %2159 = vmatpush.xpose.msra.mxu0 %v2143
    %2160 = vmatpush.xpose.msra.mxu0 %v2141
    %2161 = vmatpush.xpose.msra.mxu0 %v2139
    %2162 = vmatpush.xpose.msra.mxu0 %v2137
    %2163 = vmatpush.xpose.msra.mxu0 %v2135
    %2164 = vmatpush.xpose.msra.mxu0 %v2133
    %2165 = vmatmul.f32.gmra.mxu0 %v2131
    %v2166 = vpop.f32.mrf.mxu0
    %v2167 = vadd.f32 0.0, %v2166
    %2168 = vdwg.mxu0
    %v2170 = vsel %vm998, %v996, 0
    %v2172 = vsel %vm998, %v935, 0
    %v2174 = vsel %vm998, %v937, 0
    %v2176 = vsel %vm998, %v939, 0
    %v2178 = vsel %vm998, %v941, 0
    %v2180 = vsel %vm998, %v943, 0
    %v2182 = vsel %vm998, %v945, 0
    %v2184 = vsel %vm998, %v947, 0
    %v2186 = vsel %vm998, %v949, 0
    %2188 = vmatpush.xpose.msra.mxu0 0.0
    %2189 = vmatpush.xpose.msra.mxu0 0.0
    %2190 = vmatpush.xpose.msra.mxu0 0.0
    %2191 = vmatpush.xpose.msra.mxu0 0.0
    %2192 = vmatpush.xpose.msra.mxu0 0.0
    %2193 = vmatpush.xpose.msra.mxu0 0.0
    %2194 = vmatpush.xpose.msra.mxu0 0.0
    %2195 = vmatpush.xpose.msra.mxu0 0.0
    %2196 = vmatpush.xpose.msra.mxu0 %v2186
    %2197 = vmatpush.xpose.msra.mxu0 %v2184
    %2198 = vmatpush.xpose.msra.mxu0 %v2182
    %2199 = vmatpush.xpose.msra.mxu0 %v2180
    %2200 = vmatpush.xpose.msra.mxu0 %v2178
    %2201 = vmatpush.xpose.msra.mxu0 %v2176
    %2202 = vmatpush.xpose.msra.mxu0 %v2174
    %2203 = vmatpush.xpose.msra.mxu0 %v2172
    %2204 = vmatmul.f32.gmra.mxu0 %v2170
    %v2205 = vpop.f32.mrf.mxu0
    %v2206 = vadd.f32 0.0, %v2205
    %2207 = vdwg.mxu0
    %v2209 = vsel %vm998, %v997, 0
    %v2211 = vsel %vm998, %v951, 0
    %v2213 = vsel %vm998, %v953, 0
    %v2215 = vsel %vm998, %v955, 0
    %v2217 = vsel %vm998, %v957, 0
    %v2219 = vsel %vm998, %v959, 0
    %v2221 = vsel %vm998, %v961, 0
    %v2223 = vsel %vm998, %v963, 0
    %v2225 = vsel %vm998, %v965, 0
    %2227 = vmatpush.xpose.msra.mxu0 0.0
    %2228 = vmatpush.xpose.msra.mxu0 0.0
    %2229 = vmatpush.xpose.msra.mxu0 0.0
    %2230 = vmatpush.xpose.msra.mxu0 0.0
    %2231 = vmatpush.xpose.msra.mxu0 0.0
    %2232 = vmatpush.xpose.msra.mxu0 0.0
    %2233 = vmatpush.xpose.msra.mxu0 0.0
    %2234 = vmatpush.xpose.msra.mxu0 0.0
    %2235 = vmatpush.xpose.msra.mxu0 %v2225
    %2236 = vmatpush.xpose.msra.mxu0 %v2223
    %2237 = vmatpush.xpose.msra.mxu0 %v2221
    %2238 = vmatpush.xpose.msra.mxu0 %v2219
    %2239 = vmatpush.xpose.msra.mxu0 %v2217
    %2240 = vmatpush.xpose.msra.mxu0 %v2215
    %2241 = vmatpush.xpose.msra.mxu0 %v2213
    %2242 = vmatpush.xpose.msra.mxu0 %v2211
    %2243 = vmatmul.f32.gmra.mxu0 %v2209
    %v2244 = vpop.f32.mrf.mxu0
    %v2245 = vadd.f32 0.0, %v2244
    %2246 = vdwg.mxu0
    %v2247 = vsel %vm116, %v1036, -inf
    %2248 = vmax.xlane.f32.xlu0 %v2247
    %v2249 = vpop.xlane.xlu0 %2248
    %v2250 = vsel %vm116, %v1075, -inf
    %2251 = vmax.xlane.f32.xlu0 %v2250
    %v2252 = vpop.xlane.xlu0 %2251
    %v2253 = vsel %vm116, %v1114, -inf
    %2254 = vmax.xlane.f32.xlu0 %v2253
    %v2255 = vpop.xlane.xlu0 %2254
    %v2256 = vsel %vm116, %v1153, -inf
    %2257 = vmax.xlane.f32.xlu0 %v2256
    %v2258 = vpop.xlane.xlu0 %2257
    %v2259 = vsel %vm116, %v1192, -inf
    %2260 = vmax.xlane.f32.xlu0 %v2259
    %v2261 = vpop.xlane.xlu0 %2260
    %v2262 = vsel %vm116, %v1231, -inf
    %2263 = vmax.xlane.f32.xlu0 %v2262
    %v2264 = vpop.xlane.xlu0 %2263
    %v2265 = vsel %vm116, %v1270, -inf
    %2266 = vmax.xlane.f32.xlu0 %v2265
    %v2267 = vpop.xlane.xlu0 %2266
    %v2268 = vsel %vm116, %v1309, -inf
    %2269 = vmax.xlane.f32.xlu0 %v2268
    %v2270 = vpop.xlane.xlu0 %2269
    %v2271 = vsel %vm116, %v1348, -inf
    %2272 = vmax.xlane.f32.xlu0 %v2271
    %v2273 = vpop.xlane.xlu0 %2272
    %v2274 = vsel %vm116, %v1387, -inf
    %2275 = vmax.xlane.f32.xlu0 %v2274
    %v2276 = vpop.xlane.xlu0 %2275
    %v2277 = vsel %vm116, %v1426, -inf
    %2278 = vmax.xlane.f32.xlu0 %v2277
    %v2279 = vpop.xlane.xlu0 %2278
    %v2280 = vsel %vm116, %v1465, -inf
    %2281 = vmax.xlane.f32.xlu0 %v2280
    %v2282 = vpop.xlane.xlu0 %2281
    %v2283 = vsel %vm116, %v1504, -inf
    %2284 = vmax.xlane.f32.xlu0 %v2283
    %v2285 = vpop.xlane.xlu0 %2284
    %v2286 = vsel %vm116, %v1543, -inf
    %2287 = vmax.xlane.f32.xlu0 %v2286
    %v2288 = vpop.xlane.xlu0 %2287
    %v2289 = vsel %vm116, %v1582, -inf
    %2290 = vmax.xlane.f32.xlu0 %v2289
    %v2291 = vpop.xlane.xlu0 %2290
    %v2292 = vsel %vm116, %v1621, -inf
    %2293 = vmax.xlane.f32.xlu0 %v2292
    %v2294 = vpop.xlane.xlu0 %2293
    %v2295 = vsel %vm116, %v1660, -inf
    %2296 = vmax.xlane.f32.xlu0 %v2295
    %v2297 = vpop.xlane.xlu0 %2296
    %v2298 = vsel %vm116, %v1699, -inf
    %2299 = vmax.xlane.f32.xlu0 %v2298
    %v2300 = vpop.xlane.xlu0 %2299
    %v2301 = vsel %vm116, %v1738, -inf
    %2302 = vmax.xlane.f32.xlu0 %v2301
    %v2303 = vpop.xlane.xlu0 %2302
    %v2304 = vsel %vm116, %v1777, -inf
    %2305 = vmax.xlane.f32.xlu0 %v2304
    %v2306 = vpop.xlane.xlu0 %2305
    %v2307 = vsel %vm116, %v1816, -inf
    %2308 = vmax.xlane.f32.xlu0 %v2307
    %v2309 = vpop.xlane.xlu0 %2308
    %v2310 = vsel %vm116, %v1855, -inf
    %2311 = vmax.xlane.f32.xlu0 %v2310
    %v2312 = vpop.xlane.xlu0 %2311
    %v2313 = vsel %vm116, %v1894, -inf
    %2314 = vmax.xlane.f32.xlu0 %v2313
    %v2315 = vpop.xlane.xlu0 %2314
    %v2316 = vsel %vm116, %v1933, -inf
    %2317 = vmax.xlane.f32.xlu0 %v2316
    %v2318 = vpop.xlane.xlu0 %2317
    %v2319 = vsel %vm116, %v1972, -inf
    %2320 = vmax.xlane.f32.xlu0 %v2319
    %v2321 = vpop.xlane.xlu0 %2320
    %v2322 = vsel %vm116, %v2011, -inf
    %2323 = vmax.xlane.f32.xlu0 %v2322
    %v2324 = vpop.xlane.xlu0 %2323
    %v2325 = vsel %vm116, %v2050, -inf
    %2326 = vmax.xlane.f32.xlu0 %v2325
    %v2327 = vpop.xlane.xlu0 %2326
    %v2328 = vsel %vm116, %v2089, -inf
    %2329 = vmax.xlane.f32.xlu0 %v2328
    %v2330 = vpop.xlane.xlu0 %2329
    %v2331 = vsel %vm116, %v2128, -inf
    %2332 = vmax.xlane.f32.xlu0 %v2331
    %v2333 = vpop.xlane.xlu0 %2332
    %v2334 = vsel %vm116, %v2167, -inf
    %2335 = vmax.xlane.f32.xlu0 %v2334
    %v2336 = vpop.xlane.xlu0 %2335
    %v2337 = vsel %vm116, %v2206, -inf
    %2338 = vmax.xlane.f32.xlu0 %v2337
    %v2339 = vpop.xlane.xlu0 %2338
    %v2340 = vsel %vm116, %v2245, -inf
    %2341 = vmax.xlane.f32.xlu0 %v2340
    %v2342 = vpop.xlane.xlu0 %2341
    %v2343 = vsub.f32 %v1036, %v2249
    %v2344 = vsub.f32 %v1075, %v2252
    %v2345 = vsub.f32 %v1114, %v2255
    %v2346 = vsub.f32 %v1153, %v2258
    %v2347 = vsub.f32 %v1192, %v2261
    %v2348 = vsub.f32 %v1231, %v2264
    %v2349 = vsub.f32 %v1270, %v2267
    %v2350 = vsub.f32 %v1309, %v2270
    %v2351 = vsub.f32 %v1348, %v2273
    %v2352 = vsub.f32 %v1387, %v2276
    %v2353 = vsub.f32 %v1426, %v2279
    %v2354 = vsub.f32 %v1465, %v2282
    %v2355 = vsub.f32 %v1504, %v2285
    %v2356 = vsub.f32 %v1543, %v2288
    %v2357 = vsub.f32 %v1582, %v2291
    %v2358 = vsub.f32 %v1621, %v2294
    %v2359 = vsub.f32 %v1660, %v2297
    %v2360 = vsub.f32 %v1699, %v2300
    %v2361 = vsub.f32 %v1738, %v2303
    %v2362 = vsub.f32 %v1777, %v2306
    %v2363 = vsub.f32 %v1816, %v2309
    %v2364 = vsub.f32 %v1855, %v2312
    %v2365 = vsub.f32 %v1894, %v2315
    %v2366 = vsub.f32 %v1933, %v2318
    %v2367 = vsub.f32 %v1972, %v2321
    %v2368 = vsub.f32 %v2011, %v2324
    %v2369 = vsub.f32 %v2050, %v2327
    %v2370 = vsub.f32 %v2089, %v2330
    %v2371 = vsub.f32 %v2128, %v2333
    %v2372 = vsub.f32 %v2167, %v2336
    %v2373 = vsub.f32 %v2206, %v2339
    %v2374 = vsub.f32 %v2245, %v2342
    %v2375 = vmul.f32 %v2343, 1.442695
    %v2376 = vpow.pop %v2375
    %v2377 = vmul.f32 %v2344, 1.442695
    %v2378 = vpow.pop %v2377
    %v2379 = vmul.f32 %v2345, 1.442695
    %v2380 = vpow.pop %v2379
    %v2381 = vmul.f32 %v2346, 1.442695
    %v2382 = vpow.pop %v2381
    %v2383 = vmul.f32 %v2347, 1.442695
    %v2384 = vpow.pop %v2383
    %v2385 = vmul.f32 %v2348, 1.442695
    %v2386 = vpow.pop %v2385
    %v2387 = vmul.f32 %v2349, 1.442695
    %v2388 = vpow.pop %v2387
    %v2389 = vmul.f32 %v2350, 1.442695
    %v2390 = vpow.pop %v2389
    %v2391 = vmul.f32 %v2351, 1.442695
    %v2392 = vpow.pop %v2391
    %v2393 = vmul.f32 %v2352, 1.442695
    %v2394 = vpow.pop %v2393
    %v2395 = vmul.f32 %v2353, 1.442695
    %v2396 = vpow.pop %v2395
    %v2397 = vmul.f32 %v2354, 1.442695
    %v2398 = vpow.pop %v2397
    %v2399 = vmul.f32 %v2355, 1.442695
    %v2400 = vpow.pop %v2399
    %v2401 = vmul.f32 %v2356, 1.442695
    %v2402 = vpow.pop %v2401
    %v2403 = vmul.f32 %v2357, 1.442695
    %v2404 = vpow.pop %v2403
    %v2405 = vmul.f32 %v2358, 1.442695
    %v2406 = vpow.pop %v2405
    %v2407 = vmul.f32 %v2359, 1.442695
    %v2408 = vpow.pop %v2407
    %v2409 = vmul.f32 %v2360, 1.442695
    %v2410 = vpow.pop %v2409
    %v2411 = vmul.f32 %v2361, 1.442695
    %v2412 = vpow.pop %v2411
    %v2413 = vmul.f32 %v2362, 1.442695
    %v2414 = vpow.pop %v2413
    %v2415 = vmul.f32 %v2363, 1.442695
    %v2416 = vpow.pop %v2415
    %v2417 = vmul.f32 %v2364, 1.442695
    %v2418 = vpow.pop %v2417
    %v2419 = vmul.f32 %v2365, 1.442695
    %v2420 = vpow.pop %v2419
    %v2421 = vmul.f32 %v2366, 1.442695
    %v2422 = vpow.pop %v2421
    %v2423 = vmul.f32 %v2367, 1.442695
    %v2424 = vpow.pop %v2423
    %v2425 = vmul.f32 %v2368, 1.442695
    %v2426 = vpow.pop %v2425
    %v2427 = vmul.f32 %v2369, 1.442695
    %v2428 = vpow.pop %v2427
    %v2429 = vmul.f32 %v2370, 1.442695
    %v2430 = vpow.pop %v2429
    %v2431 = vmul.f32 %v2371, 1.442695
    %v2432 = vpow.pop %v2431
    %v2433 = vmul.f32 %v2372, 1.442695
    %v2434 = vpow.pop %v2433
    %v2435 = vmul.f32 %v2373, 1.442695
    %v2436 = vpow.pop %v2435
    %v2437 = vmul.f32 %v2374, 1.442695
    %v2438 = vpow.pop %v2437
    %v2439 = vsel %vm116, %v2376, 0.0
    %2440 = vadd.xlane.f32.xlu0 %v2439
    %v2441 = vpop.xlane.xlu0 %2440
    %v2442 = vsel %vm116, %v2378, 0.0
    %2443 = vadd.xlane.f32.xlu0 %v2442
    %v2444 = vpop.xlane.xlu0 %2443
    %v2445 = vsel %vm116, %v2380, 0.0
    %2446 = vadd.xlane.f32.xlu0 %v2445
    %v2447 = vpop.xlane.xlu0 %2446
    %v2448 = vsel %vm116, %v2382, 0.0
    %2449 = vadd.xlane.f32.xlu0 %v2448
    %v2450 = vpop.xlane.xlu0 %2449
    %v2451 = vsel %vm116, %v2384, 0.0
    %2452 = vadd.xlane.f32.xlu0 %v2451
    %v2453 = vpop.xlane.xlu0 %2452
    %v2454 = vsel %vm116, %v2386, 0.0
    %2455 = vadd.xlane.f32.xlu0 %v2454
    %v2456 = vpop.xlane.xlu0 %2455
    %v2457 = vsel %vm116, %v2388, 0.0
    %2458 = vadd.xlane.f32.xlu0 %v2457
    %v2459 = vpop.xlane.xlu0 %2458
    %v2460 = vsel %vm116, %v2390, 0.0
    %2461 = vadd.xlane.f32.xlu0 %v2460
    %v2462 = vpop.xlane.xlu0 %2461
    %v2463 = vsel %vm116, %v2392, 0.0
    %2464 = vadd.xlane.f32.xlu0 %v2463
    %v2465 = vpop.xlane.xlu0 %2464
    %v2466 = vsel %vm116, %v2394, 0.0
    %2467 = vadd.xlane.f32.xlu0 %v2466
    %v2468 = vpop.xlane.xlu0 %2467
    %v2469 = vsel %vm116, %v2396, 0.0
    %2470 = vadd.xlane.f32.xlu0 %v2469
    %v2471 = vpop.xlane.xlu0 %2470
    %v2472 = vsel %vm116, %v2398, 0.0
    %2473 = vadd.xlane.f32.xlu0 %v2472
    %v2474 = vpop.xlane.xlu0 %2473
    %v2475 = vsel %vm116, %v2400, 0.0
    %2476 = vadd.xlane.f32.xlu0 %v2475
    %v2477 = vpop.xlane.xlu0 %2476
    %v2478 = vsel %vm116, %v2402, 0.0
    %2479 = vadd.xlane.f32.xlu0 %v2478
    %v2480 = vpop.xlane.xlu0 %2479
    %v2481 = vsel %vm116, %v2404, 0.0
    %2482 = vadd.xlane.f32.xlu0 %v2481
    %v2483 = vpop.xlane.xlu0 %2482
    %v2484 = vsel %vm116, %v2406, 0.0
    %2485 = vadd.xlane.f32.xlu0 %v2484
    %v2486 = vpop.xlane.xlu0 %2485
    %v2487 = vsel %vm116, %v2408, 0.0
    %2488 = vadd.xlane.f32.xlu0 %v2487
    %v2489 = vpop.xlane.xlu0 %2488
    %v2490 = vsel %vm116, %v2410, 0.0
    %2491 = vadd.xlane.f32.xlu0 %v2490
    %v2492 = vpop.xlane.xlu0 %2491
    %v2493 = vsel %vm116, %v2412, 0.0
    %2494 = vadd.xlane.f32.xlu0 %v2493
    %v2495 = vpop.xlane.xlu0 %2494
    %v2496 = vsel %vm116, %v2414, 0.0
    %2497 = vadd.xlane.f32.xlu0 %v2496
    %v2498 = vpop.xlane.xlu0 %2497
    %v2499 = vsel %vm116, %v2416, 0.0
    %2500 = vadd.xlane.f32.xlu0 %v2499
    %v2501 = vpop.xlane.xlu0 %2500
    %v2502 = vsel %vm116, %v2418, 0.0
    %2503 = vadd.xlane.f32.xlu0 %v2502
    %v2504 = vpop.xlane.xlu0 %2503
    %v2505 = vsel %vm116, %v2420, 0.0
    %2506 = vadd.xlane.f32.xlu0 %v2505
    %v2507 = vpop.xlane.xlu0 %2506
    %v2508 = vsel %vm116, %v2422, 0.0
    %2509 = vadd.xlane.f32.xlu0 %v2508
    %v2510 = vpop.xlane.xlu0 %2509
    %v2511 = vsel %vm116, %v2424, 0.0
    %2512 = vadd.xlane.f32.xlu0 %v2511
    %v2513 = vpop.xlane.xlu0 %2512
    %v2514 = vsel %vm116, %v2426, 0.0
    %2515 = vadd.xlane.f32.xlu0 %v2514
    %v2516 = vpop.xlane.xlu0 %2515
    %v2517 = vsel %vm116, %v2428, 0.0
    %2518 = vadd.xlane.f32.xlu0 %v2517
    %v2519 = vpop.xlane.xlu0 %2518
    %v2520 = vsel %vm116, %v2430, 0.0
    %2521 = vadd.xlane.f32.xlu0 %v2520
    %v2522 = vpop.xlane.xlu0 %2521
    %v2523 = vsel %vm116, %v2432, 0.0
    %2524 = vadd.xlane.f32.xlu0 %v2523
    %v2525 = vpop.xlane.xlu0 %2524
    %v2526 = vsel %vm116, %v2434, 0.0
    %2527 = vadd.xlane.f32.xlu0 %v2526
    %v2528 = vpop.xlane.xlu0 %2527
    %v2529 = vsel %vm116, %v2436, 0.0
    %2530 = vadd.xlane.f32.xlu0 %v2529
    %v2531 = vpop.xlane.xlu0 %2530
    %v2532 = vsel %vm116, %v2438, 0.0
    %2533 = vadd.xlane.f32.xlu0 %v2532
    %v2534 = vpop.xlane.xlu0 %2533
    %2535 = vrot.lane.b32.xlu0 %v327, 64
    %v2536 = vpop.permute.xlu0 %2535
    %2537 = vrot.lane.b32.xlu0 %v330, 64
    %v2538 = vpop.permute.xlu0 %2537
    %2539 = vrot.lane.b32.xlu0 %v333, 64
    %v2540 = vpop.permute.xlu0 %2539
    %2541 = vrot.lane.b32.xlu0 %v336, 64
    %v2542 = vpop.permute.xlu0 %2541
    %2543 = vrot.lane.b32.xlu0 %v339, 64
    %v2544 = vpop.permute.xlu0 %2543
    %2545 = vrot.lane.b32.xlu0 %v342, 64
    %v2546 = vpop.permute.xlu0 %2545
    %2547 = vrot.lane.b32.xlu0 %v345, 64
    %v2548 = vpop.permute.xlu0 %2547
    %2549 = vrot.lane.b32.xlu0 %v348, 64
    %v2550 = vpop.permute.xlu0 %2549
    %v2560 = vsel %vm116, %v2376, 0
    %2562 = vmatpush.msra.mxu0 0.0
    %2563 = vmatpush.msra.mxu0 0.0
    %2564 = vmatpush.msra.mxu0 0.0
    %2565 = vmatpush.msra.mxu0 0.0
    %2566 = vmatpush.msra.mxu0 0.0
    %2567 = vmatpush.msra.mxu0 0.0
    %2568 = vmatpush.msra.mxu0 0.0
    %2569 = vmatpush.msra.mxu0 0.0
    %2570 = vmatpush.msra.mxu0 %v2550
    %2571 = vmatpush.msra.mxu0 %v2548
    %2572 = vmatpush.msra.mxu0 %v2546
    %2573 = vmatpush.msra.mxu0 %v2544
    %2574 = vmatpush.msra.mxu0 %v2542
    %2575 = vmatpush.msra.mxu0 %v2540
    %2576 = vmatpush.msra.mxu0 %v2538
    %2577 = vmatpush.msra.mxu0 %v2536
    %2578 = vmatmul.f32.gmra.mxu0 %v2560
    %v2579 = vpop.f32.mrf.mxu0
    %v2580 = vadd.f32 0.0, %v2579
    %2581 = vdwg.mxu0
    %2582 = vrot.lane.b32.xlu0 %v351, 64
    %v2583 = vpop.permute.xlu0 %2582
    %2584 = vrot.lane.b32.xlu0 %v354, 64
    %v2585 = vpop.permute.xlu0 %2584
    %2586 = vrot.lane.b32.xlu0 %v357, 64
    %v2587 = vpop.permute.xlu0 %2586
    %2588 = vrot.lane.b32.xlu0 %v360, 64
    %v2589 = vpop.permute.xlu0 %2588
    %2590 = vrot.lane.b32.xlu0 %v363, 64
    %v2591 = vpop.permute.xlu0 %2590
    %2592 = vrot.lane.b32.xlu0 %v366, 64
    %v2593 = vpop.permute.xlu0 %2592
    %2594 = vrot.lane.b32.xlu0 %v369, 64
    %v2595 = vpop.permute.xlu0 %2594
    %2596 = vrot.lane.b32.xlu0 %v372, 64
    %v2597 = vpop.permute.xlu0 %2596
    %v2607 = vsel %vm116, %v2378, 0
    %2609 = vmatpush.msra.mxu0 0.0
    %2610 = vmatpush.msra.mxu0 0.0
    %2611 = vmatpush.msra.mxu0 0.0
    %2612 = vmatpush.msra.mxu0 0.0
    %2613 = vmatpush.msra.mxu0 0.0
    %2614 = vmatpush.msra.mxu0 0.0
    %2615 = vmatpush.msra.mxu0 0.0
    %2616 = vmatpush.msra.mxu0 0.0
    %2617 = vmatpush.msra.mxu0 %v2597
    %2618 = vmatpush.msra.mxu0 %v2595
    %2619 = vmatpush.msra.mxu0 %v2593
    %2620 = vmatpush.msra.mxu0 %v2591
    %2621 = vmatpush.msra.mxu0 %v2589
    %2622 = vmatpush.msra.mxu0 %v2587
    %2623 = vmatpush.msra.mxu0 %v2585
    %2624 = vmatpush.msra.mxu0 %v2583
    %2625 = vmatmul.f32.gmra.mxu0 %v2607
    %v2626 = vpop.f32.mrf.mxu0
    %v2627 = vadd.f32 0.0, %v2626
    %2628 = vdwg.mxu0
    %2629 = vrot.lane.b32.xlu0 %v375, 64
    %v2630 = vpop.permute.xlu0 %2629
    %2631 = vrot.lane.b32.xlu0 %v378, 64
    %v2632 = vpop.permute.xlu0 %2631
    %2633 = vrot.lane.b32.xlu0 %v381, 64
    %v2634 = vpop.permute.xlu0 %2633
    %2635 = vrot.lane.b32.xlu0 %v384, 64
    %v2636 = vpop.permute.xlu0 %2635
    %2637 = vrot.lane.b32.xlu0 %v387, 64
    %v2638 = vpop.permute.xlu0 %2637
    %2639 = vrot.lane.b32.xlu0 %v390, 64
    %v2640 = vpop.permute.xlu0 %2639
    %2641 = vrot.lane.b32.xlu0 %v393, 64
    %v2642 = vpop.permute.xlu0 %2641
    %2643 = vrot.lane.b32.xlu0 %v396, 64
    %v2644 = vpop.permute.xlu0 %2643
    %v2654 = vsel %vm116, %v2380, 0
    %2656 = vmatpush.msra.mxu0 0.0
    %2657 = vmatpush.msra.mxu0 0.0
    %2658 = vmatpush.msra.mxu0 0.0
    %2659 = vmatpush.msra.mxu0 0.0
    %2660 = vmatpush.msra.mxu0 0.0
    %2661 = vmatpush.msra.mxu0 0.0
    %2662 = vmatpush.msra.mxu0 0.0
    %2663 = vmatpush.msra.mxu0 0.0
    %2664 = vmatpush.msra.mxu0 %v2644
    %2665 = vmatpush.msra.mxu0 %v2642
    %2666 = vmatpush.msra.mxu0 %v2640
    %2667 = vmatpush.msra.mxu0 %v2638
    %2668 = vmatpush.msra.mxu0 %v2636
    %2669 = vmatpush.msra.mxu0 %v2634
    %2670 = vmatpush.msra.mxu0 %v2632
    %2671 = vmatpush.msra.mxu0 %v2630
    %2672 = vmatmul.f32.gmra.mxu0 %v2654
    %v2673 = vpop.f32.mrf.mxu0
    %v2674 = vadd.f32 0.0, %v2673
    %2675 = vdwg.mxu0
    %2676 = vrot.lane.b32.xlu0 %v399, 64
    %v2677 = vpop.permute.xlu0 %2676
    %2678 = vrot.lane.b32.xlu0 %v402, 64
    %v2679 = vpop.permute.xlu0 %2678
    %2680 = vrot.lane.b32.xlu0 %v405, 64
    %v2681 = vpop.permute.xlu0 %2680
    %2682 = vrot.lane.b32.xlu0 %v408, 64
    %v2683 = vpop.permute.xlu0 %2682
    %2684 = vrot.lane.b32.xlu0 %v411, 64
    %v2685 = vpop.permute.xlu0 %2684
    %2686 = vrot.lane.b32.xlu0 %v414, 64
    %v2687 = vpop.permute.xlu0 %2686
    %2688 = vrot.lane.b32.xlu0 %v417, 64
    %v2689 = vpop.permute.xlu0 %2688
    %2690 = vrot.lane.b32.xlu0 %v420, 64
    %v2691 = vpop.permute.xlu0 %2690
    %v2701 = vsel %vm116, %v2382, 0
    %2703 = vmatpush.msra.mxu0 0.0
    %2704 = vmatpush.msra.mxu0 0.0
    %2705 = vmatpush.msra.mxu0 0.0
    %2706 = vmatpush.msra.mxu0 0.0
    %2707 = vmatpush.msra.mxu0 0.0
    %2708 = vmatpush.msra.mxu0 0.0
    %2709 = vmatpush.msra.mxu0 0.0
    %2710 = vmatpush.msra.mxu0 0.0
    %2711 = vmatpush.msra.mxu0 %v2691
    %2712 = vmatpush.msra.mxu0 %v2689
    %2713 = vmatpush.msra.mxu0 %v2687
    %2714 = vmatpush.msra.mxu0 %v2685
    %2715 = vmatpush.msra.mxu0 %v2683
    %2716 = vmatpush.msra.mxu0 %v2681
    %2717 = vmatpush.msra.mxu0 %v2679
    %2718 = vmatpush.msra.mxu0 %v2677
    %2719 = vmatmul.f32.gmra.mxu0 %v2701
    %v2720 = vpop.f32.mrf.mxu0
    %v2721 = vadd.f32 0.0, %v2720
    %2722 = vdwg.mxu0
    %2723 = vrot.lane.b32.xlu0 %v423, 64
    %v2724 = vpop.permute.xlu0 %2723
    %2725 = vrot.lane.b32.xlu0 %v426, 64
    %v2726 = vpop.permute.xlu0 %2725
    %2727 = vrot.lane.b32.xlu0 %v429, 64
    %v2728 = vpop.permute.xlu0 %2727
    %2729 = vrot.lane.b32.xlu0 %v432, 64
    %v2730 = vpop.permute.xlu0 %2729
    %2731 = vrot.lane.b32.xlu0 %v435, 64
    %v2732 = vpop.permute.xlu0 %2731
    %2733 = vrot.lane.b32.xlu0 %v438, 64
    %v2734 = vpop.permute.xlu0 %2733
    %2735 = vrot.lane.b32.xlu0 %v441, 64
    %v2736 = vpop.permute.xlu0 %2735
    %2737 = vrot.lane.b32.xlu0 %v444, 64
    %v2738 = vpop.permute.xlu0 %2737
    %v2748 = vsel %vm116, %v2384, 0
    %2750 = vmatpush.msra.mxu0 0.0
    %2751 = vmatpush.msra.mxu0 0.0
    %2752 = vmatpush.msra.mxu0 0.0
    %2753 = vmatpush.msra.mxu0 0.0
    %2754 = vmatpush.msra.mxu0 0.0
    %2755 = vmatpush.msra.mxu0 0.0
    %2756 = vmatpush.msra.mxu0 0.0
    %2757 = vmatpush.msra.mxu0 0.0
    %2758 = vmatpush.msra.mxu0 %v2738
    %2759 = vmatpush.msra.mxu0 %v2736
    %2760 = vmatpush.msra.mxu0 %v2734
    %2761 = vmatpush.msra.mxu0 %v2732
    %2762 = vmatpush.msra.mxu0 %v2730
    %2763 = vmatpush.msra.mxu0 %v2728
    %2764 = vmatpush.msra.mxu0 %v2726
    %2765 = vmatpush.msra.mxu0 %v2724
    %2766 = vmatmul.f32.gmra.mxu0 %v2748
    %v2767 = vpop.f32.mrf.mxu0
    %v2768 = vadd.f32 0.0, %v2767
    %2769 = vdwg.mxu0
    %2770 = vrot.lane.b32.xlu0 %v447, 64
    %v2771 = vpop.permute.xlu0 %2770
    %2772 = vrot.lane.b32.xlu0 %v450, 64
    %v2773 = vpop.permute.xlu0 %2772
    %2774 = vrot.lane.b32.xlu0 %v453, 64
    %v2775 = vpop.permute.xlu0 %2774
    %2776 = vrot.lane.b32.xlu0 %v456, 64
    %v2777 = vpop.permute.xlu0 %2776
    %2778 = vrot.lane.b32.xlu0 %v459, 64
    %v2779 = vpop.permute.xlu0 %2778
    %2780 = vrot.lane.b32.xlu0 %v462, 64
    %v2781 = vpop.permute.xlu0 %2780
    %2782 = vrot.lane.b32.xlu0 %v465, 64
    %v2783 = vpop.permute.xlu0 %2782
    %2784 = vrot.lane.b32.xlu0 %v468, 64
    %v2785 = vpop.permute.xlu0 %2784
    %v2795 = vsel %vm116, %v2386, 0
    %2797 = vmatpush.msra.mxu0 0.0
    %2798 = vmatpush.msra.mxu0 0.0
    %2799 = vmatpush.msra.mxu0 0.0
    %2800 = vmatpush.msra.mxu0 0.0
    %2801 = vmatpush.msra.mxu0 0.0
    %2802 = vmatpush.msra.mxu0 0.0
    %2803 = vmatpush.msra.mxu0 0.0
    %2804 = vmatpush.msra.mxu0 0.0
    %2805 = vmatpush.msra.mxu0 %v2785
    %2806 = vmatpush.msra.mxu0 %v2783
    %2807 = vmatpush.msra.mxu0 %v2781
    %2808 = vmatpush.msra.mxu0 %v2779
    %2809 = vmatpush.msra.mxu0 %v2777
    %2810 = vmatpush.msra.mxu0 %v2775
    %2811 = vmatpush.msra.mxu0 %v2773
    %2812 = vmatpush.msra.mxu0 %v2771
    %2813 = vmatmul.f32.gmra.mxu0 %v2795
    %v2814 = vpop.f32.mrf.mxu0
    %v2815 = vadd.f32 0.0, %v2814
    %2816 = vdwg.mxu0
    %2817 = vrot.lane.b32.xlu0 %v471, 64
    %v2818 = vpop.permute.xlu0 %2817
    %2819 = vrot.lane.b32.xlu0 %v474, 64
    %v2820 = vpop.permute.xlu0 %2819
    %2821 = vrot.lane.b32.xlu0 %v477, 64
    %v2822 = vpop.permute.xlu0 %2821
    %2823 = vrot.lane.b32.xlu0 %v480, 64
    %v2824 = vpop.permute.xlu0 %2823
    %2825 = vrot.lane.b32.xlu0 %v483, 64
    %v2826 = vpop.permute.xlu0 %2825
    %2827 = vrot.lane.b32.xlu0 %v486, 64
    %v2828 = vpop.permute.xlu0 %2827
    %2829 = vrot.lane.b32.xlu0 %v489, 64
    %v2830 = vpop.permute.xlu0 %2829
    %2831 = vrot.lane.b32.xlu0 %v492, 64
    %v2832 = vpop.permute.xlu0 %2831
    %v2842 = vsel %vm116, %v2388, 0
    %2844 = vmatpush.msra.mxu0 0.0
    %2845 = vmatpush.msra.mxu0 0.0
    %2846 = vmatpush.msra.mxu0 0.0
    %2847 = vmatpush.msra.mxu0 0.0
    %2848 = vmatpush.msra.mxu0 0.0
    %2849 = vmatpush.msra.mxu0 0.0
    %2850 = vmatpush.msra.mxu0 0.0
    %2851 = vmatpush.msra.mxu0 0.0
    %2852 = vmatpush.msra.mxu0 %v2832
    %2853 = vmatpush.msra.mxu0 %v2830
    %2854 = vmatpush.msra.mxu0 %v2828
    %2855 = vmatpush.msra.mxu0 %v2826
    %2856 = vmatpush.msra.mxu0 %v2824
    %2857 = vmatpush.msra.mxu0 %v2822
    %2858 = vmatpush.msra.mxu0 %v2820
    %2859 = vmatpush.msra.mxu0 %v2818
    %2860 = vmatmul.f32.gmra.mxu0 %v2842
    %v2861 = vpop.f32.mrf.mxu0
    %v2862 = vadd.f32 0.0, %v2861
    %2863 = vdwg.mxu0
    %2864 = vrot.lane.b32.xlu0 %v495, 64
    %v2865 = vpop.permute.xlu0 %2864
    %2866 = vrot.lane.b32.xlu0 %v498, 64
    %v2867 = vpop.permute.xlu0 %2866
    %2868 = vrot.lane.b32.xlu0 %v501, 64
    %v2869 = vpop.permute.xlu0 %2868
    %2870 = vrot.lane.b32.xlu0 %v504, 64
    %v2871 = vpop.permute.xlu0 %2870
    %2872 = vrot.lane.b32.xlu0 %v507, 64
    %v2873 = vpop.permute.xlu0 %2872
    %2874 = vrot.lane.b32.xlu0 %v510, 64
    %v2875 = vpop.permute.xlu0 %2874
    %2876 = vrot.lane.b32.xlu0 %v513, 64
    %v2877 = vpop.permute.xlu0 %2876
    %2878 = vrot.lane.b32.xlu0 %v516, 64
    %v2879 = vpop.permute.xlu0 %2878
    %v2889 = vsel %vm116, %v2390, 0
    %2891 = vmatpush.msra.mxu0 0.0
    %2892 = vmatpush.msra.mxu0 0.0
    %2893 = vmatpush.msra.mxu0 0.0
    %2894 = vmatpush.msra.mxu0 0.0
    %2895 = vmatpush.msra.mxu0 0.0
    %2896 = vmatpush.msra.mxu0 0.0
    %2897 = vmatpush.msra.mxu0 0.0
    %2898 = vmatpush.msra.mxu0 0.0
    %2899 = vmatpush.msra.mxu0 %v2879
    %2900 = vmatpush.msra.mxu0 %v2877
    %2901 = vmatpush.msra.mxu0 %v2875
    %2902 = vmatpush.msra.mxu0 %v2873
    %2903 = vmatpush.msra.mxu0 %v2871
    %2904 = vmatpush.msra.mxu0 %v2869
    %2905 = vmatpush.msra.mxu0 %v2867
    %2906 = vmatpush.msra.mxu0 %v2865
    %2907 = vmatmul.f32.gmra.mxu0 %v2889
    %v2908 = vpop.f32.mrf.mxu0
    %v2909 = vadd.f32 0.0, %v2908
    %2910 = vdwg.mxu0
    %2911 = vrot.lane.b32.xlu0 %v583, 64
    %v2912 = vpop.permute.xlu0 %2911
    %2913 = vrot.lane.b32.xlu0 %v585, 64
    %v2914 = vpop.permute.xlu0 %2913
    %2915 = vrot.lane.b32.xlu0 %v587, 64
    %v2916 = vpop.permute.xlu0 %2915
    %2917 = vrot.lane.b32.xlu0 %v589, 64
    %v2918 = vpop.permute.xlu0 %2917
    %2919 = vrot.lane.b32.xlu0 %v591, 64
    %v2920 = vpop.permute.xlu0 %2919
    %2921 = vrot.lane.b32.xlu0 %v593, 64
    %v2922 = vpop.permute.xlu0 %2921
    %2923 = vrot.lane.b32.xlu0 %v595, 64
    %v2924 = vpop.permute.xlu0 %2923
    %2925 = vrot.lane.b32.xlu0 %v597, 64
    %v2926 = vpop.permute.xlu0 %2925
    %v2936 = vsel %vm116, %v2392, 0
    %2938 = vmatpush.msra.mxu0 0.0
    %2939 = vmatpush.msra.mxu0 0.0
    %2940 = vmatpush.msra.mxu0 0.0
    %2941 = vmatpush.msra.mxu0 0.0
    %2942 = vmatpush.msra.mxu0 0.0
    %2943 = vmatpush.msra.mxu0 0.0
    %2944 = vmatpush.msra.mxu0 0.0
    %2945 = vmatpush.msra.mxu0 0.0
    %2946 = vmatpush.msra.mxu0 %v2926
    %2947 = vmatpush.msra.mxu0 %v2924
    %2948 = vmatpush.msra.mxu0 %v2922
    %2949 = vmatpush.msra.mxu0 %v2920
    %2950 = vmatpush.msra.mxu0 %v2918
    %2951 = vmatpush.msra.mxu0 %v2916
    %2952 = vmatpush.msra.mxu0 %v2914
    %2953 = vmatpush.msra.mxu0 %v2912
    %2954 = vmatmul.f32.gmra.mxu0 %v2936
    %v2955 = vpop.f32.mrf.mxu0
    %v2956 = vadd.f32 0.0, %v2955
    %2957 = vdwg.mxu0
    %2958 = vrot.lane.b32.xlu0 %v599, 64
    %v2959 = vpop.permute.xlu0 %2958
    %2960 = vrot.lane.b32.xlu0 %v601, 64
    %v2961 = vpop.permute.xlu0 %2960
    %2962 = vrot.lane.b32.xlu0 %v603, 64
    %v2963 = vpop.permute.xlu0 %2962
    %2964 = vrot.lane.b32.xlu0 %v605, 64
    %v2965 = vpop.permute.xlu0 %2964
    %2966 = vrot.lane.b32.xlu0 %v607, 64
    %v2967 = vpop.permute.xlu0 %2966
    %2968 = vrot.lane.b32.xlu0 %v609, 64
    %v2969 = vpop.permute.xlu0 %2968
    %2970 = vrot.lane.b32.xlu0 %v611, 64
    %v2971 = vpop.permute.xlu0 %2970
    %2972 = vrot.lane.b32.xlu0 %v613, 64
    %v2973 = vpop.permute.xlu0 %2972
    %v2983 = vsel %vm116, %v2394, 0
    %2985 = vmatpush.msra.mxu0 0.0
    %2986 = vmatpush.msra.mxu0 0.0
    %2987 = vmatpush.msra.mxu0 0.0
    %2988 = vmatpush.msra.mxu0 0.0
    %2989 = vmatpush.msra.mxu0 0.0
    %2990 = vmatpush.msra.mxu0 0.0
    %2991 = vmatpush.msra.mxu0 0.0
    %2992 = vmatpush.msra.mxu0 0.0
    %2993 = vmatpush.msra.mxu0 %v2973
    %2994 = vmatpush.msra.mxu0 %v2971
    %2995 = vmatpush.msra.mxu0 %v2969
    %2996 = vmatpush.msra.mxu0 %v2967
    %2997 = vmatpush.msra.mxu0 %v2965
    %2998 = vmatpush.msra.mxu0 %v2963
    %2999 = vmatpush.msra.mxu0 %v2961
    %3000 = vmatpush.msra.mxu0 %v2959
    %3001 = vmatmul.f32.gmra.mxu0 %v2983
    %v3002 = vpop.f32.mrf.mxu0
    %v3003 = vadd.f32 0.0, %v3002
    %3004 = vdwg.mxu0
    %3005 = vrot.lane.b32.xlu0 %v615, 64
    %v3006 = vpop.permute.xlu0 %3005
    %3007 = vrot.lane.b32.xlu0 %v617, 64
    %v3008 = vpop.permute.xlu0 %3007
    %3009 = vrot.lane.b32.xlu0 %v619, 64
    %v3010 = vpop.permute.xlu0 %3009
    %3011 = vrot.lane.b32.xlu0 %v621, 64
    %v3012 = vpop.permute.xlu0 %3011
    %3013 = vrot.lane.b32.xlu0 %v623, 64
    %v3014 = vpop.permute.xlu0 %3013
    %3015 = vrot.lane.b32.xlu0 %v625, 64
    %v3016 = vpop.permute.xlu0 %3015
    %3017 = vrot.lane.b32.xlu0 %v627, 64
    %v3018 = vpop.permute.xlu0 %3017
    %3019 = vrot.lane.b32.xlu0 %v629, 64
    %v3020 = vpop.permute.xlu0 %3019
    %v3030 = vsel %vm116, %v2396, 0
    %3032 = vmatpush.msra.mxu0 0.0
    %3033 = vmatpush.msra.mxu0 0.0
    %3034 = vmatpush.msra.mxu0 0.0
    %3035 = vmatpush.msra.mxu0 0.0
    %3036 = vmatpush.msra.mxu0 0.0
    %3037 = vmatpush.msra.mxu0 0.0
    %3038 = vmatpush.msra.mxu0 0.0
    %3039 = vmatpush.msra.mxu0 0.0
    %3040 = vmatpush.msra.mxu0 %v3020
    %3041 = vmatpush.msra.mxu0 %v3018
    %3042 = vmatpush.msra.mxu0 %v3016
    %3043 = vmatpush.msra.mxu0 %v3014
    %3044 = vmatpush.msra.mxu0 %v3012
    %3045 = vmatpush.msra.mxu0 %v3010
    %3046 = vmatpush.msra.mxu0 %v3008
    %3047 = vmatpush.msra.mxu0 %v3006
    %3048 = vmatmul.f32.gmra.mxu0 %v3030
    %v3049 = vpop.f32.mrf.mxu0
    %v3050 = vadd.f32 0.0, %v3049
    %3051 = vdwg.mxu0
    %3052 = vrot.lane.b32.xlu0 %v631, 64
    %v3053 = vpop.permute.xlu0 %3052
    %3054 = vrot.lane.b32.xlu0 %v633, 64
    %v3055 = vpop.permute.xlu0 %3054
    %3056 = vrot.lane.b32.xlu0 %v635, 64
    %v3057 = vpop.permute.xlu0 %3056
    %3058 = vrot.lane.b32.xlu0 %v637, 64
    %v3059 = vpop.permute.xlu0 %3058
    %3060 = vrot.lane.b32.xlu0 %v639, 64
    %v3061 = vpop.permute.xlu0 %3060
    %3062 = vrot.lane.b32.xlu0 %v641, 64
    %v3063 = vpop.permute.xlu0 %3062
    %3064 = vrot.lane.b32.xlu0 %v643, 64
    %v3065 = vpop.permute.xlu0 %3064
    %3066 = vrot.lane.b32.xlu0 %v645, 64
    %v3067 = vpop.permute.xlu0 %3066
    %v3077 = vsel %vm116, %v2398, 0
    %3079 = vmatpush.msra.mxu0 0.0
    %3080 = vmatpush.msra.mxu0 0.0
    %3081 = vmatpush.msra.mxu0 0.0
    %3082 = vmatpush.msra.mxu0 0.0
    %3083 = vmatpush.msra.mxu0 0.0
    %3084 = vmatpush.msra.mxu0 0.0
    %3085 = vmatpush.msra.mxu0 0.0
    %3086 = vmatpush.msra.mxu0 0.0
    %3087 = vmatpush.msra.mxu0 %v3067
    %3088 = vmatpush.msra.mxu0 %v3065
    %3089 = vmatpush.msra.mxu0 %v3063
    %3090 = vmatpush.msra.mxu0 %v3061
    %3091 = vmatpush.msra.mxu0 %v3059
    %3092 = vmatpush.msra.mxu0 %v3057
    %3093 = vmatpush.msra.mxu0 %v3055
    %3094 = vmatpush.msra.mxu0 %v3053
    %3095 = vmatmul.f32.gmra.mxu0 %v3077
    %v3096 = vpop.f32.mrf.mxu0
    %v3097 = vadd.f32 0.0, %v3096
    %3098 = vdwg.mxu0
    %3099 = vrot.lane.b32.xlu0 %v647, 64
    %v3100 = vpop.permute.xlu0 %3099
    %3101 = vrot.lane.b32.xlu0 %v649, 64
    %v3102 = vpop.permute.xlu0 %3101
    %3103 = vrot.lane.b32.xlu0 %v651, 64
    %v3104 = vpop.permute.xlu0 %3103
    %3105 = vrot.lane.b32.xlu0 %v653, 64
    %v3106 = vpop.permute.xlu0 %3105
    %3107 = vrot.lane.b32.xlu0 %v655, 64
    %v3108 = vpop.permute.xlu0 %3107
    %3109 = vrot.lane.b32.xlu0 %v657, 64
    %v3110 = vpop.permute.xlu0 %3109
    %3111 = vrot.lane.b32.xlu0 %v659, 64
    %v3112 = vpop.permute.xlu0 %3111
    %3113 = vrot.lane.b32.xlu0 %v661, 64
    %v3114 = vpop.permute.xlu0 %3113
    %v3124 = vsel %vm116, %v2400, 0
    %3126 = vmatpush.msra.mxu0 0.0
    %3127 = vmatpush.msra.mxu0 0.0
    %3128 = vmatpush.msra.mxu0 0.0
    %3129 = vmatpush.msra.mxu0 0.0
    %3130 = vmatpush.msra.mxu0 0.0
    %3131 = vmatpush.msra.mxu0 0.0
    %3132 = vmatpush.msra.mxu0 0.0
    %3133 = vmatpush.msra.mxu0 0.0
    %3134 = vmatpush.msra.mxu0 %v3114
    %3135 = vmatpush.msra.mxu0 %v3112
    %3136 = vmatpush.msra.mxu0 %v3110
    %3137 = vmatpush.msra.mxu0 %v3108
    %3138 = vmatpush.msra.mxu0 %v3106
    %3139 = vmatpush.msra.mxu0 %v3104
    %3140 = vmatpush.msra.mxu0 %v3102
    %3141 = vmatpush.msra.mxu0 %v3100
    %3142 = vmatmul.f32.gmra.mxu0 %v3124
    %v3143 = vpop.f32.mrf.mxu0
    %v3144 = vadd.f32 0.0, %v3143
    %3145 = vdwg.mxu0
    %3146 = vrot.lane.b32.xlu0 %v663, 64
    %v3147 = vpop.permute.xlu0 %3146
    %3148 = vrot.lane.b32.xlu0 %v665, 64
    %v3149 = vpop.permute.xlu0 %3148
    %3150 = vrot.lane.b32.xlu0 %v667, 64
    %v3151 = vpop.permute.xlu0 %3150
    %3152 = vrot.lane.b32.xlu0 %v669, 64
    %v3153 = vpop.permute.xlu0 %3152
    %3154 = vrot.lane.b32.xlu0 %v671, 64
    %v3155 = vpop.permute.xlu0 %3154
    %3156 = vrot.lane.b32.xlu0 %v673, 64
    %v3157 = vpop.permute.xlu0 %3156
    %3158 = vrot.lane.b32.xlu0 %v675, 64
    %v3159 = vpop.permute.xlu0 %3158
    %3160 = vrot.lane.b32.xlu0 %v677, 64
    %v3161 = vpop.permute.xlu0 %3160
    %v3171 = vsel %vm116, %v2402, 0
    %3173 = vmatpush.msra.mxu0 0.0
    %3174 = vmatpush.msra.mxu0 0.0
    %3175 = vmatpush.msra.mxu0 0.0
    %3176 = vmatpush.msra.mxu0 0.0
    %3177 = vmatpush.msra.mxu0 0.0
    %3178 = vmatpush.msra.mxu0 0.0
    %3179 = vmatpush.msra.mxu0 0.0
    %3180 = vmatpush.msra.mxu0 0.0
    %3181 = vmatpush.msra.mxu0 %v3161
    %3182 = vmatpush.msra.mxu0 %v3159
    %3183 = vmatpush.msra.mxu0 %v3157
    %3184 = vmatpush.msra.mxu0 %v3155
    %3185 = vmatpush.msra.mxu0 %v3153
    %3186 = vmatpush.msra.mxu0 %v3151
    %3187 = vmatpush.msra.mxu0 %v3149
    %3188 = vmatpush.msra.mxu0 %v3147
    %3189 = vmatmul.f32.gmra.mxu0 %v3171
    %v3190 = vpop.f32.mrf.mxu0
    %v3191 = vadd.f32 0.0, %v3190
    %3192 = vdwg.mxu0
    %3193 = vrot.lane.b32.xlu0 %v679, 64
    %v3194 = vpop.permute.xlu0 %3193
    %3195 = vrot.lane.b32.xlu0 %v681, 64
    %v3196 = vpop.permute.xlu0 %3195
    %3197 = vrot.lane.b32.xlu0 %v683, 64
    %v3198 = vpop.permute.xlu0 %3197
    %3199 = vrot.lane.b32.xlu0 %v685, 64
    %v3200 = vpop.permute.xlu0 %3199
    %3201 = vrot.lane.b32.xlu0 %v687, 64
    %v3202 = vpop.permute.xlu0 %3201
    %3203 = vrot.lane.b32.xlu0 %v689, 64
    %v3204 = vpop.permute.xlu0 %3203
    %3205 = vrot.lane.b32.xlu0 %v691, 64
    %v3206 = vpop.permute.xlu0 %3205
    %3207 = vrot.lane.b32.xlu0 %v693, 64
    %v3208 = vpop.permute.xlu0 %3207
    %v3218 = vsel %vm116, %v2404, 0
    %3220 = vmatpush.msra.mxu0 0.0
    %3221 = vmatpush.msra.mxu0 0.0
    %3222 = vmatpush.msra.mxu0 0.0
    %3223 = vmatpush.msra.mxu0 0.0
    %3224 = vmatpush.msra.mxu0 0.0
    %3225 = vmatpush.msra.mxu0 0.0
    %3226 = vmatpush.msra.mxu0 0.0
    %3227 = vmatpush.msra.mxu0 0.0
    %3228 = vmatpush.msra.mxu0 %v3208
    %3229 = vmatpush.msra.mxu0 %v3206
    %3230 = vmatpush.msra.mxu0 %v3204
    %3231 = vmatpush.msra.mxu0 %v3202
    %3232 = vmatpush.msra.mxu0 %v3200
    %3233 = vmatpush.msra.mxu0 %v3198
    %3234 = vmatpush.msra.mxu0 %v3196
    %3235 = vmatpush.msra.mxu0 %v3194
    %3236 = vmatmul.f32.gmra.mxu0 %v3218
    %v3237 = vpop.f32.mrf.mxu0
    %v3238 = vadd.f32 0.0, %v3237
    %3239 = vdwg.mxu0
    %3240 = vrot.lane.b32.xlu0 %v695, 64
    %v3241 = vpop.permute.xlu0 %3240
    %3242 = vrot.lane.b32.xlu0 %v697, 64
    %v3243 = vpop.permute.xlu0 %3242
    %3244 = vrot.lane.b32.xlu0 %v699, 64
    %v3245 = vpop.permute.xlu0 %3244
    %3246 = vrot.lane.b32.xlu0 %v701, 64
    %v3247 = vpop.permute.xlu0 %3246
    %3248 = vrot.lane.b32.xlu0 %v703, 64
    %v3249 = vpop.permute.xlu0 %3248
    %3250 = vrot.lane.b32.xlu0 %v705, 64
    %v3251 = vpop.permute.xlu0 %3250
    %3252 = vrot.lane.b32.xlu0 %v707, 64
    %v3253 = vpop.permute.xlu0 %3252
    %3254 = vrot.lane.b32.xlu0 %v709, 64
    %v3255 = vpop.permute.xlu0 %3254
    %v3265 = vsel %vm116, %v2406, 0
    %3267 = vmatpush.msra.mxu0 0.0
    %3268 = vmatpush.msra.mxu0 0.0
    %3269 = vmatpush.msra.mxu0 0.0
    %3270 = vmatpush.msra.mxu0 0.0
    %3271 = vmatpush.msra.mxu0 0.0
    %3272 = vmatpush.msra.mxu0 0.0
    %3273 = vmatpush.msra.mxu0 0.0
    %3274 = vmatpush.msra.mxu0 0.0
    %3275 = vmatpush.msra.mxu0 %v3255
    %3276 = vmatpush.msra.mxu0 %v3253
    %3277 = vmatpush.msra.mxu0 %v3251
    %3278 = vmatpush.msra.mxu0 %v3249
    %3279 = vmatpush.msra.mxu0 %v3247
    %3280 = vmatpush.msra.mxu0 %v3245
    %3281 = vmatpush.msra.mxu0 %v3243
    %3282 = vmatpush.msra.mxu0 %v3241
    %3283 = vmatmul.f32.gmra.mxu0 %v3265
    %v3284 = vpop.f32.mrf.mxu0
    %v3285 = vadd.f32 0.0, %v3284
    %3286 = vdwg.mxu0
    %3287 = vrot.lane.b32.xlu0 %v711, 64
    %v3288 = vpop.permute.xlu0 %3287
    %3289 = vrot.lane.b32.xlu0 %v713, 64
    %v3290 = vpop.permute.xlu0 %3289
    %3291 = vrot.lane.b32.xlu0 %v715, 64
    %v3292 = vpop.permute.xlu0 %3291
    %3293 = vrot.lane.b32.xlu0 %v717, 64
    %v3294 = vpop.permute.xlu0 %3293
    %3295 = vrot.lane.b32.xlu0 %v719, 64
    %v3296 = vpop.permute.xlu0 %3295
    %3297 = vrot.lane.b32.xlu0 %v721, 64
    %v3298 = vpop.permute.xlu0 %3297
    %3299 = vrot.lane.b32.xlu0 %v723, 64
    %v3300 = vpop.permute.xlu0 %3299
    %3301 = vrot.lane.b32.xlu0 %v725, 64
    %v3302 = vpop.permute.xlu0 %3301
    %v3312 = vsel %vm116, %v2408, 0
    %3314 = vmatpush.msra.mxu0 0.0
    %3315 = vmatpush.msra.mxu0 0.0
    %3316 = vmatpush.msra.mxu0 0.0
    %3317 = vmatpush.msra.mxu0 0.0
    %3318 = vmatpush.msra.mxu0 0.0
    %3319 = vmatpush.msra.mxu0 0.0
    %3320 = vmatpush.msra.mxu0 0.0
    %3321 = vmatpush.msra.mxu0 0.0
    %3322 = vmatpush.msra.mxu0 %v3302
    %3323 = vmatpush.msra.mxu0 %v3300
    %3324 = vmatpush.msra.mxu0 %v3298
    %3325 = vmatpush.msra.mxu0 %v3296
    %3326 = vmatpush.msra.mxu0 %v3294
    %3327 = vmatpush.msra.mxu0 %v3292
    %3328 = vmatpush.msra.mxu0 %v3290
    %3329 = vmatpush.msra.mxu0 %v3288
    %3330 = vmatmul.f32.gmra.mxu0 %v3312
    %v3331 = vpop.f32.mrf.mxu0
    %v3332 = vadd.f32 0.0, %v3331
    %3333 = vdwg.mxu0
    %3334 = vrot.lane.b32.xlu0 %v727, 64
    %v3335 = vpop.permute.xlu0 %3334
    %3336 = vrot.lane.b32.xlu0 %v729, 64
    %v3337 = vpop.permute.xlu0 %3336
    %3338 = vrot.lane.b32.xlu0 %v731, 64
    %v3339 = vpop.permute.xlu0 %3338
    %3340 = vrot.lane.b32.xlu0 %v733, 64
    %v3341 = vpop.permute.xlu0 %3340
    %3342 = vrot.lane.b32.xlu0 %v735, 64
    %v3343 = vpop.permute.xlu0 %3342
    %3344 = vrot.lane.b32.xlu0 %v737, 64
    %v3345 = vpop.permute.xlu0 %3344
    %3346 = vrot.lane.b32.xlu0 %v739, 64
    %v3347 = vpop.permute.xlu0 %3346
    %3348 = vrot.lane.b32.xlu0 %v741, 64
    %v3349 = vpop.permute.xlu0 %3348
    %v3359 = vsel %vm116, %v2410, 0
    %3361 = vmatpush.msra.mxu0 0.0
    %3362 = vmatpush.msra.mxu0 0.0
    %3363 = vmatpush.msra.mxu0 0.0
    %3364 = vmatpush.msra.mxu0 0.0
    %3365 = vmatpush.msra.mxu0 0.0
    %3366 = vmatpush.msra.mxu0 0.0
    %3367 = vmatpush.msra.mxu0 0.0
    %3368 = vmatpush.msra.mxu0 0.0
    %3369 = vmatpush.msra.mxu0 %v3349
    %3370 = vmatpush.msra.mxu0 %v3347
    %3371 = vmatpush.msra.mxu0 %v3345
    %3372 = vmatpush.msra.mxu0 %v3343
    %3373 = vmatpush.msra.mxu0 %v3341
    %3374 = vmatpush.msra.mxu0 %v3339
    %3375 = vmatpush.msra.mxu0 %v3337
    %3376 = vmatpush.msra.mxu0 %v3335
    %3377 = vmatmul.f32.gmra.mxu0 %v3359
    %v3378 = vpop.f32.mrf.mxu0
    %v3379 = vadd.f32 0.0, %v3378
    %3380 = vdwg.mxu0
    %3381 = vrot.lane.b32.xlu0 %v743, 64
    %v3382 = vpop.permute.xlu0 %3381
    %3383 = vrot.lane.b32.xlu0 %v745, 64
    %v3384 = vpop.permute.xlu0 %3383
    %3385 = vrot.lane.b32.xlu0 %v747, 64
    %v3386 = vpop.permute.xlu0 %3385
    %3387 = vrot.lane.b32.xlu0 %v749, 64
    %v3388 = vpop.permute.xlu0 %3387
    %3389 = vrot.lane.b32.xlu0 %v751, 64
    %v3390 = vpop.permute.xlu0 %3389
    %3391 = vrot.lane.b32.xlu0 %v753, 64
    %v3392 = vpop.permute.xlu0 %3391
    %3393 = vrot.lane.b32.xlu0 %v755, 64
    %v3394 = vpop.permute.xlu0 %3393
    %3395 = vrot.lane.b32.xlu0 %v757, 64
    %v3396 = vpop.permute.xlu0 %3395
    %v3406 = vsel %vm116, %v2412, 0
    %3408 = vmatpush.msra.mxu0 0.0
    %3409 = vmatpush.msra.mxu0 0.0
    %3410 = vmatpush.msra.mxu0 0.0
    %3411 = vmatpush.msra.mxu0 0.0
    %3412 = vmatpush.msra.mxu0 0.0
    %3413 = vmatpush.msra.mxu0 0.0
    %3414 = vmatpush.msra.mxu0 0.0
    %3415 = vmatpush.msra.mxu0 0.0
    %3416 = vmatpush.msra.mxu0 %v3396
    %3417 = vmatpush.msra.mxu0 %v3394
    %3418 = vmatpush.msra.mxu0 %v3392
    %3419 = vmatpush.msra.mxu0 %v3390
    %3420 = vmatpush.msra.mxu0 %v3388
    %3421 = vmatpush.msra.mxu0 %v3386
    %3422 = vmatpush.msra.mxu0 %v3384
    %3423 = vmatpush.msra.mxu0 %v3382
    %3424 = vmatmul.f32.gmra.mxu0 %v3406
    %v3425 = vpop.f32.mrf.mxu0
    %v3426 = vadd.f32 0.0, %v3425
    %3427 = vdwg.mxu0
    %3428 = vrot.lane.b32.xlu0 %v759, 64
    %v3429 = vpop.permute.xlu0 %3428
    %3430 = vrot.lane.b32.xlu0 %v761, 64
    %v3431 = vpop.permute.xlu0 %3430
    %3432 = vrot.lane.b32.xlu0 %v763, 64
    %v3433 = vpop.permute.xlu0 %3432
    %3434 = vrot.lane.b32.xlu0 %v765, 64
    %v3435 = vpop.permute.xlu0 %3434
    %3436 = vrot.lane.b32.xlu0 %v767, 64
    %v3437 = vpop.permute.xlu0 %3436
    %3438 = vrot.lane.b32.xlu0 %v769, 64
    %v3439 = vpop.permute.xlu0 %3438
    %3440 = vrot.lane.b32.xlu0 %v771, 64
    %v3441 = vpop.permute.xlu0 %3440
    %3442 = vrot.lane.b32.xlu0 %v773, 64
    %v3443 = vpop.permute.xlu0 %3442
    %v3453 = vsel %vm116, %v2414, 0
    %3455 = vmatpush.msra.mxu0 0.0
    %3456 = vmatpush.msra.mxu0 0.0
    %3457 = vmatpush.msra.mxu0 0.0
    %3458 = vmatpush.msra.mxu0 0.0
    %3459 = vmatpush.msra.mxu0 0.0
    %3460 = vmatpush.msra.mxu0 0.0
    %3461 = vmatpush.msra.mxu0 0.0
    %3462 = vmatpush.msra.mxu0 0.0
    %3463 = vmatpush.msra.mxu0 %v3443
    %3464 = vmatpush.msra.mxu0 %v3441
    %3465 = vmatpush.msra.mxu0 %v3439
    %3466 = vmatpush.msra.mxu0 %v3437
    %3467 = vmatpush.msra.mxu0 %v3435
    %3468 = vmatpush.msra.mxu0 %v3433
    %3469 = vmatpush.msra.mxu0 %v3431
    %3470 = vmatpush.msra.mxu0 %v3429
    %3471 = vmatmul.f32.gmra.mxu0 %v3453
    %v3472 = vpop.f32.mrf.mxu0
    %v3473 = vadd.f32 0.0, %v3472
    %3474 = vdwg.mxu0
    %3475 = vrot.lane.b32.xlu0 %v775, 64
    %v3476 = vpop.permute.xlu0 %3475
    %3477 = vrot.lane.b32.xlu0 %v777, 64
    %v3478 = vpop.permute.xlu0 %3477
    %3479 = vrot.lane.b32.xlu0 %v779, 64
    %v3480 = vpop.permute.xlu0 %3479
    %3481 = vrot.lane.b32.xlu0 %v781, 64
    %v3482 = vpop.permute.xlu0 %3481
    %3483 = vrot.lane.b32.xlu0 %v783, 64
    %v3484 = vpop.permute.xlu0 %3483
    %3485 = vrot.lane.b32.xlu0 %v785, 64
    %v3486 = vpop.permute.xlu0 %3485
    %3487 = vrot.lane.b32.xlu0 %v787, 64
    %v3488 = vpop.permute.xlu0 %3487
    %3489 = vrot.lane.b32.xlu0 %v789, 64
    %v3490 = vpop.permute.xlu0 %3489
    %v3500 = vsel %vm116, %v2416, 0
    %3502 = vmatpush.msra.mxu0 0.0
    %3503 = vmatpush.msra.mxu0 0.0
    %3504 = vmatpush.msra.mxu0 0.0
    %3505 = vmatpush.msra.mxu0 0.0
    %3506 = vmatpush.msra.mxu0 0.0
    %3507 = vmatpush.msra.mxu0 0.0
    %3508 = vmatpush.msra.mxu0 0.0
    %3509 = vmatpush.msra.mxu0 0.0
    %3510 = vmatpush.msra.mxu0 %v3490
    %3511 = vmatpush.msra.mxu0 %v3488
    %3512 = vmatpush.msra.mxu0 %v3486
    %3513 = vmatpush.msra.mxu0 %v3484
    %3514 = vmatpush.msra.mxu0 %v3482
    %3515 = vmatpush.msra.mxu0 %v3480
    %3516 = vmatpush.msra.mxu0 %v3478
    %3517 = vmatpush.msra.mxu0 %v3476
    %3518 = vmatmul.f32.gmra.mxu0 %v3500
    %v3519 = vpop.f32.mrf.mxu0
    %v3520 = vadd.f32 0.0, %v3519
    %3521 = vdwg.mxu0
    %3522 = vrot.lane.b32.xlu0 %v791, 64
    %v3523 = vpop.permute.xlu0 %3522
    %3524 = vrot.lane.b32.xlu0 %v793, 64
    %v3525 = vpop.permute.xlu0 %3524
    %3526 = vrot.lane.b32.xlu0 %v795, 64
    %v3527 = vpop.permute.xlu0 %3526
    %3528 = vrot.lane.b32.xlu0 %v797, 64
    %v3529 = vpop.permute.xlu0 %3528
    %3530 = vrot.lane.b32.xlu0 %v799, 64
    %v3531 = vpop.permute.xlu0 %3530
    %3532 = vrot.lane.b32.xlu0 %v801, 64
    %v3533 = vpop.permute.xlu0 %3532
    %3534 = vrot.lane.b32.xlu0 %v803, 64
    %v3535 = vpop.permute.xlu0 %3534
    %3536 = vrot.lane.b32.xlu0 %v805, 64
    %v3537 = vpop.permute.xlu0 %3536
    %v3547 = vsel %vm116, %v2418, 0
    %3549 = vmatpush.msra.mxu0 0.0
    %3550 = vmatpush.msra.mxu0 0.0
    %3551 = vmatpush.msra.mxu0 0.0
    %3552 = vmatpush.msra.mxu0 0.0
    %3553 = vmatpush.msra.mxu0 0.0
    %3554 = vmatpush.msra.mxu0 0.0
    %3555 = vmatpush.msra.mxu0 0.0
    %3556 = vmatpush.msra.mxu0 0.0
    %3557 = vmatpush.msra.mxu0 %v3537
    %3558 = vmatpush.msra.mxu0 %v3535
    %3559 = vmatpush.msra.mxu0 %v3533
    %3560 = vmatpush.msra.mxu0 %v3531
    %3561 = vmatpush.msra.mxu0 %v3529
    %3562 = vmatpush.msra.mxu0 %v3527
    %3563 = vmatpush.msra.mxu0 %v3525
    %3564 = vmatpush.msra.mxu0 %v3523
    %3565 = vmatmul.f32.gmra.mxu0 %v3547
    %v3566 = vpop.f32.mrf.mxu0
    %v3567 = vadd.f32 0.0, %v3566
    %3568 = vdwg.mxu0
    %3569 = vrot.lane.b32.xlu0 %v807, 64
    %v3570 = vpop.permute.xlu0 %3569
    %3571 = vrot.lane.b32.xlu0 %v809, 64
    %v3572 = vpop.permute.xlu0 %3571
    %3573 = vrot.lane.b32.xlu0 %v811, 64
    %v3574 = vpop.permute.xlu0 %3573
    %3575 = vrot.lane.b32.xlu0 %v813, 64
    %v3576 = vpop.permute.xlu0 %3575
    %3577 = vrot.lane.b32.xlu0 %v815, 64
    %v3578 = vpop.permute.xlu0 %3577
    %3579 = vrot.lane.b32.xlu0 %v817, 64
    %v3580 = vpop.permute.xlu0 %3579
    %3581 = vrot.lane.b32.xlu0 %v819, 64
    %v3582 = vpop.permute.xlu0 %3581
    %3583 = vrot.lane.b32.xlu0 %v821, 64
    %v3584 = vpop.permute.xlu0 %3583
    %v3594 = vsel %vm116, %v2420, 0
    %3596 = vmatpush.msra.mxu0 0.0
    %3597 = vmatpush.msra.mxu0 0.0
    %3598 = vmatpush.msra.mxu0 0.0
    %3599 = vmatpush.msra.mxu0 0.0
    %3600 = vmatpush.msra.mxu0 0.0
    %3601 = vmatpush.msra.mxu0 0.0
    %3602 = vmatpush.msra.mxu0 0.0
    %3603 = vmatpush.msra.mxu0 0.0
    %3604 = vmatpush.msra.mxu0 %v3584
    %3605 = vmatpush.msra.mxu0 %v3582
    %3606 = vmatpush.msra.mxu0 %v3580
    %3607 = vmatpush.msra.mxu0 %v3578
    %3608 = vmatpush.msra.mxu0 %v3576
    %3609 = vmatpush.msra.mxu0 %v3574
    %3610 = vmatpush.msra.mxu0 %v3572
    %3611 = vmatpush.msra.mxu0 %v3570
    %3612 = vmatmul.f32.gmra.mxu0 %v3594
    %v3613 = vpop.f32.mrf.mxu0
    %v3614 = vadd.f32 0.0, %v3613
    %3615 = vdwg.mxu0
    %3616 = vrot.lane.b32.xlu0 %v823, 64
    %v3617 = vpop.permute.xlu0 %3616
    %3618 = vrot.lane.b32.xlu0 %v825, 64
    %v3619 = vpop.permute.xlu0 %3618
    %3620 = vrot.lane.b32.xlu0 %v827, 64
    %v3621 = vpop.permute.xlu0 %3620
    %3622 = vrot.lane.b32.xlu0 %v829, 64
    %v3623 = vpop.permute.xlu0 %3622
    %3624 = vrot.lane.b32.xlu0 %v831, 64
    %v3625 = vpop.permute.xlu0 %3624
    %3626 = vrot.lane.b32.xlu0 %v833, 64
    %v3627 = vpop.permute.xlu0 %3626
    %3628 = vrot.lane.b32.xlu0 %v835, 64
    %v3629 = vpop.permute.xlu0 %3628
    %3630 = vrot.lane.b32.xlu0 %v837, 64
    %v3631 = vpop.permute.xlu0 %3630
    %v3641 = vsel %vm116, %v2422, 0
    %3643 = vmatpush.msra.mxu0 0.0
    %3644 = vmatpush.msra.mxu0 0.0
    %3645 = vmatpush.msra.mxu0 0.0
    %3646 = vmatpush.msra.mxu0 0.0
    %3647 = vmatpush.msra.mxu0 0.0
    %3648 = vmatpush.msra.mxu0 0.0
    %3649 = vmatpush.msra.mxu0 0.0
    %3650 = vmatpush.msra.mxu0 0.0
    %3651 = vmatpush.msra.mxu0 %v3631
    %3652 = vmatpush.msra.mxu0 %v3629
    %3653 = vmatpush.msra.mxu0 %v3627
    %3654 = vmatpush.msra.mxu0 %v3625
    %3655 = vmatpush.msra.mxu0 %v3623
    %3656 = vmatpush.msra.mxu0 %v3621
    %3657 = vmatpush.msra.mxu0 %v3619
    %3658 = vmatpush.msra.mxu0 %v3617
    %3659 = vmatmul.f32.gmra.mxu0 %v3641
    %v3660 = vpop.f32.mrf.mxu0
    %v3661 = vadd.f32 0.0, %v3660
    %3662 = vdwg.mxu0
    %3663 = vrot.lane.b32.xlu0 %v839, 64
    %v3664 = vpop.permute.xlu0 %3663
    %3665 = vrot.lane.b32.xlu0 %v841, 64
    %v3666 = vpop.permute.xlu0 %3665
    %3667 = vrot.lane.b32.xlu0 %v843, 64
    %v3668 = vpop.permute.xlu0 %3667
    %3669 = vrot.lane.b32.xlu0 %v845, 64
    %v3670 = vpop.permute.xlu0 %3669
    %3671 = vrot.lane.b32.xlu0 %v847, 64
    %v3672 = vpop.permute.xlu0 %3671
    %3673 = vrot.lane.b32.xlu0 %v849, 64
    %v3674 = vpop.permute.xlu0 %3673
    %3675 = vrot.lane.b32.xlu0 %v851, 64
    %v3676 = vpop.permute.xlu0 %3675
    %3677 = vrot.lane.b32.xlu0 %v853, 64
    %v3678 = vpop.permute.xlu0 %3677
    %v3688 = vsel %vm116, %v2424, 0
    %3690 = vmatpush.msra.mxu0 0.0
    %3691 = vmatpush.msra.mxu0 0.0
    %3692 = vmatpush.msra.mxu0 0.0
    %3693 = vmatpush.msra.mxu0 0.0
    %3694 = vmatpush.msra.mxu0 0.0
    %3695 = vmatpush.msra.mxu0 0.0
    %3696 = vmatpush.msra.mxu0 0.0
    %3697 = vmatpush.msra.mxu0 0.0
    %3698 = vmatpush.msra.mxu0 %v3678
    %3699 = vmatpush.msra.mxu0 %v3676
    %3700 = vmatpush.msra.mxu0 %v3674
    %3701 = vmatpush.msra.mxu0 %v3672
    %3702 = vmatpush.msra.mxu0 %v3670
    %3703 = vmatpush.msra.mxu0 %v3668
    %3704 = vmatpush.msra.mxu0 %v3666
    %3705 = vmatpush.msra.mxu0 %v3664
    %3706 = vmatmul.f32.gmra.mxu0 %v3688
    %v3707 = vpop.f32.mrf.mxu0
    %v3708 = vadd.f32 0.0, %v3707
    %3709 = vdwg.mxu0
    %3710 = vrot.lane.b32.xlu0 %v855, 64
    %v3711 = vpop.permute.xlu0 %3710
    %3712 = vrot.lane.b32.xlu0 %v857, 64
    %v3713 = vpop.permute.xlu0 %3712
    %3714 = vrot.lane.b32.xlu0 %v859, 64
    %v3715 = vpop.permute.xlu0 %3714
    %3716 = vrot.lane.b32.xlu0 %v861, 64
    %v3717 = vpop.permute.xlu0 %3716
    %3718 = vrot.lane.b32.xlu0 %v863, 64
    %v3719 = vpop.permute.xlu0 %3718
    %3720 = vrot.lane.b32.xlu0 %v865, 64
    %v3721 = vpop.permute.xlu0 %3720
    %3722 = vrot.lane.b32.xlu0 %v867, 64
    %v3723 = vpop.permute.xlu0 %3722
    %3724 = vrot.lane.b32.xlu0 %v869, 64
    %v3725 = vpop.permute.xlu0 %3724
    %v3735 = vsel %vm116, %v2426, 0
    %3737 = vmatpush.msra.mxu0 0.0
    %3738 = vmatpush.msra.mxu0 0.0
    %3739 = vmatpush.msra.mxu0 0.0
    %3740 = vmatpush.msra.mxu0 0.0
    %3741 = vmatpush.msra.mxu0 0.0
    %3742 = vmatpush.msra.mxu0 0.0
    %3743 = vmatpush.msra.mxu0 0.0
    %3744 = vmatpush.msra.mxu0 0.0
    %3745 = vmatpush.msra.mxu0 %v3725
    %3746 = vmatpush.msra.mxu0 %v3723
    %3747 = vmatpush.msra.mxu0 %v3721
    %3748 = vmatpush.msra.mxu0 %v3719
    %3749 = vmatpush.msra.mxu0 %v3717
    %3750 = vmatpush.msra.mxu0 %v3715
    %3751 = vmatpush.msra.mxu0 %v3713
    %3752 = vmatpush.msra.mxu0 %v3711
    %3753 = vmatmul.f32.gmra.mxu0 %v3735
    %v3754 = vpop.f32.mrf.mxu0
    %v3755 = vadd.f32 0.0, %v3754
    %3756 = vdwg.mxu0
    %3757 = vrot.lane.b32.xlu0 %v871, 64
    %v3758 = vpop.permute.xlu0 %3757
    %3759 = vrot.lane.b32.xlu0 %v873, 64
    %v3760 = vpop.permute.xlu0 %3759
    %3761 = vrot.lane.b32.xlu0 %v875, 64
    %v3762 = vpop.permute.xlu0 %3761
    %3763 = vrot.lane.b32.xlu0 %v877, 64
    %v3764 = vpop.permute.xlu0 %3763
    %3765 = vrot.lane.b32.xlu0 %v879, 64
    %v3766 = vpop.permute.xlu0 %3765
    %3767 = vrot.lane.b32.xlu0 %v881, 64
    %v3768 = vpop.permute.xlu0 %3767
    %3769 = vrot.lane.b32.xlu0 %v883, 64
    %v3770 = vpop.permute.xlu0 %3769
    %3771 = vrot.lane.b32.xlu0 %v885, 64
    %v3772 = vpop.permute.xlu0 %3771
    %v3782 = vsel %vm116, %v2428, 0
    %3784 = vmatpush.msra.mxu0 0.0
    %3785 = vmatpush.msra.mxu0 0.0
    %3786 = vmatpush.msra.mxu0 0.0
    %3787 = vmatpush.msra.mxu0 0.0
    %3788 = vmatpush.msra.mxu0 0.0
    %3789 = vmatpush.msra.mxu0 0.0
    %3790 = vmatpush.msra.mxu0 0.0
    %3791 = vmatpush.msra.mxu0 0.0
    %3792 = vmatpush.msra.mxu0 %v3772
    %3793 = vmatpush.msra.mxu0 %v3770
    %3794 = vmatpush.msra.mxu0 %v3768
    %3795 = vmatpush.msra.mxu0 %v3766
    %3796 = vmatpush.msra.mxu0 %v3764
    %3797 = vmatpush.msra.mxu0 %v3762
    %3798 = vmatpush.msra.mxu0 %v3760
    %3799 = vmatpush.msra.mxu0 %v3758
    %3800 = vmatmul.f32.gmra.mxu0 %v3782
    %v3801 = vpop.f32.mrf.mxu0
    %v3802 = vadd.f32 0.0, %v3801
    %3803 = vdwg.mxu0
    %3804 = vrot.lane.b32.xlu0 %v887, 64
    %v3805 = vpop.permute.xlu0 %3804
    %3806 = vrot.lane.b32.xlu0 %v889, 64
    %v3807 = vpop.permute.xlu0 %3806
    %3808 = vrot.lane.b32.xlu0 %v891, 64
    %v3809 = vpop.permute.xlu0 %3808
    %3810 = vrot.lane.b32.xlu0 %v893, 64
    %v3811 = vpop.permute.xlu0 %3810
    %3812 = vrot.lane.b32.xlu0 %v895, 64
    %v3813 = vpop.permute.xlu0 %3812
    %3814 = vrot.lane.b32.xlu0 %v897, 64
    %v3815 = vpop.permute.xlu0 %3814
    %3816 = vrot.lane.b32.xlu0 %v899, 64
    %v3817 = vpop.permute.xlu0 %3816
    %3818 = vrot.lane.b32.xlu0 %v901, 64
    %v3819 = vpop.permute.xlu0 %3818
    %v3829 = vsel %vm116, %v2430, 0
    %3831 = vmatpush.msra.mxu0 0.0
    %3832 = vmatpush.msra.mxu0 0.0
    %3833 = vmatpush.msra.mxu0 0.0
    %3834 = vmatpush.msra.mxu0 0.0
    %3835 = vmatpush.msra.mxu0 0.0
    %3836 = vmatpush.msra.mxu0 0.0
    %3837 = vmatpush.msra.mxu0 0.0
    %3838 = vmatpush.msra.mxu0 0.0
    %3839 = vmatpush.msra.mxu0 %v3819
    %3840 = vmatpush.msra.mxu0 %v3817
    %3841 = vmatpush.msra.mxu0 %v3815
    %3842 = vmatpush.msra.mxu0 %v3813
    %3843 = vmatpush.msra.mxu0 %v3811
    %3844 = vmatpush.msra.mxu0 %v3809
    %3845 = vmatpush.msra.mxu0 %v3807
    %3846 = vmatpush.msra.mxu0 %v3805
    %3847 = vmatmul.f32.gmra.mxu0 %v3829
    %v3848 = vpop.f32.mrf.mxu0
    %v3849 = vadd.f32 0.0, %v3848
    %3850 = vdwg.mxu0
    %3851 = vrot.lane.b32.xlu0 %v903, 64
    %v3852 = vpop.permute.xlu0 %3851
    %3853 = vrot.lane.b32.xlu0 %v905, 64
    %v3854 = vpop.permute.xlu0 %3853
    %3855 = vrot.lane.b32.xlu0 %v907, 64
    %v3856 = vpop.permute.xlu0 %3855
    %3857 = vrot.lane.b32.xlu0 %v909, 64
    %v3858 = vpop.permute.xlu0 %3857
    %3859 = vrot.lane.b32.xlu0 %v911, 64
    %v3860 = vpop.permute.xlu0 %3859
    %3861 = vrot.lane.b32.xlu0 %v913, 64
    %v3862 = vpop.permute.xlu0 %3861
    %3863 = vrot.lane.b32.xlu0 %v915, 64
    %v3864 = vpop.permute.xlu0 %3863
    %3865 = vrot.lane.b32.xlu0 %v917, 64
    %v3866 = vpop.permute.xlu0 %3865
    %v3876 = vsel %vm116, %v2432, 0
    %3878 = vmatpush.msra.mxu0 0.0
    %3879 = vmatpush.msra.mxu0 0.0
    %3880 = vmatpush.msra.mxu0 0.0
    %3881 = vmatpush.msra.mxu0 0.0
    %3882 = vmatpush.msra.mxu0 0.0
    %3883 = vmatpush.msra.mxu0 0.0
    %3884 = vmatpush.msra.mxu0 0.0
    %3885 = vmatpush.msra.mxu0 0.0
    %3886 = vmatpush.msra.mxu0 %v3866
    %3887 = vmatpush.msra.mxu0 %v3864
    %3888 = vmatpush.msra.mxu0 %v3862
    %3889 = vmatpush.msra.mxu0 %v3860
    %3890 = vmatpush.msra.mxu0 %v3858
    %3891 = vmatpush.msra.mxu0 %v3856
    %3892 = vmatpush.msra.mxu0 %v3854
    %3893 = vmatpush.msra.mxu0 %v3852
    %3894 = vmatmul.f32.gmra.mxu0 %v3876
    %v3895 = vpop.f32.mrf.mxu0
    %v3896 = vadd.f32 0.0, %v3895
    %3897 = vdwg.mxu0
    %3898 = vrot.lane.b32.xlu0 %v919, 64
    %v3899 = vpop.permute.xlu0 %3898
    %3900 = vrot.lane.b32.xlu0 %v921, 64
    %v3901 = vpop.permute.xlu0 %3900
    %3902 = vrot.lane.b32.xlu0 %v923, 64
    %v3903 = vpop.permute.xlu0 %3902
    %3904 = vrot.lane.b32.xlu0 %v925, 64
    %v3905 = vpop.permute.xlu0 %3904
    %3906 = vrot.lane.b32.xlu0 %v927, 64
    %v3907 = vpop.permute.xlu0 %3906
    %3908 = vrot.lane.b32.xlu0 %v929, 64
    %v3909 = vpop.permute.xlu0 %3908
    %3910 = vrot.lane.b32.xlu0 %v931, 64
    %v3911 = vpop.permute.xlu0 %3910
    %3912 = vrot.lane.b32.xlu0 %v933, 64
    %v3913 = vpop.permute.xlu0 %3912
    %v3923 = vsel %vm116, %v2434, 0
    %3925 = vmatpush.msra.mxu0 0.0
    %3926 = vmatpush.msra.mxu0 0.0
    %3927 = vmatpush.msra.mxu0 0.0
    %3928 = vmatpush.msra.mxu0 0.0
    %3929 = vmatpush.msra.mxu0 0.0
    %3930 = vmatpush.msra.mxu0 0.0
    %3931 = vmatpush.msra.mxu0 0.0
    %3932 = vmatpush.msra.mxu0 0.0
    %3933 = vmatpush.msra.mxu0 %v3913
    %3934 = vmatpush.msra.mxu0 %v3911
    %3935 = vmatpush.msra.mxu0 %v3909
    %3936 = vmatpush.msra.mxu0 %v3907
    %3937 = vmatpush.msra.mxu0 %v3905
    %3938 = vmatpush.msra.mxu0 %v3903
    %3939 = vmatpush.msra.mxu0 %v3901
    %3940 = vmatpush.msra.mxu0 %v3899
    %3941 = vmatmul.f32.gmra.mxu0 %v3923
    %v3942 = vpop.f32.mrf.mxu0
    %v3943 = vadd.f32 0.0, %v3942
    %3944 = vdwg.mxu0
    %3945 = vrot.lane.b32.xlu0 %v935, 64
    %v3946 = vpop.permute.xlu0 %3945
    %3947 = vrot.lane.b32.xlu0 %v937, 64
    %v3948 = vpop.permute.xlu0 %3947
    %3949 = vrot.lane.b32.xlu0 %v939, 64
    %v3950 = vpop.permute.xlu0 %3949
    %3951 = vrot.lane.b32.xlu0 %v941, 64
    %v3952 = vpop.permute.xlu0 %3951
    %3953 = vrot.lane.b32.xlu0 %v943, 64
    %v3954 = vpop.permute.xlu0 %3953
    %3955 = vrot.lane.b32.xlu0 %v945, 64
    %v3956 = vpop.permute.xlu0 %3955
    %3957 = vrot.lane.b32.xlu0 %v947, 64
    %v3958 = vpop.permute.xlu0 %3957
    %3959 = vrot.lane.b32.xlu0 %v949, 64
    %v3960 = vpop.permute.xlu0 %3959
    %v3970 = vsel %vm116, %v2436, 0
    %3972 = vmatpush.msra.mxu0 0.0
    %3973 = vmatpush.msra.mxu0 0.0
    %3974 = vmatpush.msra.mxu0 0.0
    %3975 = vmatpush.msra.mxu0 0.0
    %3976 = vmatpush.msra.mxu0 0.0
    %3977 = vmatpush.msra.mxu0 0.0
    %3978 = vmatpush.msra.mxu0 0.0
    %3979 = vmatpush.msra.mxu0 0.0
    %3980 = vmatpush.msra.mxu0 %v3960
    %3981 = vmatpush.msra.mxu0 %v3958
    %3982 = vmatpush.msra.mxu0 %v3956
    %3983 = vmatpush.msra.mxu0 %v3954
    %3984 = vmatpush.msra.mxu0 %v3952
    %3985 = vmatpush.msra.mxu0 %v3950
    %3986 = vmatpush.msra.mxu0 %v3948
    %3987 = vmatpush.msra.mxu0 %v3946
    %3988 = vmatmul.f32.gmra.mxu0 %v3970
    %v3989 = vpop.f32.mrf.mxu0
    %v3990 = vadd.f32 0.0, %v3989
    %3991 = vdwg.mxu0
    %3992 = vrot.lane.b32.xlu0 %v951, 64
    %v3993 = vpop.permute.xlu0 %3992
    %3994 = vrot.lane.b32.xlu0 %v953, 64
    %v3995 = vpop.permute.xlu0 %3994
    %3996 = vrot.lane.b32.xlu0 %v955, 64
    %v3997 = vpop.permute.xlu0 %3996
    %3998 = vrot.lane.b32.xlu0 %v957, 64
    %v3999 = vpop.permute.xlu0 %3998
    %4000 = vrot.lane.b32.xlu0 %v959, 64
    %v4001 = vpop.permute.xlu0 %4000
    %4002 = vrot.lane.b32.xlu0 %v961, 64
    %v4003 = vpop.permute.xlu0 %4002
    %4004 = vrot.lane.b32.xlu0 %v963, 64
    %v4005 = vpop.permute.xlu0 %4004
    %4006 = vrot.lane.b32.xlu0 %v965, 64
    %v4007 = vpop.permute.xlu0 %4006
    %v4017 = vsel %vm116, %v2438, 0
    %4019 = vmatpush.msra.mxu0 0.0
    %4020 = vmatpush.msra.mxu0 0.0
    %4021 = vmatpush.msra.mxu0 0.0
    %4022 = vmatpush.msra.mxu0 0.0
    %4023 = vmatpush.msra.mxu0 0.0
    %4024 = vmatpush.msra.mxu0 0.0
    %4025 = vmatpush.msra.mxu0 0.0
    %4026 = vmatpush.msra.mxu0 0.0
    %4027 = vmatpush.msra.mxu0 %v4007
    %4028 = vmatpush.msra.mxu0 %v4005
    %4029 = vmatpush.msra.mxu0 %v4003
    %4030 = vmatpush.msra.mxu0 %v4001
    %4031 = vmatpush.msra.mxu0 %v3999
    %4032 = vmatpush.msra.mxu0 %v3997
    %4033 = vmatpush.msra.mxu0 %v3995
    %4034 = vmatpush.msra.mxu0 %v3993
    %4035 = vmatmul.f32.gmra.mxu0 %v4017
    %v4036 = vpop.f32.mrf.mxu0
    %v4037 = vadd.f32 0.0, %v4036
    %4038 = vdwg.mxu0
    %v4039 = vrcp.pop %v2441
    %v4040 = vmul.f32 %v2441, %v4039
    %v4041 = vsub.f32 1.0, %v4040
    %v4042 = vmul.f32 %v4039, %v4041
    %v4043 = vadd.f32 %v4039, %v4042
    %vm4044 = vweird.f32 %v2441
    %vm4045 = vweird.f32 %v4039
    %vm4046 = vmor %vm4044, %vm4045
    %v4047 = vsel %vm4046, %v4039, %v4043
    %v4048 = vand.u32 2147483647, %v2441
    %vm4049 = vcmp.eq.f32.partialorder %v4048, 8.507059e+37
    %v4050 = vand.u32 %v2441, 2147483648
    %v4051 = vor.u32 1.1754944e-38, %v4050
    %v4052 = vsel %vm4049, %v4051, %v4047
    %v4053 = vrcp.pop %v2444
    %v4054 = vmul.f32 %v2444, %v4053
    %v4055 = vsub.f32 1.0, %v4054
    %v4056 = vmul.f32 %v4053, %v4055
    %v4057 = vadd.f32 %v4053, %v4056
    %vm4058 = vweird.f32 %v2444
    %vm4059 = vweird.f32 %v4053
    %vm4060 = vmor %vm4058, %vm4059
    %v4061 = vsel %vm4060, %v4053, %v4057
    %v4062 = vand.u32 2147483647, %v2444
    %vm4063 = vcmp.eq.f32.partialorder %v4062, 8.507059e+37
    %v4064 = vand.u32 %v2444, 2147483648
    %v4065 = vor.u32 1.1754944e-38, %v4064
    %v4066 = vsel %vm4063, %v4065, %v4061
    %v4067 = vrcp.pop %v2447
    %v4068 = vmul.f32 %v2447, %v4067
    %v4069 = vsub.f32 1.0, %v4068
    %v4070 = vmul.f32 %v4067, %v4069
    %v4071 = vadd.f32 %v4067, %v4070
    %vm4072 = vweird.f32 %v2447
    %vm4073 = vweird.f32 %v4067
    %vm4074 = vmor %vm4072, %vm4073
    %v4075 = vsel %vm4074, %v4067, %v4071
    %v4076 = vand.u32 2147483647, %v2447
    %vm4077 = vcmp.eq.f32.partialorder %v4076, 8.507059e+37
    %v4078 = vand.u32 %v2447, 2147483648
    %v4079 = vor.u32 1.1754944e-38, %v4078
    %v4080 = vsel %vm4077, %v4079, %v4075
    %v4081 = vrcp.pop %v2450
    %v4082 = vmul.f32 %v2450, %v4081
    %v4083 = vsub.f32 1.0, %v4082
    %v4084 = vmul.f32 %v4081, %v4083
    %v4085 = vadd.f32 %v4081, %v4084
    %vm4086 = vweird.f32 %v2450
    %vm4087 = vweird.f32 %v4081
    %vm4088 = vmor %vm4086, %vm4087
    %v4089 = vsel %vm4088, %v4081, %v4085
    %v4090 = vand.u32 2147483647, %v2450
    %vm4091 = vcmp.eq.f32.partialorder %v4090, 8.507059e+37
    %v4092 = vand.u32 %v2450, 2147483648
    %v4093 = vor.u32 1.1754944e-38, %v4092
    %v4094 = vsel %vm4091, %v4093, %v4089
    %v4095 = vrcp.pop %v2453
    %v4096 = vmul.f32 %v2453, %v4095
    %v4097 = vsub.f32 1.0, %v4096
    %v4098 = vmul.f32 %v4095, %v4097
    %v4099 = vadd.f32 %v4095, %v4098
    %vm4100 = vweird.f32 %v2453
    %vm4101 = vweird.f32 %v4095
    %vm4102 = vmor %vm4100, %vm4101
    %v4103 = vsel %vm4102, %v4095, %v4099
    %v4104 = vand.u32 2147483647, %v2453
    %vm4105 = vcmp.eq.f32.partialorder %v4104, 8.507059e+37
    %v4106 = vand.u32 %v2453, 2147483648
    %v4107 = vor.u32 1.1754944e-38, %v4106
    %v4108 = vsel %vm4105, %v4107, %v4103
    %v4109 = vrcp.pop %v2456
    %v4110 = vmul.f32 %v2456, %v4109
    %v4111 = vsub.f32 1.0, %v4110
    %v4112 = vmul.f32 %v4109, %v4111
    %v4113 = vadd.f32 %v4109, %v4112
    %vm4114 = vweird.f32 %v2456
    %vm4115 = vweird.f32 %v4109
    %vm4116 = vmor %vm4114, %vm4115
    %v4117 = vsel %vm4116, %v4109, %v4113
    %v4118 = vand.u32 2147483647, %v2456
    %vm4119 = vcmp.eq.f32.partialorder %v4118, 8.507059e+37
    %v4120 = vand.u32 %v2456, 2147483648
    %v4121 = vor.u32 1.1754944e-38, %v4120
    %v4122 = vsel %vm4119, %v4121, %v4117
    %v4123 = vrcp.pop %v2459
    %v4124 = vmul.f32 %v2459, %v4123
    %v4125 = vsub.f32 1.0, %v4124
    %v4126 = vmul.f32 %v4123, %v4125
    %v4127 = vadd.f32 %v4123, %v4126
    %vm4128 = vweird.f32 %v2459
    %vm4129 = vweird.f32 %v4123
    %vm4130 = vmor %vm4128, %vm4129
    %v4131 = vsel %vm4130, %v4123, %v4127
    %v4132 = vand.u32 2147483647, %v2459
    %vm4133 = vcmp.eq.f32.partialorder %v4132, 8.507059e+37
    %v4134 = vand.u32 %v2459, 2147483648
    %v4135 = vor.u32 1.1754944e-38, %v4134
    %v4136 = vsel %vm4133, %v4135, %v4131
    %v4137 = vrcp.pop %v2462
    %v4138 = vmul.f32 %v2462, %v4137
    %v4139 = vsub.f32 1.0, %v4138
    %v4140 = vmul.f32 %v4137, %v4139
    %v4141 = vadd.f32 %v4137, %v4140
    %vm4142 = vweird.f32 %v2462
    %vm4143 = vweird.f32 %v4137
    %vm4144 = vmor %vm4142, %vm4143
    %v4145 = vsel %vm4144, %v4137, %v4141
    %v4146 = vand.u32 2147483647, %v2462
    %vm4147 = vcmp.eq.f32.partialorder %v4146, 8.507059e+37
    %v4148 = vand.u32 %v2462, 2147483648
    %v4149 = vor.u32 1.1754944e-38, %v4148
    %v4150 = vsel %vm4147, %v4149, %v4145
    %v4151 = vrcp.pop %v2465
    %v4152 = vmul.f32 %v2465, %v4151
    %v4153 = vsub.f32 1.0, %v4152
    %v4154 = vmul.f32 %v4151, %v4153
    %v4155 = vadd.f32 %v4151, %v4154
    %vm4156 = vweird.f32 %v2465
    %vm4157 = vweird.f32 %v4151
    %vm4158 = vmor %vm4156, %vm4157
    %v4159 = vsel %vm4158, %v4151, %v4155
    %v4160 = vand.u32 2147483647, %v2465
    %vm4161 = vcmp.eq.f32.partialorder %v4160, 8.507059e+37
    %v4162 = vand.u32 %v2465, 2147483648
    %v4163 = vor.u32 1.1754944e-38, %v4162
    %v4164 = vsel %vm4161, %v4163, %v4159
    %v4165 = vrcp.pop %v2468
    %v4166 = vmul.f32 %v2468, %v4165
    %v4167 = vsub.f32 1.0, %v4166
    %v4168 = vmul.f32 %v4165, %v4167
    %v4169 = vadd.f32 %v4165, %v4168
    %vm4170 = vweird.f32 %v2468
    %vm4171 = vweird.f32 %v4165
    %vm4172 = vmor %vm4170, %vm4171
    %v4173 = vsel %vm4172, %v4165, %v4169
    %v4174 = vand.u32 2147483647, %v2468
    %vm4175 = vcmp.eq.f32.partialorder %v4174, 8.507059e+37
    %v4176 = vand.u32 %v2468, 2147483648
    %v4177 = vor.u32 1.1754944e-38, %v4176
    %v4178 = vsel %vm4175, %v4177, %v4173
    %v4179 = vrcp.pop %v2471
    %v4180 = vmul.f32 %v2471, %v4179
    %v4181 = vsub.f32 1.0, %v4180
    %v4182 = vmul.f32 %v4179, %v4181
    %v4183 = vadd.f32 %v4179, %v4182
    %vm4184 = vweird.f32 %v2471
    %vm4185 = vweird.f32 %v4179
    %vm4186 = vmor %vm4184, %vm4185
    %v4187 = vsel %vm4186, %v4179, %v4183
    %v4188 = vand.u32 2147483647, %v2471
    %vm4189 = vcmp.eq.f32.partialorder %v4188, 8.507059e+37
    %v4190 = vand.u32 %v2471, 2147483648
    %v4191 = vor.u32 1.1754944e-38, %v4190
    %v4192 = vsel %vm4189, %v4191, %v4187
    %v4193 = vrcp.pop %v2474
    %v4194 = vmul.f32 %v2474, %v4193
    %v4195 = vsub.f32 1.0, %v4194
    %v4196 = vmul.f32 %v4193, %v4195
    %v4197 = vadd.f32 %v4193, %v4196
    %vm4198 = vweird.f32 %v2474
    %vm4199 = vweird.f32 %v4193
    %vm4200 = vmor %vm4198, %vm4199
    %v4201 = vsel %vm4200, %v4193, %v4197
    %v4202 = vand.u32 2147483647, %v2474
    %vm4203 = vcmp.eq.f32.partialorder %v4202, 8.507059e+37
    %v4204 = vand.u32 %v2474, 2147483648
    %v4205 = vor.u32 1.1754944e-38, %v4204
    %v4206 = vsel %vm4203, %v4205, %v4201
    %v4207 = vrcp.pop %v2477
    %v4208 = vmul.f32 %v2477, %v4207
    %v4209 = vsub.f32 1.0, %v4208
    %v4210 = vmul.f32 %v4207, %v4209
    %v4211 = vadd.f32 %v4207, %v4210
    %vm4212 = vweird.f32 %v2477
    %vm4213 = vweird.f32 %v4207
    %vm4214 = vmor %vm4212, %vm4213
    %v4215 = vsel %vm4214, %v4207, %v4211
    %v4216 = vand.u32 2147483647, %v2477
    %vm4217 = vcmp.eq.f32.partialorder %v4216, 8.507059e+37
    %v4218 = vand.u32 %v2477, 2147483648
    %v4219 = vor.u32 1.1754944e-38, %v4218
    %v4220 = vsel %vm4217, %v4219, %v4215
    %v4221 = vrcp.pop %v2480
    %v4222 = vmul.f32 %v2480, %v4221
    %v4223 = vsub.f32 1.0, %v4222
    %v4224 = vmul.f32 %v4221, %v4223
    %v4225 = vadd.f32 %v4221, %v4224
    %vm4226 = vweird.f32 %v2480
    %vm4227 = vweird.f32 %v4221
    %vm4228 = vmor %vm4226, %vm4227
    %v4229 = vsel %vm4228, %v4221, %v4225
    %v4230 = vand.u32 2147483647, %v2480
    %vm4231 = vcmp.eq.f32.partialorder %v4230, 8.507059e+37
    %v4232 = vand.u32 %v2480, 2147483648
    %v4233 = vor.u32 1.1754944e-38, %v4232
    %v4234 = vsel %vm4231, %v4233, %v4229
    %v4235 = vrcp.pop %v2483
    %v4236 = vmul.f32 %v2483, %v4235
    %v4237 = vsub.f32 1.0, %v4236
    %v4238 = vmul.f32 %v4235, %v4237
    %v4239 = vadd.f32 %v4235, %v4238
    %vm4240 = vweird.f32 %v2483
    %vm4241 = vweird.f32 %v4235
    %vm4242 = vmor %vm4240, %vm4241
    %v4243 = vsel %vm4242, %v4235, %v4239
    %v4244 = vand.u32 2147483647, %v2483
    %vm4245 = vcmp.eq.f32.partialorder %v4244, 8.507059e+37
    %v4246 = vand.u32 %v2483, 2147483648
    %v4247 = vor.u32 1.1754944e-38, %v4246
    %v4248 = vsel %vm4245, %v4247, %v4243
    %v4249 = vrcp.pop %v2486
    %v4250 = vmul.f32 %v2486, %v4249
    %v4251 = vsub.f32 1.0, %v4250
    %v4252 = vmul.f32 %v4249, %v4251
    %v4253 = vadd.f32 %v4249, %v4252
    %vm4254 = vweird.f32 %v2486
    %vm4255 = vweird.f32 %v4249
    %vm4256 = vmor %vm4254, %vm4255
    %v4257 = vsel %vm4256, %v4249, %v4253
    %v4258 = vand.u32 2147483647, %v2486
    %vm4259 = vcmp.eq.f32.partialorder %v4258, 8.507059e+37
    %v4260 = vand.u32 %v2486, 2147483648
    %v4261 = vor.u32 1.1754944e-38, %v4260
    %v4262 = vsel %vm4259, %v4261, %v4257
    %v4263 = vrcp.pop %v2489
    %v4264 = vmul.f32 %v2489, %v4263
    %v4265 = vsub.f32 1.0, %v4264
    %v4266 = vmul.f32 %v4263, %v4265
    %v4267 = vadd.f32 %v4263, %v4266
    %vm4268 = vweird.f32 %v2489
    %vm4269 = vweird.f32 %v4263
    %vm4270 = vmor %vm4268, %vm4269
    %v4271 = vsel %vm4270, %v4263, %v4267
    %v4272 = vand.u32 2147483647, %v2489
    %vm4273 = vcmp.eq.f32.partialorder %v4272, 8.507059e+37
    %v4274 = vand.u32 %v2489, 2147483648
    %v4275 = vor.u32 1.1754944e-38, %v4274
    %v4276 = vsel %vm4273, %v4275, %v4271
    %v4277 = vrcp.pop %v2492
    %v4278 = vmul.f32 %v2492, %v4277
    %v4279 = vsub.f32 1.0, %v4278
    %v4280 = vmul.f32 %v4277, %v4279
    %v4281 = vadd.f32 %v4277, %v4280
    %vm4282 = vweird.f32 %v2492
    %vm4283 = vweird.f32 %v4277
    %vm4284 = vmor %vm4282, %vm4283
    %v4285 = vsel %vm4284, %v4277, %v4281
    %v4286 = vand.u32 2147483647, %v2492
    %vm4287 = vcmp.eq.f32.partialorder %v4286, 8.507059e+37
    %v4288 = vand.u32 %v2492, 2147483648
    %v4289 = vor.u32 1.1754944e-38, %v4288
    %v4290 = vsel %vm4287, %v4289, %v4285
    %v4291 = vrcp.pop %v2495
    %v4292 = vmul.f32 %v2495, %v4291
    %v4293 = vsub.f32 1.0, %v4292
    %v4294 = vmul.f32 %v4291, %v4293
    %v4295 = vadd.f32 %v4291, %v4294
    %vm4296 = vweird.f32 %v2495
    %vm4297 = vweird.f32 %v4291
    %vm4298 = vmor %vm4296, %vm4297
    %v4299 = vsel %vm4298, %v4291, %v4295
    %v4300 = vand.u32 2147483647, %v2495
    %vm4301 = vcmp.eq.f32.partialorder %v4300, 8.507059e+37
    %v4302 = vand.u32 %v2495, 2147483648
    %v4303 = vor.u32 1.1754944e-38, %v4302
    %v4304 = vsel %vm4301, %v4303, %v4299
    %v4305 = vrcp.pop %v2498
    %v4306 = vmul.f32 %v2498, %v4305
    %v4307 = vsub.f32 1.0, %v4306
    %v4308 = vmul.f32 %v4305, %v4307
    %v4309 = vadd.f32 %v4305, %v4308
    %vm4310 = vweird.f32 %v2498
    %vm4311 = vweird.f32 %v4305
    %vm4312 = vmor %vm4310, %vm4311
    %v4313 = vsel %vm4312, %v4305, %v4309
    %v4314 = vand.u32 2147483647, %v2498
    %vm4315 = vcmp.eq.f32.partialorder %v4314, 8.507059e+37
    %v4316 = vand.u32 %v2498, 2147483648
    %v4317 = vor.u32 1.1754944e-38, %v4316
    %v4318 = vsel %vm4315, %v4317, %v4313
    %v4319 = vrcp.pop %v2501
    %v4320 = vmul.f32 %v2501, %v4319
    %v4321 = vsub.f32 1.0, %v4320
    %v4322 = vmul.f32 %v4319, %v4321
    %v4323 = vadd.f32 %v4319, %v4322
    %vm4324 = vweird.f32 %v2501
    %vm4325 = vweird.f32 %v4319
    %vm4326 = vmor %vm4324, %vm4325
    %v4327 = vsel %vm4326, %v4319, %v4323
    %v4328 = vand.u32 2147483647, %v2501
    %vm4329 = vcmp.eq.f32.partialorder %v4328, 8.507059e+37
    %v4330 = vand.u32 %v2501, 2147483648
    %v4331 = vor.u32 1.1754944e-38, %v4330
    %v4332 = vsel %vm4329, %v4331, %v4327
    %v4333 = vrcp.pop %v2504
    %v4334 = vmul.f32 %v2504, %v4333
    %v4335 = vsub.f32 1.0, %v4334
    %v4336 = vmul.f32 %v4333, %v4335
    %v4337 = vadd.f32 %v4333, %v4336
    %vm4338 = vweird.f32 %v2504
    %vm4339 = vweird.f32 %v4333
    %vm4340 = vmor %vm4338, %vm4339
    %v4341 = vsel %vm4340, %v4333, %v4337
    %v4342 = vand.u32 2147483647, %v2504
    %vm4343 = vcmp.eq.f32.partialorder %v4342, 8.507059e+37
    %v4344 = vand.u32 %v2504, 2147483648
    %v4345 = vor.u32 1.1754944e-38, %v4344
    %v4346 = vsel %vm4343, %v4345, %v4341
    %v4347 = vrcp.pop %v2507
    %v4348 = vmul.f32 %v2507, %v4347
    %v4349 = vsub.f32 1.0, %v4348
    %v4350 = vmul.f32 %v4347, %v4349
    %v4351 = vadd.f32 %v4347, %v4350
    %vm4352 = vweird.f32 %v2507
    %vm4353 = vweird.f32 %v4347
    %vm4354 = vmor %vm4352, %vm4353
    %v4355 = vsel %vm4354, %v4347, %v4351
    %v4356 = vand.u32 2147483647, %v2507
    %vm4357 = vcmp.eq.f32.partialorder %v4356, 8.507059e+37
    %v4358 = vand.u32 %v2507, 2147483648
    %v4359 = vor.u32 1.1754944e-38, %v4358
    %v4360 = vsel %vm4357, %v4359, %v4355
    %v4361 = vrcp.pop %v2510
    %v4362 = vmul.f32 %v2510, %v4361
    %v4363 = vsub.f32 1.0, %v4362
    %v4364 = vmul.f32 %v4361, %v4363
    %v4365 = vadd.f32 %v4361, %v4364
    %vm4366 = vweird.f32 %v2510
    %vm4367 = vweird.f32 %v4361
    %vm4368 = vmor %vm4366, %vm4367
    %v4369 = vsel %vm4368, %v4361, %v4365
    %v4370 = vand.u32 2147483647, %v2510
    %vm4371 = vcmp.eq.f32.partialorder %v4370, 8.507059e+37
    %v4372 = vand.u32 %v2510, 2147483648
    %v4373 = vor.u32 1.1754944e-38, %v4372
    %v4374 = vsel %vm4371, %v4373, %v4369
    %v4375 = vrcp.pop %v2513
    %v4376 = vmul.f32 %v2513, %v4375
    %v4377 = vsub.f32 1.0, %v4376
    %v4378 = vmul.f32 %v4375, %v4377
    %v4379 = vadd.f32 %v4375, %v4378
    %vm4380 = vweird.f32 %v2513
    %vm4381 = vweird.f32 %v4375
    %vm4382 = vmor %vm4380, %vm4381
    %v4383 = vsel %vm4382, %v4375, %v4379
    %v4384 = vand.u32 2147483647, %v2513
    %vm4385 = vcmp.eq.f32.partialorder %v4384, 8.507059e+37
    %v4386 = vand.u32 %v2513, 2147483648
    %v4387 = vor.u32 1.1754944e-38, %v4386
    %v4388 = vsel %vm4385, %v4387, %v4383
    %v4389 = vrcp.pop %v2516
    %v4390 = vmul.f32 %v2516, %v4389
    %v4391 = vsub.f32 1.0, %v4390
    %v4392 = vmul.f32 %v4389, %v4391
    %v4393 = vadd.f32 %v4389, %v4392
    %vm4394 = vweird.f32 %v2516
    %vm4395 = vweird.f32 %v4389
    %vm4396 = vmor %vm4394, %vm4395
    %v4397 = vsel %vm4396, %v4389, %v4393
    %v4398 = vand.u32 2147483647, %v2516
    %vm4399 = vcmp.eq.f32.partialorder %v4398, 8.507059e+37
    %v4400 = vand.u32 %v2516, 2147483648
    %v4401 = vor.u32 1.1754944e-38, %v4400
    %v4402 = vsel %vm4399, %v4401, %v4397
    %v4403 = vrcp.pop %v2519
    %v4404 = vmul.f32 %v2519, %v4403
    %v4405 = vsub.f32 1.0, %v4404
    %v4406 = vmul.f32 %v4403, %v4405
    %v4407 = vadd.f32 %v4403, %v4406
    %vm4408 = vweird.f32 %v2519
    %vm4409 = vweird.f32 %v4403
    %vm4410 = vmor %vm4408, %vm4409
    %v4411 = vsel %vm4410, %v4403, %v4407
    %v4412 = vand.u32 2147483647, %v2519
    %vm4413 = vcmp.eq.f32.partialorder %v4412, 8.507059e+37
    %v4414 = vand.u32 %v2519, 2147483648
    %v4415 = vor.u32 1.1754944e-38, %v4414
    %v4416 = vsel %vm4413, %v4415, %v4411
    %v4417 = vrcp.pop %v2522
    %v4418 = vmul.f32 %v2522, %v4417
    %v4419 = vsub.f32 1.0, %v4418
    %v4420 = vmul.f32 %v4417, %v4419
    %v4421 = vadd.f32 %v4417, %v4420
    %vm4422 = vweird.f32 %v2522
    %vm4423 = vweird.f32 %v4417
    %vm4424 = vmor %vm4422, %vm4423
    %v4425 = vsel %vm4424, %v4417, %v4421
    %v4426 = vand.u32 2147483647, %v2522
    %vm4427 = vcmp.eq.f32.partialorder %v4426, 8.507059e+37
    %v4428 = vand.u32 %v2522, 2147483648
    %v4429 = vor.u32 1.1754944e-38, %v4428
    %v4430 = vsel %vm4427, %v4429, %v4425
    %v4431 = vrcp.pop %v2525
    %v4432 = vmul.f32 %v2525, %v4431
    %v4433 = vsub.f32 1.0, %v4432
    %v4434 = vmul.f32 %v4431, %v4433
    %v4435 = vadd.f32 %v4431, %v4434
    %vm4436 = vweird.f32 %v2525
    %vm4437 = vweird.f32 %v4431
    %vm4438 = vmor %vm4436, %vm4437
    %v4439 = vsel %vm4438, %v4431, %v4435
    %v4440 = vand.u32 2147483647, %v2525
    %vm4441 = vcmp.eq.f32.partialorder %v4440, 8.507059e+37
    %v4442 = vand.u32 %v2525, 2147483648
    %v4443 = vor.u32 1.1754944e-38, %v4442
    %v4444 = vsel %vm4441, %v4443, %v4439
    %v4445 = vrcp.pop %v2528
    %v4446 = vmul.f32 %v2528, %v4445
    %v4447 = vsub.f32 1.0, %v4446
    %v4448 = vmul.f32 %v4445, %v4447
    %v4449 = vadd.f32 %v4445, %v4448
    %vm4450 = vweird.f32 %v2528
    %vm4451 = vweird.f32 %v4445
    %vm4452 = vmor %vm4450, %vm4451
    %v4453 = vsel %vm4452, %v4445, %v4449
    %v4454 = vand.u32 2147483647, %v2528
    %vm4455 = vcmp.eq.f32.partialorder %v4454, 8.507059e+37
    %v4456 = vand.u32 %v2528, 2147483648
    %v4457 = vor.u32 1.1754944e-38, %v4456
    %v4458 = vsel %vm4455, %v4457, %v4453
    %v4459 = vrcp.pop %v2531
    %v4460 = vmul.f32 %v2531, %v4459
    %v4461 = vsub.f32 1.0, %v4460
    %v4462 = vmul.f32 %v4459, %v4461
    %v4463 = vadd.f32 %v4459, %v4462
    %vm4464 = vweird.f32 %v2531
    %vm4465 = vweird.f32 %v4459
    %vm4466 = vmor %vm4464, %vm4465
    %v4467 = vsel %vm4466, %v4459, %v4463
    %v4468 = vand.u32 2147483647, %v2531
    %vm4469 = vcmp.eq.f32.partialorder %v4468, 8.507059e+37
    %v4470 = vand.u32 %v2531, 2147483648
    %v4471 = vor.u32 1.1754944e-38, %v4470
    %v4472 = vsel %vm4469, %v4471, %v4467
    %v4473 = vrcp.pop %v2534
    %v4474 = vmul.f32 %v2534, %v4473
    %v4475 = vsub.f32 1.0, %v4474
    %v4476 = vmul.f32 %v4473, %v4475
    %v4477 = vadd.f32 %v4473, %v4476
    %vm4478 = vweird.f32 %v2534
    %vm4479 = vweird.f32 %v4473
    %vm4480 = vmor %vm4478, %vm4479
    %v4481 = vsel %vm4480, %v4473, %v4477
    %v4482 = vand.u32 2147483647, %v2534
    %vm4483 = vcmp.eq.f32.partialorder %v4482, 8.507059e+37
    %v4484 = vand.u32 %v2534, 2147483648
    %v4485 = vor.u32 1.1754944e-38, %v4484
    %v4486 = vsel %vm4483, %v4485, %v4481
    %v4487 = vmul.f32 %v2580, %v4052
    %v4488 = vmul.f32 %v2627, %v4066
    %v4489 = vmul.f32 %v2674, %v4080
    %v4490 = vmul.f32 %v2721, %v4094
    %v4491 = vmul.f32 %v2768, %v4108
    %v4492 = vmul.f32 %v2815, %v4122
    %v4493 = vmul.f32 %v2862, %v4136
    %v4494 = vmul.f32 %v2909, %v4150
    %v4495 = vmul.f32 %v2956, %v4164
    %v4496 = vmul.f32 %v3003, %v4178
    %v4497 = vmul.f32 %v3050, %v4192
    %v4498 = vmul.f32 %v3097, %v4206
    %v4499 = vmul.f32 %v3144, %v4220
    %v4500 = vmul.f32 %v3191, %v4234
    %v4501 = vmul.f32 %v3238, %v4248
    %v4502 = vmul.f32 %v3285, %v4262
    %v4503 = vmul.f32 %v3332, %v4276
    %v4504 = vmul.f32 %v3379, %v4290
    %v4505 = vmul.f32 %v3426, %v4304
    %v4506 = vmul.f32 %v3473, %v4318
    %v4507 = vmul.f32 %v3520, %v4332
    %v4508 = vmul.f32 %v3567, %v4346
    %v4509 = vmul.f32 %v3614, %v4360
    %v4510 = vmul.f32 %v3661, %v4374
    %v4511 = vmul.f32 %v3708, %v4388
    %v4512 = vmul.f32 %v3755, %v4402
    %v4513 = vmul.f32 %v3802, %v4416
    %v4514 = vmul.f32 %v3849, %v4430
    %v4515 = vmul.f32 %v3896, %v4444
    %v4516 = vmul.f32 %v3943, %v4458
    %v4517 = vmul.f32 %v3990, %v4472
    %v4518 = vmul.f32 %v4037, %v4486
    %v4519 = vld [vmem:[%s4] sm:$0xff]
    %v4520 = vld [vmem:[%s4 + $0x8] sm:$0xff]
    %v4521 = vld [vmem:[%s4 + $0x10] sm:$0xff]
    %v4522 = vld [vmem:[%s4 + $0x18] sm:$0xff]
    %v4523 = vld [vmem:[%s4 + $0x20] sm:$0xff]
    %v4524 = vld [vmem:[%s4 + $0x28] sm:$0xff]
    %v4525 = vld [vmem:[%s4 + $0x30] sm:$0xff]
    %v4526 = vld [vmem:[%s4 + $0x38] sm:$0xff]
    %v4528 = vsel %vm998, %v4495, 0
    %v4531 = vsel %vm998, %v4496, 0
    %v4534 = vsel %vm998, %v4497, 0
    %v4537 = vsel %vm998, %v4498, 0
    %v4540 = vsel %vm998, %v4499, 0
    %v4543 = vsel %vm998, %v4500, 0
    %v4546 = vsel %vm998, %v4501, 0
    %v4549 = vsel %vm998, %v4502, 0
    %4551 = vmatpush.msra.mxu0 0.0
    %4552 = vmatpush.msra.mxu0 0.0
    %4553 = vmatpush.msra.mxu0 0.0
    %4554 = vmatpush.msra.mxu0 0.0
    %4555 = vmatpush.msra.mxu0 0.0
    %4556 = vmatpush.msra.mxu0 0.0
    %4557 = vmatpush.msra.mxu0 0.0
    %4558 = vmatpush.msra.mxu0 0.0
    %4559 = vmatpush.msra.mxu0 0.0
    %4560 = vmatpush.msra.mxu0 0.0
    %4561 = vmatpush.msra.mxu0 0.0
    %4562 = vmatpush.msra.mxu0 0.0
    %4563 = vmatpush.msra.mxu0 0.0
    %4564 = vmatpush.msra.mxu0 0.0
    %4565 = vmatpush.msra.mxu0 %v4522
    %4566 = vmatpush.msra.mxu0 %v4521
    %4567 = vmatmul.f32.gmra.mxu0 %v4528
    %v4568 = vpop.f32.mrf.mxu0
    %v4569 = vadd.f32 0.0, %v4568
    %4570 = vmatmul.f32.gmra.mxu0 %v4531
    %v4571 = vpop.f32.mrf.mxu0
    %v4572 = vadd.f32 0.0, %v4571
    %4573 = vmatmul.f32.gmra.mxu0 %v4534
    %v4574 = vpop.f32.mrf.mxu0
    %v4575 = vadd.f32 0.0, %v4574
    %4576 = vmatmul.f32.gmra.mxu0 %v4537
    %v4577 = vpop.f32.mrf.mxu0
    %v4578 = vadd.f32 0.0, %v4577
    %4579 = vmatmul.f32.gmra.mxu0 %v4540
    %v4580 = vpop.f32.mrf.mxu0
    %v4581 = vadd.f32 0.0, %v4580
    %4582 = vmatmul.f32.gmra.mxu0 %v4543
    %v4583 = vpop.f32.mrf.mxu0
    %v4584 = vadd.f32 0.0, %v4583
    %4585 = vmatmul.f32.gmra.mxu0 %v4546
    %v4586 = vpop.f32.mrf.mxu0
    %v4587 = vadd.f32 0.0, %v4586
    %4588 = vmatmul.f32.gmra.mxu0 %v4549
    %v4589 = vpop.f32.mrf.mxu0
    %v4590 = vadd.f32 0.0, %v4589
    %4591 = vdwg.mxu0
    %v4593 = vsel %vm998, %v4487, 0
    %v4596 = vsel %vm998, %v4488, 0
    %v4599 = vsel %vm998, %v4489, 0
    %v4602 = vsel %vm998, %v4490, 0
    %v4605 = vsel %vm998, %v4491, 0
    %v4608 = vsel %vm998, %v4492, 0
    %v4611 = vsel %vm998, %v4493, 0
    %v4614 = vsel %vm998, %v4494, 0
    %4616 = vmatpush.msra.mxu0 0.0
    %4617 = vmatpush.msra.mxu0 0.0
    %4618 = vmatpush.msra.mxu0 0.0
    %4619 = vmatpush.msra.mxu0 0.0
    %4620 = vmatpush.msra.mxu0 0.0
    %4621 = vmatpush.msra.mxu0 0.0
    %4622 = vmatpush.msra.mxu0 0.0
    %4623 = vmatpush.msra.mxu0 0.0
    %4624 = vmatpush.msra.mxu0 0.0
    %4625 = vmatpush.msra.mxu0 0.0
    %4626 = vmatpush.msra.mxu0 0.0
    %4627 = vmatpush.msra.mxu0 0.0
    %4628 = vmatpush.msra.mxu0 0.0
    %4629 = vmatpush.msra.mxu0 0.0
    %4630 = vmatpush.msra.mxu0 %v4520
    %4631 = vmatpush.msra.mxu0 %v4519
    %4632 = vmatmul.f32.gmra.mxu0 %v4593
    %v4633 = vpop.f32.mrf.mxu0
    %v4634 = vadd.f32 %v4569, %v4633
    %4635 = vmatmul.f32.gmra.mxu0 %v4596
    %v4636 = vpop.f32.mrf.mxu0
    %v4637 = vadd.f32 %v4572, %v4636
    %4638 = vmatmul.f32.gmra.mxu0 %v4599
    %v4639 = vpop.f32.mrf.mxu0
    %v4640 = vadd.f32 %v4575, %v4639
    %4641 = vmatmul.f32.gmra.mxu0 %v4602
    %v4642 = vpop.f32.mrf.mxu0
    %v4643 = vadd.f32 %v4578, %v4642
    %4644 = vmatmul.f32.gmra.mxu0 %v4605
    %v4645 = vpop.f32.mrf.mxu0
    %v4646 = vadd.f32 %v4581, %v4645
    %4647 = vmatmul.f32.gmra.mxu0 %v4608
    %v4648 = vpop.f32.mrf.mxu0
    %v4649 = vadd.f32 %v4584, %v4648
    %4650 = vmatmul.f32.gmra.mxu0 %v4611
    %v4651 = vpop.f32.mrf.mxu0
    %v4652 = vadd.f32 %v4587, %v4651
    %4653 = vmatmul.f32.gmra.mxu0 %v4614
    %v4654 = vpop.f32.mrf.mxu0
    %v4655 = vadd.f32 %v4590, %v4654
    %4656 = vdwg.mxu0
    %v4658 = vsel %vm998, %v4503, 0
    %v4661 = vsel %vm998, %v4504, 0
    %v4664 = vsel %vm998, %v4505, 0
    %v4667 = vsel %vm998, %v4506, 0
    %v4670 = vsel %vm998, %v4507, 0
    %v4673 = vsel %vm998, %v4508, 0
    %v4676 = vsel %vm998, %v4509, 0
    %v4679 = vsel %vm998, %v4510, 0
    %4681 = vmatpush.msra.mxu0 0.0
    %4682 = vmatpush.msra.mxu0 0.0
    %4683 = vmatpush.msra.mxu0 0.0
    %4684 = vmatpush.msra.mxu0 0.0
    %4685 = vmatpush.msra.mxu0 0.0
    %4686 = vmatpush.msra.mxu0 0.0
    %4687 = vmatpush.msra.mxu0 0.0
    %4688 = vmatpush.msra.mxu0 0.0
    %4689 = vmatpush.msra.mxu0 0.0
    %4690 = vmatpush.msra.mxu0 0.0
    %4691 = vmatpush.msra.mxu0 0.0
    %4692 = vmatpush.msra.mxu0 0.0
    %4693 = vmatpush.msra.mxu0 0.0
    %4694 = vmatpush.msra.mxu0 0.0
    %4695 = vmatpush.msra.mxu0 %v4524
    %4696 = vmatpush.msra.mxu0 %v4523
    %4697 = vmatmul.f32.gmra.mxu0 %v4658
    %v4698 = vpop.f32.mrf.mxu0
    %v4699 = vadd.f32 0.0, %v4698
    %4700 = vmatmul.f32.gmra.mxu0 %v4661
    %v4701 = vpop.f32.mrf.mxu0
    %v4702 = vadd.f32 0.0, %v4701
    %4703 = vmatmul.f32.gmra.mxu0 %v4664
    %v4704 = vpop.f32.mrf.mxu0
    %v4705 = vadd.f32 0.0, %v4704
    %4706 = vmatmul.f32.gmra.mxu0 %v4667
    %v4707 = vpop.f32.mrf.mxu0
    %v4708 = vadd.f32 0.0, %v4707
    %4709 = vmatmul.f32.gmra.mxu0 %v4670
    %v4710 = vpop.f32.mrf.mxu0
    %v4711 = vadd.f32 0.0, %v4710
    %4712 = vmatmul.f32.gmra.mxu0 %v4673
    %v4713 = vpop.f32.mrf.mxu0
    %v4714 = vadd.f32 0.0, %v4713
    %4715 = vmatmul.f32.gmra.mxu0 %v4676
    %v4716 = vpop.f32.mrf.mxu0
    %v4717 = vadd.f32 0.0, %v4716
    %4718 = vmatmul.f32.gmra.mxu0 %v4679
    %v4719 = vpop.f32.mrf.mxu0
    %v4720 = vadd.f32 0.0, %v4719
    %4721 = vdwg.mxu0
    %v4722 = vadd.f32 %v4634, %v4699
    %v4723 = vadd.f32 %v4637, %v4702
    %v4724 = vadd.f32 %v4640, %v4705
    %v4725 = vadd.f32 %v4643, %v4708
    %v4726 = vadd.f32 %v4646, %v4711
    %v4727 = vadd.f32 %v4649, %v4714
    %v4728 = vadd.f32 %v4652, %v4717
    %v4729 = vadd.f32 %v4655, %v4720
    %v4731 = vsel %vm998, %v4511, 0
    %v4734 = vsel %vm998, %v4512, 0
    %v4737 = vsel %vm998, %v4513, 0
    %v4740 = vsel %vm998, %v4514, 0
    %v4743 = vsel %vm998, %v4515, 0
    %v4746 = vsel %vm998, %v4516, 0
    %v4749 = vsel %vm998, %v4517, 0
    %v4752 = vsel %vm998, %v4518, 0
    %4754 = vmatpush.msra.mxu0 0.0
    %4755 = vmatpush.msra.mxu0 0.0
    %4756 = vmatpush.msra.mxu0 0.0
    %4757 = vmatpush.msra.mxu0 0.0
    %4758 = vmatpush.msra.mxu0 0.0
    %4759 = vmatpush.msra.mxu0 0.0
    %4760 = vmatpush.msra.mxu0 0.0
    %4761 = vmatpush.msra.mxu0 0.0
    %4762 = vmatpush.msra.mxu0 0.0
    %4763 = vmatpush.msra.mxu0 0.0
    %4764 = vmatpush.msra.mxu0 0.0
    %4765 = vmatpush.msra.mxu0 0.0
    %4766 = vmatpush.msra.mxu0 0.0
    %4767 = vmatpush.msra.mxu0 0.0
    %4768 = vmatpush.msra.mxu0 %v4526
    %4769 = vmatpush.msra.mxu0 %v4525
    %4770 = vmatmul.f32.gmra.mxu0 %v4731
    %v4771 = vpop.f32.mrf.mxu0
    %v4772 = vadd.f32 0.0, %v4771
    %4773 = vmatmul.f32.gmra.mxu0 %v4734
    %v4774 = vpop.f32.mrf.mxu0
    %v4775 = vadd.f32 0.0, %v4774
    %4776 = vmatmul.f32.gmra.mxu0 %v4737
    %v4777 = vpop.f32.mrf.mxu0
    %v4778 = vadd.f32 0.0, %v4777
    %4779 = vmatmul.f32.gmra.mxu0 %v4740
    %v4780 = vpop.f32.mrf.mxu0
    %v4781 = vadd.f32 0.0, %v4780
    %4782 = vmatmul.f32.gmra.mxu0 %v4743
    %v4783 = vpop.f32.mrf.mxu0
    %v4784 = vadd.f32 0.0, %v4783
    %4785 = vmatmul.f32.gmra.mxu0 %v4746
    %v4786 = vpop.f32.mrf.mxu0
    %v4787 = vadd.f32 0.0, %v4786
    %4788 = vmatmul.f32.gmra.mxu0 %v4749
    %v4789 = vpop.f32.mrf.mxu0
    %v4790 = vadd.f32 0.0, %v4789
    %4791 = vmatmul.f32.gmra.mxu0 %v4752
    %v4792 = vpop.f32.mrf.mxu0
    %v4793 = vadd.f32 0.0, %v4792
    %4794 = vdwg.mxu0
    %v4795 = vadd.f32 %v4722, %v4772
    %v4796 = vadd.f32 %v4723, %v4775
    %v4797 = vadd.f32 %v4724, %v4778
    %v4798 = vadd.f32 %v4725, %v4781
    %v4799 = vadd.f32 %v4726, %v4784
    %v4800 = vadd.f32 %v4727, %v4787
    %v4801 = vadd.f32 %v4728, %v4790
    %v4802 = vadd.f32 %v4729, %v4793
    %v4803 = vld [vmem:[%s5] sm:$0x1]
    %v4805 = vperm.slane %v4803, 0
    %v4807 = vadd.f32 %v4795, %v4805
    %v4808 = vadd.f32 %v4796, %v4805
    %v4809 = vadd.f32 %v4797, %v4805
    %v4810 = vadd.f32 %v4798, %v4805
    %v4811 = vadd.f32 %v4799, %v4805
    %v4812 = vadd.f32 %v4800, %v4805
    %v4813 = vadd.f32 %v4801, %v4805
    %v4814 = vadd.f32 %v4802, %v4805
    %4815 = vst [vmem:[#allocation5] sm:$0xff] %v4807
    %4816 = vst [vmem:[#allocation5 + $0x8] sm:$0xff] %v4808
    %4817 = vst [vmem:[#allocation5 + $0x10] sm:$0xff] %v4809
    %4818 = vst [vmem:[#allocation5 + $0x18] sm:$0xff] %v4810
    %4819 = vst [vmem:[#allocation5 + $0x20] sm:$0xff] %v4811
    %4820 = vst [vmem:[#allocation5 + $0x28] sm:$0xff] %v4812
    %4821 = vst [vmem:[#allocation5 + $0x30] sm:$0xff] %v4813
    %4822 = vst [vmem:[#allocation5 + $0x38] sm:$0xff] %v4814
    // Predicated region
    $region30: #{tpu_custom_call.1} parent=1 // pred_check
      _
    $region31: #{tpu_custom_call.1} parent=1 // pred_check_branch
      %4824 = sbr.rel (0) target = $region33
    $region32: #{tpu_custom_call.1} parent=1 // pred_region
      %4826 = vsyncadd [#allocation4], 0
      %s4827 = sshll.u32 [#allocation5], 4
      %s4828 = int_to_ptr.vmem [resolvable:$true] %s4827
      %s4829 = sshll.u32 %s6, 4
      %s4830 = int_to_ptr.hbm [resolvable:$true] %s4829
      %4835 = dma.vmem_to_hbm [thread:$0]  %s4828, 1024, %s4830, [#allocation4], 128, 128, 8
    $region33: #{tpu_custom_call.1} parent=1 // pred_fallthru
      _
    // Predicated region
    $region34: #{tpu_custom_call.1} parent=1 // pred_check
      _
    $region35: #{tpu_custom_call.1} parent=1 // pred_check_branch
      %4837 = sbr.rel (0) target = $region37
    $region36: #{tpu_custom_call.1} parent=1 // pred_region
      %4839 = dma.done [#allocation4], 1024
    $region37: #{tpu_custom_call.1} parent=1 // pred_fallthru
      _
    %4840 = vsyncpa [#allocation3], 1
    %4841 = vsyncpa [#allocation4], 1

</llo_original>
